<compile_context>
chip_gen: v7x
topology: tpu7x:2x2x1
jax: 0.10.0
libtpu: 0.0.40
codegen_flags: <defaults>
</compile_context>

<pallas_src>
import jax
import jax.numpy as jnp
from jax.experimental import pallas as pl
from jax.experimental.pallas import tpu as pltpu


def _transpose_tile_kernel(x_ref, o_ref):
    # Transpose one (TM, TN) VMEM tile into the (TN, TM) output tile.
    # Lowers to the XLU vxpose path; the kernel stays HBM-bandwidth bound.
    o_ref[...] = x_ref[...].T


def _round_up(v, m):
    return ((v + m - 1) // m) * m


def _round_down_128(v):
    return max(128, (v // 128) * 128)


# Per-tile byte budget (~4 MiB) -> double-buffered in+out stays <= 16 MiB.
_TILE_BYTES = 4 << 20
# Scoped-VMEM limit that comfortably holds the pipeline on every generation
# (v5e default is only 16 MiB; v7x physical is 64 MiB so 40 MiB is safe).
_VMEM_LIMIT_BYTES = 40 << 20


def aten_t(x):
    """Equivalent of torch.t(x)."""
    # torch.t returns 0-D and 1-D tensors unchanged.
    if x.ndim < 2:
        return x
    assert x.ndim == 2, "torch.t raises for inputs with more than 2 dims"

    M, N = x.shape
    itemsize = x.dtype.itemsize

    # Small-shape bailout: masked partial stores + launch overhead dominate;
    # XLA's native transpose (often folded into the consumer) wins here.
    if min(M, N) < 128 or M * N * itemsize < (1 << 20):
        return x.T

    # Per-dim cap: ~4 KiB of contiguous DMA per row for both the strided
    # input read (row = TN*itemsize) and the strided output writeback
    # (row = TM*itemsize).  Always a multiple of 128.
    dim_cap = _round_down_128(4096 // itemsize)

    TM = min(dim_cap, _round_up(M, 128))
    TN = min(dim_cap, _round_up(N, 128))

    # Keep the tile within the ~4 MiB byte budget by shrinking the larger dim
    # (at most one shrink is ever needed; result stays a multiple of 128).
    if TM * TN * itemsize > _TILE_BYTES:
        if TM >= TN:
            TM = _round_down_128(_TILE_BYTES // (TN * itemsize))
        else:
            TN = _round_down_128(_TILE_BYTES // (TM * itemsize))

    grid = (pl.cdiv(M, TM), pl.cdiv(N, TN))

    cost = pl.CostEstimate(
        flops=0,
        transcendentals=0,
        bytes_accessed=2 * M * N * itemsize,
    )

    return pl.pallas_call(
        _transpose_tile_kernel,
        out_shape=jax.ShapeDtypeStruct((N, M), x.dtype),
        grid_spec=pltpu.PrefetchScalarGridSpec(
            num_scalar_prefetch=0,
            grid=grid,
            # Input tile (i, j) of shape (TM, TN) ...
            in_specs=[pl.BlockSpec((TM, TN), lambda i, j: (i, j))],
            # ... lands at output block (j, i) of shape (TN, TM).
            out_specs=pl.BlockSpec((TN, TM), lambda i, j: (j, i)),
        ),
        compiler_params=pltpu.CompilerParams(
            # Tiles are independent: both axes parallel so v7x's two
            # TensorCores can split the grid (no-op on v5e/v6e).
            dimension_semantics=("parallel", "parallel"),
            vmem_limit_bytes=_VMEM_LIMIT_BYTES,
        ),
        cost_estimate=cost,
    )(x)


if __name__ == "__main__":
    key = jax.random.PRNGKey(0)
    k1, k2, k3 = jax.random.split(key, 3)

    # Shape from the original test: small 2-D input -> bailout (jnp) path.
    x = jax.random.normal(k1, (16, 128), dtype=jnp.float32)
    y = jax.block_until_ready(aten_t(x))
    assert y.shape == (128, 16)
    assert jnp.array_equal(y, x.T), "transpose mismatch (16x128)"

    # Pallas path: multi-tile grid with partial tail tiles and dims that are
    # not multiples of 8/128 (checks that padded values never leak).
    x2 = jax.random.normal(k2, (1157, 1283), dtype=jnp.float32)
    y2 = jax.block_until_ready(aten_t(x2))
    assert y2.shape == (1283, 1157)
    assert jnp.array_equal(y2, x2.T), "transpose mismatch (1157x1283 f32)"

    # Pallas path with a packed dtype (dtype-scaled tile cap).
    x3 = jax.random.normal(k3, (640, 2304), dtype=jnp.float32).astype(jnp.bfloat16)
    y3 = jax.block_until_ready(aten_t(x3))
    assert y3.shape == (2304, 640)
    assert jnp.array_equal(y3, x3.T), "transpose mismatch (640x2304 bf16)"

    # torch.t passes 1-D tensors through unchanged.
    v = jnp.arange(8, dtype=jnp.float32)
    assert jnp.array_equal(aten_t(v), v)

    print("KERNEL_OK")
</pallas_src>

<mosaic_0001>
module attributes {stable_mosaic.version = 11 : i64} {
  func.func @_transpose_tile_kernel(%arg0: i32, %arg1: i32, %arg2: memref<1024x1024xf32, #tpu.memory_space<vmem>>, %arg3: memref<1024x1024xf32, #tpu.memory_space<vmem>>) attributes {dimension_semantics = [#tpu.dimension_semantics<parallel>, #tpu.dimension_semantics<parallel>], iteration_bounds = array<i64: 2, 2>, scalar_prefetch = 0 : i64, scratch_operands = 0 : i64, tpu.core_type = #tpu.core_type<tc>, window_params = [{transform_indices = @transform_0, window_bounds = array<i64: 1024, 1024>}, {transform_indices = @transform_1, window_bounds = array<i64: 1024, 1024>}]} {
    %c0 = arith.constant 0 : index
    %c0_0 = arith.constant 0 : index
    %0 = vector.load %arg2[%c0, %c0_0] : memref<1024x1024xf32, #tpu.memory_space<vmem>>, vector<1024x1024xf32>
    %1 = tpu.transpose %0, [1, 0] : vector<1024x1024xf32> -> vector<1024x1024xf32>
    %c0_1 = arith.constant 0 : index
    %c0_2 = arith.constant 0 : index
    %2 = vector.load %arg3[%c0_1, %c0_2] : memref<1024x1024xf32, #tpu.memory_space<vmem>>, vector<1024x1024xf32>
    tpu.vector_store %arg3[%c0_1, %c0_2], %1 {strides = array<i32>} : memref<1024x1024xf32, #tpu.memory_space<vmem>>, vector<1024x1024xf32>,
    return
  }
  func.func @transform_0(%arg0: i32, %arg1: i32) -> (i32, i32) {
    %c0_i32 = arith.constant 0 : i32
    return %arg0, %arg1 : i32, i32
  }
  func.func @transform_1(%arg0: i32, %arg1: i32) -> (i32, i32) {
    %c0_i32 = arith.constant 0 : i32
    return %arg1, %arg0 : i32, i32
  }
}

</mosaic_0001>

<llo_original>
// kernel: tpu_custom_call.1
$region0: #{tpu_custom_call.1}
  #allocation0 [shape = 'u32[]', space=smem, size = 0x4, offset = 0x4, fixed_abs, tag = 'smem constant byte address 0x4 - core index']
  #allocation1 [shape = 'u32[144,128]{1,0:T(1,128)}', space=vmem, size = 0x12000, scoped, tag = 'internal scratch']
  %s0 = inlined_call_operand.hbm [shape: f32[1157,1283], index: 0, kind: input, shape index: {}]
  %s1 = inlined_call_operand.vmem [shape: f32[1283,1157], index: 1, kind: output, shape index: {}]
  %s2 = sld [smem:[#allocation0]]
  $region131: #{tpu_custom_call.1} parent=0
    _
  %s4 = ssub.s32 1, %s2
  %s5 = scalar_select 0, %s4, %s2
  $region1: #{tpu_custom_call.1} parent=0
    #allocation2 [shape = 'u8[8388608]{0}', space=vmem, size = 0x800000, scoped, tag = 'input window, operand 0']
    #allocation3 [shape = 's32[2]{0}', space=sflag, size = 0x8, scoped, tag = 'scoped memory for tpu_custom_call.1']
    #allocation4 [shape = 'u8[8388608]{0}', space=vmem, size = 0x800000, scoped, tag = 'output window, operand 0']
    %6 = vsyncpa [#allocation3], 0
    %s7 = scalar_lea.sflag [#allocation3], 1
    %8 = vsyncpa %s7, 0
    loop: start=0, step=1, limit=6
    $region2: #{tpu_custom_call.1} parent=1 // loop_pre_header
      _
    $region3: #{tpu_custom_call.1} parent=1 // loop_header
      %s10 = sphi 0, %s14
      %p11 = scmp.ge.s32.totalorder %s10, 6
      %s17 = sphi 0, %s29
      %s18 = sphi 0, %s25
      %s19 = sphi 0, %s17
      %s20 = sphi 0, %s18
      %s21 = sphi 0, %s19
      %s22 = sphi 0, %s20
      %s34 = sphi 0, %s36
      %s37 = sphi 0, %s34
      %s38 = sphi 0, %s37
      %s54 = sphi 0, %s38
      %s62 = sphi 0, %s64
      %s65 = sphi 0, %s62
      %s66 = sphi 0, %s65
      %s82 = sphi 0, %s66
    $region4: #{tpu_custom_call.1} parent=1 // loop_header_branch
      %13 = sbr.rel (%p11) target = $region8
    $region5: #{tpu_custom_call.1} parent=1 // loop_body
      %s15 = ssub.s32 %s10, 1
      %s16 = ssub.s32 %s10, 2
      %s23 = sadd.s32 1, %s18
      %p24 = scmp.ge.s32.totalorder %s23, 2
      %s25 = scalar_select %p24, 0, %s23
      %s26 = sadd.s32 1, %s17
      %s27 = scalar_select %p24, %s26, %s17
      %p28 = scmp.ge.s32.totalorder %s27, 2
      %s29 = scalar_select %p28, 0, %s27
      %s30 = ssub.s32 %s17, %s29
      %s31 = ssub.s32 %s18, %s25
      %s32 = sor.u32 %s30, %s31
      %p33 = scmp.eq.s32.totalorder %s32, 0
      %s35 = sadd.s32 %s34, 1
      %s36 = scalar_select %p33, %s34, %s35
      %p39 = pneg %p33
      %p40 = scmp.eq.s32.totalorder %s10, 3
      %p41 = por %p39, %p40
      %p42 = scmp.ne.s32.totalorder %s34, %s37
      %p43 = scmp.eq.s32.totalorder %s10, 0
      %p44 = por %p42, %p43
      %p45 = scmp.ne.s32.totalorder %s34, %s37
      %p46 = scmp.eq.s32.totalorder %s15, 3
      %p47 = por %p45, %p46
      %p48 = scmp.ne.s32.totalorder %s37, %s38
      %p49 = scmp.eq.s32.totalorder %s15, 0
      %p50 = por %p48, %p49
      %p51 = scmp.ne.s32.totalorder %s37, %s38
      %p52 = scmp.eq.s32.totalorder %s16, 3
      %p53 = por %p51, %p52
      %p55 = scmp.ne.s32.totalorder %s38, %s54
      %p56 = scmp.eq.s32.totalorder %s16, 0
      %p57 = por %p55, %p56
      %s58 = ssub.s32 %s18, %s25
      %s59 = ssub.s32 %s17, %s29
      %s60 = sor.u32 %s58, %s59
      %p61 = scmp.eq.s32.totalorder %s60, 0
      %s63 = sadd.s32 %s62, 1
      %s64 = scalar_select %p61, %s62, %s63
      %p67 = pneg %p61
      %p68 = scmp.eq.s32.totalorder %s10, 3
      %p69 = por %p67, %p68
      %p70 = scmp.ne.s32.totalorder %s62, %s65
      %p71 = scmp.eq.s32.totalorder %s10, 0
      %p72 = por %p70, %p71
      %p73 = scmp.ne.s32.totalorder %s62, %s65
      %p74 = scmp.eq.s32.totalorder %s15, 3
      %p75 = por %p73, %p74
      %p76 = scmp.ne.s32.totalorder %s65, %s66
      %p77 = scmp.eq.s32.totalorder %s15, 0
      %p78 = por %p76, %p77
      %p79 = scmp.ne.s32.totalorder %s65, %s66
      %p80 = scmp.eq.s32.totalorder %s16, 3
      %p81 = por %p79, %p80
      %p83 = scmp.ne.s32.totalorder %s66, %s82
      %p84 = scmp.eq.s32.totalorder %s16, 0
      %p85 = por %p83, %p84
      %p86 = scmp.le.s32.totalorder 1, %s10
      %p87 = scmp.lt.s32.totalorder %s10, 5
      %p88 = pnand %p86, %p87
      %p89 = pneg %p88
      // Predicated region
      $region9: #{tpu_custom_call.1} parent=5 // pred_check
        _
      $region10: #{tpu_custom_call.1} parent=5 // pred_check_branch
        %91 = sbr.rel (%p88) target = $region12
      $region11: #{tpu_custom_call.1} parent=5 // pred_region
        %s92 = ssub.s32 %s10, 1
      $region12: #{tpu_custom_call.1} parent=5 // pred_fallthru
        _
      %p93 = scmp.lt.s32.totalorder %s10, 4
      // Predicated region
      $region13: #{tpu_custom_call.1} parent=5 // pred_check
        %p94 = pneg %p93
      $region14: #{tpu_custom_call.1} parent=5 // pred_check_branch
        %96 = sbr.rel (%p94) target = $region16
      $region15: #{tpu_custom_call.1} parent=5 // pred_region
        // Predicated region
        $region17: #{tpu_custom_call.1} parent=15 // pred_check
          %p97 = pneg %p44
        $region18: #{tpu_custom_call.1} parent=15 // pred_check_branch
          %99 = sbr.rel (%p97) target = $region20
        $region19: #{tpu_custom_call.1} parent=15 // pred_region
          %s100 = sand.u32 %s34, 1
          %s101 = scalar_lea.sflag [#allocation3], %s100
          %s102 = sand.u32 %s34, 1
          %s103 = smul.addr %s102, 8192
          %s104 = scalar_lea.vmem [#allocation2], %s103
          %s105 = smul.u32 128, %s17
          %s106 = smul.u32 8, %s18
          %s107 = ssub.s32 145, %s105
          %p108 = scmp.lt.s32.totalorder %s107, 128
          %s109 = scalar_select %p108, %s107, 128
          %s110 = smul.u32 128, %s109
          %s111 = ssub.s32 11, %s106
          %p112 = scmp.lt.s32.totalorder %s111, 8
          %s113 = scalar_select %p112, %s111, 8
          %s114 = smul.u32 %s110, %s113
          %s116 = ssub.s32 131072, %s114
          %117 = vsyncadd %s101, %s116
          %p118 = scmp.ne.s32.totalorder 0, %s114
          %s119 = smul.addr %s105, 11
          %s120 = sadd.s32 %s106, %s119
          %s121 = smul.addr %s120, 128
          %s122 = scalar_lea.hbm %s0, %s121
          %s123 = smul.u32 %s113, 8
          %s124 = smul.u32 %s123, %s109
          %s125 = sshll.u32 %s104, 4
          %s126 = int_to_ptr.vmem [resolvable:$true] %s125
          %s127 = sshll.u32 %s124, 4
          %131 = dma.hbm_to_vmem [thread:$0]  (%p118), %s122, %s127, %s126, %s101, 1408, 1024, %s123
        $region20: #{tpu_custom_call.1} parent=15 // pred_fallthru
          _
      $region16: #{tpu_custom_call.1} parent=5 // pred_fallthru
        _
      %p132 = scmp.le.s32.totalorder 1, %s10
      %p133 = scmp.lt.s32.totalorder %s10, 5
      %p134 = pnand %p132, %p133
      %p135 = pneg %p134
      // Predicated region
      $region21: #{tpu_custom_call.1} parent=5 // pred_check
        _
      $region22: #{tpu_custom_call.1} parent=5 // pred_check_branch
        %137 = sbr.rel (%p134) target = $region24
      $region23: #{tpu_custom_call.1} parent=5 // pred_region
        %s138 = ssub.s32 %s10, 1
        %s139 = sand.u32 %s37, 1
        %s140 = scalar_lea.sflag [#allocation3], %s139
        %s141 = sand.u32 %s37, 1
        %s142 = smul.addr %s141, 8192
        %s143 = scalar_lea.vmem [#allocation2], %s142
        // Predicated region
        $region25: #{tpu_custom_call.1} parent=23 // pred_check
          %p144 = pneg %p50
        $region26: #{tpu_custom_call.1} parent=23 // pred_check_branch
          %146 = sbr.rel (%p144) target = $region28
        $region27: #{tpu_custom_call.1} parent=23 // pred_region
          %147 = dma.done %s140, 131072
        $region28: #{tpu_custom_call.1} parent=23 // pred_fallthru
          _
        %s148 = sand.u32 %s37, 1
        %s149 = scalar_lea.sflag [#allocation3], %s148
        %s150 = sand.u32 %s37, 1
        %s151 = smul.addr %s150, 8192
        %s152 = scalar_lea.vmem [#allocation2], %s151
        %p153 = pneg %p50
        %p154 = pneg %p47
        %p155 = pneg %p78
        %p156 = pneg %p75
        %s157 = sand.u32 %s65, 1
        %s158 = sand.u32 %s65, 1
        %s159 = smul.addr %s158, 8192
        %s160 = scalar_lea.vmem [#allocation4], %s159
        %s161 = smul.u32 128, %s19
        %s162 = smul.u32 8, %s20
        %s163 = ssub.s32 145, %s161
        %p164 = scmp.lt.s32.totalorder %s163, 128
        %s165 = scalar_select %p164, %s163, 128
        %s166 = smul.u32 128, %s165
        %s167 = ssub.s32 11, %s162
        %p168 = scmp.lt.s32.totalorder %s167, 8
        %s169 = scalar_select %p168, %s167, 8
        %s170 = smul.u32 %s166, %s169
        %s171 = smul.u32 128, %s20
        %s172 = smul.u32 8, %s19
        %s173 = ssub.s32 161, %s171
        %p174 = scmp.lt.s32.totalorder %s173, 128
        %s175 = scalar_select %p174, %s173, 128
        %s176 = smul.u32 128, %s175
        %s177 = ssub.s32 10, %s172
        %p178 = scmp.lt.s32.totalorder %s177, 8
        %s179 = scalar_select %p178, %s177, 8
        %s180 = smul.u32 %s176, %s179
        %v181 = vld [vmem:[%s143] sm:$0xff]
        %v182 = vld [vmem:[%s143 + $0x8] sm:$0xff]
        %v183 = vld [vmem:[%s143 + $0x10] sm:$0xff]
        %v184 = vld [vmem:[%s143 + $0x18] sm:$0xff]
        %v185 = vld [vmem:[%s143 + $0x20] sm:$0xff]
        %v186 = vld [vmem:[%s143 + $0x28] sm:$0xff]
        %v187 = vld [vmem:[%s143 + $0x30] sm:$0xff]
        %v188 = vld [vmem:[%s143 + $0x38] sm:$0xff]
        %v189 = vld [vmem:[%s143 + $0x40] sm:$0xff]
        %v190 = vld [vmem:[%s143 + $0x48] sm:$0xff]
        %v191 = vld [vmem:[%s143 + $0x50] sm:$0xff]
        %v192 = vld [vmem:[%s143 + $0x58] sm:$0xff]
        %v193 = vld [vmem:[%s143 + $0x60] sm:$0xff]
        %v194 = vld [vmem:[%s143 + $0x68] sm:$0xff]
        %v195 = vld [vmem:[%s143 + $0x70] sm:$0xff]
        %v196 = vld [vmem:[%s143 + $0x78] sm:$0xff]
        %v197 = vld [vmem:[%s143 + $0x80] sm:$0xff]
        %v198 = vld [vmem:[%s143 + $0x88] sm:$0xff]
        %v199 = vld [vmem:[%s143 + $0x90] sm:$0xff]
        %v200 = vld [vmem:[%s143 + $0x98] sm:$0xff]
        %v201 = vld [vmem:[%s143 + $0xa0] sm:$0xff]
        %v202 = vld [vmem:[%s143 + $0xa8] sm:$0xff]
        %v203 = vld [vmem:[%s143 + $0xb0] sm:$0xff]
        %v204 = vld [vmem:[%s143 + $0xb8] sm:$0xff]
        %v205 = vld [vmem:[%s143 + $0xc0] sm:$0xff]
        %v206 = vld [vmem:[%s143 + $0xc8] sm:$0xff]
        %v207 = vld [vmem:[%s143 + $0xd0] sm:$0xff]
        %v208 = vld [vmem:[%s143 + $0xd8] sm:$0xff]
        %v209 = vld [vmem:[%s143 + $0xe0] sm:$0xff]
        %v210 = vld [vmem:[%s143 + $0xe8] sm:$0xff]
        %v211 = vld [vmem:[%s143 + $0xf0] sm:$0xff]
        %v212 = vld [vmem:[%s143 + $0xf8] sm:$0xff]
        %v213 = vld [vmem:[%s143 + $0x100] sm:$0xff]
        %v214 = vld [vmem:[%s143 + $0x108] sm:$0xff]
        %v215 = vld [vmem:[%s143 + $0x110] sm:$0xff]
        %v216 = vld [vmem:[%s143 + $0x118] sm:$0xff]
        %v217 = vld [vmem:[%s143 + $0x120] sm:$0xff]
        %v218 = vld [vmem:[%s143 + $0x128] sm:$0xff]
        %v219 = vld [vmem:[%s143 + $0x130] sm:$0xff]
        %v220 = vld [vmem:[%s143 + $0x138] sm:$0xff]
        %v221 = vld [vmem:[%s143 + $0x140] sm:$0xff]
        %v222 = vld [vmem:[%s143 + $0x148] sm:$0xff]
        %v223 = vld [vmem:[%s143 + $0x150] sm:$0xff]
        %v224 = vld [vmem:[%s143 + $0x158] sm:$0xff]
        %v225 = vld [vmem:[%s143 + $0x160] sm:$0xff]
        %v226 = vld [vmem:[%s143 + $0x168] sm:$0xff]
        %v227 = vld [vmem:[%s143 + $0x170] sm:$0xff]
        %v228 = vld [vmem:[%s143 + $0x178] sm:$0xff]
        %v229 = vld [vmem:[%s143 + $0x180] sm:$0xff]
        %v230 = vld [vmem:[%s143 + $0x188] sm:$0xff]
        %v231 = vld [vmem:[%s143 + $0x190] sm:$0xff]
        %v232 = vld [vmem:[%s143 + $0x198] sm:$0xff]
        %v233 = vld [vmem:[%s143 + $0x1a0] sm:$0xff]
        %v234 = vld [vmem:[%s143 + $0x1a8] sm:$0xff]
        %v235 = vld [vmem:[%s143 + $0x1b0] sm:$0xff]
        %v236 = vld [vmem:[%s143 + $0x1b8] sm:$0xff]
        %v237 = vld [vmem:[%s143 + $0x1c0] sm:$0xff]
        %v238 = vld [vmem:[%s143 + $0x1c8] sm:$0xff]
        %v239 = vld [vmem:[%s143 + $0x1d0] sm:$0xff]
        %v240 = vld [vmem:[%s143 + $0x1d8] sm:$0xff]
        %v241 = vld [vmem:[%s143 + $0x1e0] sm:$0xff]
        %v242 = vld [vmem:[%s143 + $0x1e8] sm:$0xff]
        %v243 = vld [vmem:[%s143 + $0x1f0] sm:$0xff]
        %v244 = vld [vmem:[%s143 + $0x1f8] sm:$0xff]
        %v245 = vld [vmem:[%s143 + $0x200] sm:$0xff]
        %v246 = vld [vmem:[%s143 + $0x208] sm:$0xff]
        %v247 = vld [vmem:[%s143 + $0x210] sm:$0xff]
        %v248 = vld [vmem:[%s143 + $0x218] sm:$0xff]
        %v249 = vld [vmem:[%s143 + $0x220] sm:$0xff]
        %v250 = vld [vmem:[%s143 + $0x228] sm:$0xff]
        %v251 = vld [vmem:[%s143 + $0x230] sm:$0xff]
        %v252 = vld [vmem:[%s143 + $0x238] sm:$0xff]
        %v253 = vld [vmem:[%s143 + $0x240] sm:$0xff]
        %v254 = vld [vmem:[%s143 + $0x248] sm:$0xff]
        %v255 = vld [vmem:[%s143 + $0x250] sm:$0xff]
        %v256 = vld [vmem:[%s143 + $0x258] sm:$0xff]
        %v257 = vld [vmem:[%s143 + $0x260] sm:$0xff]
        %v258 = vld [vmem:[%s143 + $0x268] sm:$0xff]
        %v259 = vld [vmem:[%s143 + $0x270] sm:$0xff]
        %v260 = vld [vmem:[%s143 + $0x278] sm:$0xff]
        %v261 = vld [vmem:[%s143 + $0x280] sm:$0xff]
        %v262 = vld [vmem:[%s143 + $0x288] sm:$0xff]
        %v263 = vld [vmem:[%s143 + $0x290] sm:$0xff]
        %v264 = vld [vmem:[%s143 + $0x298] sm:$0xff]
        %v265 = vld [vmem:[%s143 + $0x2a0] sm:$0xff]
        %v266 = vld [vmem:[%s143 + $0x2a8] sm:$0xff]
        %v267 = vld [vmem:[%s143 + $0x2b0] sm:$0xff]
        %v268 = vld [vmem:[%s143 + $0x2b8] sm:$0xff]
        %v269 = vld [vmem:[%s143 + $0x2c0] sm:$0xff]
        %v270 = vld [vmem:[%s143 + $0x2c8] sm:$0xff]
        %v271 = vld [vmem:[%s143 + $0x2d0] sm:$0xff]
        %v272 = vld [vmem:[%s143 + $0x2d8] sm:$0xff]
        %v273 = vld [vmem:[%s143 + $0x2e0] sm:$0xff]
        %v274 = vld [vmem:[%s143 + $0x2e8] sm:$0xff]
        %v275 = vld [vmem:[%s143 + $0x2f0] sm:$0xff]
        %v276 = vld [vmem:[%s143 + $0x2f8] sm:$0xff]
        %v277 = vld [vmem:[%s143 + $0x300] sm:$0xff]
        %v278 = vld [vmem:[%s143 + $0x308] sm:$0xff]
        %v279 = vld [vmem:[%s143 + $0x310] sm:$0xff]
        %v280 = vld [vmem:[%s143 + $0x318] sm:$0xff]
        %v281 = vld [vmem:[%s143 + $0x320] sm:$0xff]
        %v282 = vld [vmem:[%s143 + $0x328] sm:$0xff]
        %v283 = vld [vmem:[%s143 + $0x330] sm:$0xff]
        %v284 = vld [vmem:[%s143 + $0x338] sm:$0xff]
        %v285 = vld [vmem:[%s143 + $0x340] sm:$0xff]
        %v286 = vld [vmem:[%s143 + $0x348] sm:$0xff]
        %v287 = vld [vmem:[%s143 + $0x350] sm:$0xff]
        %v288 = vld [vmem:[%s143 + $0x358] sm:$0xff]
        %v289 = vld [vmem:[%s143 + $0x360] sm:$0xff]
        %v290 = vld [vmem:[%s143 + $0x368] sm:$0xff]
        %v291 = vld [vmem:[%s143 + $0x370] sm:$0xff]
        %v292 = vld [vmem:[%s143 + $0x378] sm:$0xff]
        %v293 = vld [vmem:[%s143 + $0x380] sm:$0xff]
        %v294 = vld [vmem:[%s143 + $0x388] sm:$0xff]
        %v295 = vld [vmem:[%s143 + $0x390] sm:$0xff]
        %v296 = vld [vmem:[%s143 + $0x398] sm:$0xff]
        %v297 = vld [vmem:[%s143 + $0x3a0] sm:$0xff]
        %v298 = vld [vmem:[%s143 + $0x3a8] sm:$0xff]
        %v299 = vld [vmem:[%s143 + $0x3b0] sm:$0xff]
        %v300 = vld [vmem:[%s143 + $0x3b8] sm:$0xff]
        %v301 = vld [vmem:[%s143 + $0x3c0] sm:$0xff]
        %v302 = vld [vmem:[%s143 + $0x3c8] sm:$0xff]
        %v303 = vld [vmem:[%s143 + $0x3d0] sm:$0xff]
        %v304 = vld [vmem:[%s143 + $0x3d8] sm:$0xff]
        %v305 = vld [vmem:[%s143 + $0x3e0] sm:$0xff]
        %v306 = vld [vmem:[%s143 + $0x3e8] sm:$0xff]
        %v307 = vld [vmem:[%s143 + $0x3f0] sm:$0xff]
        %v308 = vld [vmem:[%s143 + $0x3f8] sm:$0xff]
        %v309 = vld [vmem:[%s143 + $0x400] sm:$0xff]
        %v310 = vld [vmem:[%s143 + $0x408] sm:$0xff]
        %v311 = vld [vmem:[%s143 + $0x410] sm:$0xff]
        %v312 = vld [vmem:[%s143 + $0x418] sm:$0xff]
        %v313 = vld [vmem:[%s143 + $0x420] sm:$0xff]
        %v314 = vld [vmem:[%s143 + $0x428] sm:$0xff]
        %v315 = vld [vmem:[%s143 + $0x430] sm:$0xff]
        %v316 = vld [vmem:[%s143 + $0x438] sm:$0xff]
        %v317 = vld [vmem:[%s143 + $0x440] sm:$0xff]
        %v318 = vld [vmem:[%s143 + $0x448] sm:$0xff]
        %v319 = vld [vmem:[%s143 + $0x450] sm:$0xff]
        %v320 = vld [vmem:[%s143 + $0x458] sm:$0xff]
        %v321 = vld [vmem:[%s143 + $0x460] sm:$0xff]
        %v322 = vld [vmem:[%s143 + $0x468] sm:$0xff]
        %v323 = vld [vmem:[%s143 + $0x470] sm:$0xff]
        %v324 = vld [vmem:[%s143 + $0x478] sm:$0xff]
        %v325 = vld [vmem:[%s143 + $0x480] sm:$0xff]
        %v326 = vld [vmem:[%s143 + $0x488] sm:$0xff]
        %v327 = vld [vmem:[%s143 + $0x490] sm:$0xff]
        %v328 = vld [vmem:[%s143 + $0x498] sm:$0xff]
        %v329 = vld [vmem:[%s143 + $0x4a0] sm:$0xff]
        %v330 = vld [vmem:[%s143 + $0x4a8] sm:$0xff]
        %v331 = vld [vmem:[%s143 + $0x4b0] sm:$0xff]
        %v332 = vld [vmem:[%s143 + $0x4b8] sm:$0xff]
        %v333 = vld [vmem:[%s143 + $0x4c0] sm:$0xff]
        %v334 = vld [vmem:[%s143 + $0x4c8] sm:$0xff]
        %v335 = vld [vmem:[%s143 + $0x4d0] sm:$0xff]
        %v336 = vld [vmem:[%s143 + $0x4d8] sm:$0xff]
        %v337 = vld [vmem:[%s143 + $0x4e0] sm:$0xff]
        %v338 = vld [vmem:[%s143 + $0x4e8] sm:$0xff]
        %v339 = vld [vmem:[%s143 + $0x4f0] sm:$0xff]
        %v340 = vld [vmem:[%s143 + $0x4f8] sm:$0xff]
        %v341 = vld [vmem:[%s143 + $0x500] sm:$0xff]
        %v342 = vld [vmem:[%s143 + $0x508] sm:$0xff]
        %v343 = vld [vmem:[%s143 + $0x510] sm:$0xff]
        %v344 = vld [vmem:[%s143 + $0x518] sm:$0xff]
        %v345 = vld [vmem:[%s143 + $0x520] sm:$0xff]
        %v346 = vld [vmem:[%s143 + $0x528] sm:$0xff]
        %v347 = vld [vmem:[%s143 + $0x530] sm:$0xff]
        %v348 = vld [vmem:[%s143 + $0x538] sm:$0xff]
        %v349 = vld [vmem:[%s143 + $0x540] sm:$0xff]
        %v350 = vld [vmem:[%s143 + $0x548] sm:$0xff]
        %v351 = vld [vmem:[%s143 + $0x550] sm:$0xff]
        %v352 = vld [vmem:[%s143 + $0x558] sm:$0xff]
        %v353 = vld [vmem:[%s143 + $0x560] sm:$0xff]
        %v354 = vld [vmem:[%s143 + $0x568] sm:$0xff]
        %v355 = vld [vmem:[%s143 + $0x570] sm:$0xff]
        %v356 = vld [vmem:[%s143 + $0x578] sm:$0xff]
        %v357 = vld [vmem:[%s143 + $0x580] sm:$0xff]
        %v358 = vld [vmem:[%s143 + $0x588] sm:$0xff]
        %v359 = vld [vmem:[%s143 + $0x590] sm:$0xff]
        %v360 = vld [vmem:[%s143 + $0x598] sm:$0xff]
        %v361 = vld [vmem:[%s143 + $0x5a0] sm:$0xff]
        %v362 = vld [vmem:[%s143 + $0x5a8] sm:$0xff]
        %v363 = vld [vmem:[%s143 + $0x5b0] sm:$0xff]
        %v364 = vld [vmem:[%s143 + $0x5b8] sm:$0xff]
        %v365 = vld [vmem:[%s143 + $0x5c0] sm:$0xff]
        %v366 = vld [vmem:[%s143 + $0x5c8] sm:$0xff]
        %v367 = vld [vmem:[%s143 + $0x5d0] sm:$0xff]
        %v368 = vld [vmem:[%s143 + $0x5d8] sm:$0xff]
        %v369 = vld [vmem:[%s143 + $0x5e0] sm:$0xff]
        %v370 = vld [vmem:[%s143 + $0x5e8] sm:$0xff]
        %v371 = vld [vmem:[%s143 + $0x5f0] sm:$0xff]
        %v372 = vld [vmem:[%s143 + $0x5f8] sm:$0xff]
        %v373 = vld [vmem:[%s143 + $0x600] sm:$0xff]
        %v374 = vld [vmem:[%s143 + $0x608] sm:$0xff]
        %v375 = vld [vmem:[%s143 + $0x610] sm:$0xff]
        %v376 = vld [vmem:[%s143 + $0x618] sm:$0xff]
        %v377 = vld [vmem:[%s143 + $0x620] sm:$0xff]
        %v378 = vld [vmem:[%s143 + $0x628] sm:$0xff]
        %v379 = vld [vmem:[%s143 + $0x630] sm:$0xff]
        %v380 = vld [vmem:[%s143 + $0x638] sm:$0xff]
        %v381 = vld [vmem:[%s143 + $0x640] sm:$0xff]
        %v382 = vld [vmem:[%s143 + $0x648] sm:$0xff]
        %v383 = vld [vmem:[%s143 + $0x650] sm:$0xff]
        %v384 = vld [vmem:[%s143 + $0x658] sm:$0xff]
        %v385 = vld [vmem:[%s143 + $0x660] sm:$0xff]
        %v386 = vld [vmem:[%s143 + $0x668] sm:$0xff]
        %v387 = vld [vmem:[%s143 + $0x670] sm:$0xff]
        %v388 = vld [vmem:[%s143 + $0x678] sm:$0xff]
        %v389 = vld [vmem:[%s143 + $0x680] sm:$0xff]
        %v390 = vld [vmem:[%s143 + $0x688] sm:$0xff]
        %v391 = vld [vmem:[%s143 + $0x690] sm:$0xff]
        %v392 = vld [vmem:[%s143 + $0x698] sm:$0xff]
        %v393 = vld [vmem:[%s143 + $0x6a0] sm:$0xff]
        %v394 = vld [vmem:[%s143 + $0x6a8] sm:$0xff]
        %v395 = vld [vmem:[%s143 + $0x6b0] sm:$0xff]
        %v396 = vld [vmem:[%s143 + $0x6b8] sm:$0xff]
        %v397 = vld [vmem:[%s143 + $0x6c0] sm:$0xff]
        %v398 = vld [vmem:[%s143 + $0x6c8] sm:$0xff]
        %v399 = vld [vmem:[%s143 + $0x6d0] sm:$0xff]
        %v400 = vld [vmem:[%s143 + $0x6d8] sm:$0xff]
        %v401 = vld [vmem:[%s143 + $0x6e0] sm:$0xff]
        %v402 = vld [vmem:[%s143 + $0x6e8] sm:$0xff]
        %v403 = vld [vmem:[%s143 + $0x6f0] sm:$0xff]
        %v404 = vld [vmem:[%s143 + $0x6f8] sm:$0xff]
        %v405 = vld [vmem:[%s143 + $0x700] sm:$0xff]
        %v406 = vld [vmem:[%s143 + $0x708] sm:$0xff]
        %v407 = vld [vmem:[%s143 + $0x710] sm:$0xff]
        %v408 = vld [vmem:[%s143 + $0x718] sm:$0xff]
        %v409 = vld [vmem:[%s143 + $0x720] sm:$0xff]
        %v410 = vld [vmem:[%s143 + $0x728] sm:$0xff]
        %v411 = vld [vmem:[%s143 + $0x730] sm:$0xff]
        %v412 = vld [vmem:[%s143 + $0x738] sm:$0xff]
        %v413 = vld [vmem:[%s143 + $0x740] sm:$0xff]
        %v414 = vld [vmem:[%s143 + $0x748] sm:$0xff]
        %v415 = vld [vmem:[%s143 + $0x750] sm:$0xff]
        %v416 = vld [vmem:[%s143 + $0x758] sm:$0xff]
        %v417 = vld [vmem:[%s143 + $0x760] sm:$0xff]
        %v418 = vld [vmem:[%s143 + $0x768] sm:$0xff]
        %v419 = vld [vmem:[%s143 + $0x770] sm:$0xff]
        %v420 = vld [vmem:[%s143 + $0x778] sm:$0xff]
        %v421 = vld [vmem:[%s143 + $0x780] sm:$0xff]
        %v422 = vld [vmem:[%s143 + $0x788] sm:$0xff]
        %v423 = vld [vmem:[%s143 + $0x790] sm:$0xff]
        %v424 = vld [vmem:[%s143 + $0x798] sm:$0xff]
        %v425 = vld [vmem:[%s143 + $0x7a0] sm:$0xff]
        %v426 = vld [vmem:[%s143 + $0x7a8] sm:$0xff]
        %v427 = vld [vmem:[%s143 + $0x7b0] sm:$0xff]
        %v428 = vld [vmem:[%s143 + $0x7b8] sm:$0xff]
        %v429 = vld [vmem:[%s143 + $0x7c0] sm:$0xff]
        %v430 = vld [vmem:[%s143 + $0x7c8] sm:$0xff]
        %v431 = vld [vmem:[%s143 + $0x7d0] sm:$0xff]
        %v432 = vld [vmem:[%s143 + $0x7d8] sm:$0xff]
        %v433 = vld [vmem:[%s143 + $0x7e0] sm:$0xff]
        %v434 = vld [vmem:[%s143 + $0x7e8] sm:$0xff]
        %v435 = vld [vmem:[%s143 + $0x7f0] sm:$0xff]
        %v436 = vld [vmem:[%s143 + $0x7f8] sm:$0xff]
        %v437 = vld [vmem:[%s143 + $0x800] sm:$0xff]
        %v438 = vld [vmem:[%s143 + $0x808] sm:$0xff]
        %v439 = vld [vmem:[%s143 + $0x810] sm:$0xff]
        %v440 = vld [vmem:[%s143 + $0x818] sm:$0xff]
        %v441 = vld [vmem:[%s143 + $0x820] sm:$0xff]
        %v442 = vld [vmem:[%s143 + $0x828] sm:$0xff]
        %v443 = vld [vmem:[%s143 + $0x830] sm:$0xff]
        %v444 = vld [vmem:[%s143 + $0x838] sm:$0xff]
        %v445 = vld [vmem:[%s143 + $0x840] sm:$0xff]
        %v446 = vld [vmem:[%s143 + $0x848] sm:$0xff]
        %v447 = vld [vmem:[%s143 + $0x850] sm:$0xff]
        %v448 = vld [vmem:[%s143 + $0x858] sm:$0xff]
        %v449 = vld [vmem:[%s143 + $0x860] sm:$0xff]
        %v450 = vld [vmem:[%s143 + $0x868] sm:$0xff]
        %v451 = vld [vmem:[%s143 + $0x870] sm:$0xff]
        %v452 = vld [vmem:[%s143 + $0x878] sm:$0xff]
        %v453 = vld [vmem:[%s143 + $0x880] sm:$0xff]
        %v454 = vld [vmem:[%s143 + $0x888] sm:$0xff]
        %v455 = vld [vmem:[%s143 + $0x890] sm:$0xff]
        %v456 = vld [vmem:[%s143 + $0x898] sm:$0xff]
        %v457 = vld [vmem:[%s143 + $0x8a0] sm:$0xff]
        %v458 = vld [vmem:[%s143 + $0x8a8] sm:$0xff]
        %v459 = vld [vmem:[%s143 + $0x8b0] sm:$0xff]
        %v460 = vld [vmem:[%s143 + $0x8b8] sm:$0xff]
        %v461 = vld [vmem:[%s143 + $0x8c0] sm:$0xff]
        %v462 = vld [vmem:[%s143 + $0x8c8] sm:$0xff]
        %v463 = vld [vmem:[%s143 + $0x8d0] sm:$0xff]
        %v464 = vld [vmem:[%s143 + $0x8d8] sm:$0xff]
        %v465 = vld [vmem:[%s143 + $0x8e0] sm:$0xff]
        %v466 = vld [vmem:[%s143 + $0x8e8] sm:$0xff]
        %v467 = vld [vmem:[%s143 + $0x8f0] sm:$0xff]
        %v468 = vld [vmem:[%s143 + $0x8f8] sm:$0xff]
        %v469 = vld [vmem:[%s143 + $0x900] sm:$0xff]
        %v470 = vld [vmem:[%s143 + $0x908] sm:$0xff]
        %v471 = vld [vmem:[%s143 + $0x910] sm:$0xff]
        %v472 = vld [vmem:[%s143 + $0x918] sm:$0xff]
        %v473 = vld [vmem:[%s143 + $0x920] sm:$0xff]
        %v474 = vld [vmem:[%s143 + $0x928] sm:$0xff]
        %v475 = vld [vmem:[%s143 + $0x930] sm:$0xff]
        %v476 = vld [vmem:[%s143 + $0x938] sm:$0xff]
        %v477 = vld [vmem:[%s143 + $0x940] sm:$0xff]
        %v478 = vld [vmem:[%s143 + $0x948] sm:$0xff]
        %v479 = vld [vmem:[%s143 + $0x950] sm:$0xff]
        %v480 = vld [vmem:[%s143 + $0x958] sm:$0xff]
        %v481 = vld [vmem:[%s143 + $0x960] sm:$0xff]
        %v482 = vld [vmem:[%s143 + $0x968] sm:$0xff]
        %v483 = vld [vmem:[%s143 + $0x970] sm:$0xff]
        %v484 = vld [vmem:[%s143 + $0x978] sm:$0xff]
        %v485 = vld [vmem:[%s143 + $0x980] sm:$0xff]
        %v486 = vld [vmem:[%s143 + $0x988] sm:$0xff]
        %v487 = vld [vmem:[%s143 + $0x990] sm:$0xff]
        %v488 = vld [vmem:[%s143 + $0x998] sm:$0xff]
        %v489 = vld [vmem:[%s143 + $0x9a0] sm:$0xff]
        %v490 = vld [vmem:[%s143 + $0x9a8] sm:$0xff]
        %v491 = vld [vmem:[%s143 + $0x9b0] sm:$0xff]
        %v492 = vld [vmem:[%s143 + $0x9b8] sm:$0xff]
        %v493 = vld [vmem:[%s143 + $0x9c0] sm:$0xff]
        %v494 = vld [vmem:[%s143 + $0x9c8] sm:$0xff]
        %v495 = vld [vmem:[%s143 + $0x9d0] sm:$0xff]
        %v496 = vld [vmem:[%s143 + $0x9d8] sm:$0xff]
        %v497 = vld [vmem:[%s143 + $0x9e0] sm:$0xff]
        %v498 = vld [vmem:[%s143 + $0x9e8] sm:$0xff]
        %v499 = vld [vmem:[%s143 + $0x9f0] sm:$0xff]
        %v500 = vld [vmem:[%s143 + $0x9f8] sm:$0xff]
        %v501 = vld [vmem:[%s143 + $0xa00] sm:$0xff]
        %v502 = vld [vmem:[%s143 + $0xa08] sm:$0xff]
        %v503 = vld [vmem:[%s143 + $0xa10] sm:$0xff]
        %v504 = vld [vmem:[%s143 + $0xa18] sm:$0xff]
        %v505 = vld [vmem:[%s143 + $0xa20] sm:$0xff]
        %v506 = vld [vmem:[%s143 + $0xa28] sm:$0xff]
        %v507 = vld [vmem:[%s143 + $0xa30] sm:$0xff]
        %v508 = vld [vmem:[%s143 + $0xa38] sm:$0xff]
        %v509 = vld [vmem:[%s143 + $0xa40] sm:$0xff]
        %v510 = vld [vmem:[%s143 + $0xa48] sm:$0xff]
        %v511 = vld [vmem:[%s143 + $0xa50] sm:$0xff]
        %v512 = vld [vmem:[%s143 + $0xa58] sm:$0xff]
        %v513 = vld [vmem:[%s143 + $0xa60] sm:$0xff]
        %v514 = vld [vmem:[%s143 + $0xa68] sm:$0xff]
        %v515 = vld [vmem:[%s143 + $0xa70] sm:$0xff]
        %v516 = vld [vmem:[%s143 + $0xa78] sm:$0xff]
        %v517 = vld [vmem:[%s143 + $0xa80] sm:$0xff]
        %v518 = vld [vmem:[%s143 + $0xa88] sm:$0xff]
        %v519 = vld [vmem:[%s143 + $0xa90] sm:$0xff]
        %v520 = vld [vmem:[%s143 + $0xa98] sm:$0xff]
        %v521 = vld [vmem:[%s143 + $0xaa0] sm:$0xff]
        %v522 = vld [vmem:[%s143 + $0xaa8] sm:$0xff]
        %v523 = vld [vmem:[%s143 + $0xab0] sm:$0xff]
        %v524 = vld [vmem:[%s143 + $0xab8] sm:$0xff]
        %v525 = vld [vmem:[%s143 + $0xac0] sm:$0xff]
        %v526 = vld [vmem:[%s143 + $0xac8] sm:$0xff]
        %v527 = vld [vmem:[%s143 + $0xad0] sm:$0xff]
        %v528 = vld [vmem:[%s143 + $0xad8] sm:$0xff]
        %v529 = vld [vmem:[%s143 + $0xae0] sm:$0xff]
        %v530 = vld [vmem:[%s143 + $0xae8] sm:$0xff]
        %v531 = vld [vmem:[%s143 + $0xaf0] sm:$0xff]
        %v532 = vld [vmem:[%s143 + $0xaf8] sm:$0xff]
        %v533 = vld [vmem:[%s143 + $0xb00] sm:$0xff]
        %v534 = vld [vmem:[%s143 + $0xb08] sm:$0xff]
        %v535 = vld [vmem:[%s143 + $0xb10] sm:$0xff]
        %v536 = vld [vmem:[%s143 + $0xb18] sm:$0xff]
        %v537 = vld [vmem:[%s143 + $0xb20] sm:$0xff]
        %v538 = vld [vmem:[%s143 + $0xb28] sm:$0xff]
        %v539 = vld [vmem:[%s143 + $0xb30] sm:$0xff]
        %v540 = vld [vmem:[%s143 + $0xb38] sm:$0xff]
        %v541 = vld [vmem:[%s143 + $0xb40] sm:$0xff]
        %v542 = vld [vmem:[%s143 + $0xb48] sm:$0xff]
        %v543 = vld [vmem:[%s143 + $0xb50] sm:$0xff]
        %v544 = vld [vmem:[%s143 + $0xb58] sm:$0xff]
        %v545 = vld [vmem:[%s143 + $0xb60] sm:$0xff]
        %v546 = vld [vmem:[%s143 + $0xb68] sm:$0xff]
        %v547 = vld [vmem:[%s143 + $0xb70] sm:$0xff]
        %v548 = vld [vmem:[%s143 + $0xb78] sm:$0xff]
        %v549 = vld [vmem:[%s143 + $0xb80] sm:$0xff]
        %v550 = vld [vmem:[%s143 + $0xb88] sm:$0xff]
        %v551 = vld [vmem:[%s143 + $0xb90] sm:$0xff]
        %v552 = vld [vmem:[%s143 + $0xb98] sm:$0xff]
        %v553 = vld [vmem:[%s143 + $0xba0] sm:$0xff]
        %v554 = vld [vmem:[%s143 + $0xba8] sm:$0xff]
        %v555 = vld [vmem:[%s143 + $0xbb0] sm:$0xff]
        %v556 = vld [vmem:[%s143 + $0xbb8] sm:$0xff]
        %v557 = vld [vmem:[%s143 + $0xbc0] sm:$0xff]
        %v558 = vld [vmem:[%s143 + $0xbc8] sm:$0xff]
        %v559 = vld [vmem:[%s143 + $0xbd0] sm:$0xff]
        %v560 = vld [vmem:[%s143 + $0xbd8] sm:$0xff]
        %v561 = vld [vmem:[%s143 + $0xbe0] sm:$0xff]
        %v562 = vld [vmem:[%s143 + $0xbe8] sm:$0xff]
        %v563 = vld [vmem:[%s143 + $0xbf0] sm:$0xff]
        %v564 = vld [vmem:[%s143 + $0xbf8] sm:$0xff]
        %v565 = vld [vmem:[%s143 + $0xc00] sm:$0xff]
        %v566 = vld [vmem:[%s143 + $0xc08] sm:$0xff]
        %v567 = vld [vmem:[%s143 + $0xc10] sm:$0xff]
        %v568 = vld [vmem:[%s143 + $0xc18] sm:$0xff]
        %v569 = vld [vmem:[%s143 + $0xc20] sm:$0xff]
        %v570 = vld [vmem:[%s143 + $0xc28] sm:$0xff]
        %v571 = vld [vmem:[%s143 + $0xc30] sm:$0xff]
        %v572 = vld [vmem:[%s143 + $0xc38] sm:$0xff]
        %v573 = vld [vmem:[%s143 + $0xc40] sm:$0xff]
        %v574 = vld [vmem:[%s143 + $0xc48] sm:$0xff]
        %v575 = vld [vmem:[%s143 + $0xc50] sm:$0xff]
        %v576 = vld [vmem:[%s143 + $0xc58] sm:$0xff]
        %v577 = vld [vmem:[%s143 + $0xc60] sm:$0xff]
        %v578 = vld [vmem:[%s143 + $0xc68] sm:$0xff]
        %v579 = vld [vmem:[%s143 + $0xc70] sm:$0xff]
        %v580 = vld [vmem:[%s143 + $0xc78] sm:$0xff]
        %v581 = vld [vmem:[%s143 + $0xc80] sm:$0xff]
        %v582 = vld [vmem:[%s143 + $0xc88] sm:$0xff]
        %v583 = vld [vmem:[%s143 + $0xc90] sm:$0xff]
        %v584 = vld [vmem:[%s143 + $0xc98] sm:$0xff]
        %v585 = vld [vmem:[%s143 + $0xca0] sm:$0xff]
        %v586 = vld [vmem:[%s143 + $0xca8] sm:$0xff]
        %v587 = vld [vmem:[%s143 + $0xcb0] sm:$0xff]
        %v588 = vld [vmem:[%s143 + $0xcb8] sm:$0xff]
        %v589 = vld [vmem:[%s143 + $0xcc0] sm:$0xff]
        %v590 = vld [vmem:[%s143 + $0xcc8] sm:$0xff]
        %v591 = vld [vmem:[%s143 + $0xcd0] sm:$0xff]
        %v592 = vld [vmem:[%s143 + $0xcd8] sm:$0xff]
        %v593 = vld [vmem:[%s143 + $0xce0] sm:$0xff]
        %v594 = vld [vmem:[%s143 + $0xce8] sm:$0xff]
        %v595 = vld [vmem:[%s143 + $0xcf0] sm:$0xff]
        %v596 = vld [vmem:[%s143 + $0xcf8] sm:$0xff]
        %v597 = vld [vmem:[%s143 + $0xd00] sm:$0xff]
        %v598 = vld [vmem:[%s143 + $0xd08] sm:$0xff]
        %v599 = vld [vmem:[%s143 + $0xd10] sm:$0xff]
        %v600 = vld [vmem:[%s143 + $0xd18] sm:$0xff]
        %v601 = vld [vmem:[%s143 + $0xd20] sm:$0xff]
        %v602 = vld [vmem:[%s143 + $0xd28] sm:$0xff]
        %v603 = vld [vmem:[%s143 + $0xd30] sm:$0xff]
        %v604 = vld [vmem:[%s143 + $0xd38] sm:$0xff]
        %v605 = vld [vmem:[%s143 + $0xd40] sm:$0xff]
        %v606 = vld [vmem:[%s143 + $0xd48] sm:$0xff]
        %v607 = vld [vmem:[%s143 + $0xd50] sm:$0xff]
        %v608 = vld [vmem:[%s143 + $0xd58] sm:$0xff]
        %v609 = vld [vmem:[%s143 + $0xd60] sm:$0xff]
        %v610 = vld [vmem:[%s143 + $0xd68] sm:$0xff]
        %v611 = vld [vmem:[%s143 + $0xd70] sm:$0xff]
        %v612 = vld [vmem:[%s143 + $0xd78] sm:$0xff]
        %v613 = vld [vmem:[%s143 + $0xd80] sm:$0xff]
        %v614 = vld [vmem:[%s143 + $0xd88] sm:$0xff]
        %v615 = vld [vmem:[%s143 + $0xd90] sm:$0xff]
        %v616 = vld [vmem:[%s143 + $0xd98] sm:$0xff]
        %v617 = vld [vmem:[%s143 + $0xda0] sm:$0xff]
        %v618 = vld [vmem:[%s143 + $0xda8] sm:$0xff]
        %v619 = vld [vmem:[%s143 + $0xdb0] sm:$0xff]
        %v620 = vld [vmem:[%s143 + $0xdb8] sm:$0xff]
        %v621 = vld [vmem:[%s143 + $0xdc0] sm:$0xff]
        %v622 = vld [vmem:[%s143 + $0xdc8] sm:$0xff]
        %v623 = vld [vmem:[%s143 + $0xdd0] sm:$0xff]
        %v624 = vld [vmem:[%s143 + $0xdd8] sm:$0xff]
        %v625 = vld [vmem:[%s143 + $0xde0] sm:$0xff]
        %v626 = vld [vmem:[%s143 + $0xde8] sm:$0xff]
        %v627 = vld [vmem:[%s143 + $0xdf0] sm:$0xff]
        %v628 = vld [vmem:[%s143 + $0xdf8] sm:$0xff]
        %v629 = vld [vmem:[%s143 + $0xe00] sm:$0xff]
        %v630 = vld [vmem:[%s143 + $0xe08] sm:$0xff]
        %v631 = vld [vmem:[%s143 + $0xe10] sm:$0xff]
        %v632 = vld [vmem:[%s143 + $0xe18] sm:$0xff]
        %v633 = vld [vmem:[%s143 + $0xe20] sm:$0xff]
        %v634 = vld [vmem:[%s143 + $0xe28] sm:$0xff]
        %v635 = vld [vmem:[%s143 + $0xe30] sm:$0xff]
        %v636 = vld [vmem:[%s143 + $0xe38] sm:$0xff]
        %v637 = vld [vmem:[%s143 + $0xe40] sm:$0xff]
        %v638 = vld [vmem:[%s143 + $0xe48] sm:$0xff]
        %v639 = vld [vmem:[%s143 + $0xe50] sm:$0xff]
        %v640 = vld [vmem:[%s143 + $0xe58] sm:$0xff]
        %v641 = vld [vmem:[%s143 + $0xe60] sm:$0xff]
        %v642 = vld [vmem:[%s143 + $0xe68] sm:$0xff]
        %v643 = vld [vmem:[%s143 + $0xe70] sm:$0xff]
        %v644 = vld [vmem:[%s143 + $0xe78] sm:$0xff]
        %v645 = vld [vmem:[%s143 + $0xe80] sm:$0xff]
        %v646 = vld [vmem:[%s143 + $0xe88] sm:$0xff]
        %v647 = vld [vmem:[%s143 + $0xe90] sm:$0xff]
        %v648 = vld [vmem:[%s143 + $0xe98] sm:$0xff]
        %v649 = vld [vmem:[%s143 + $0xea0] sm:$0xff]
        %v650 = vld [vmem:[%s143 + $0xea8] sm:$0xff]
        %v651 = vld [vmem:[%s143 + $0xeb0] sm:$0xff]
        %v652 = vld [vmem:[%s143 + $0xeb8] sm:$0xff]
        %v653 = vld [vmem:[%s143 + $0xec0] sm:$0xff]
        %v654 = vld [vmem:[%s143 + $0xec8] sm:$0xff]
        %v655 = vld [vmem:[%s143 + $0xed0] sm:$0xff]
        %v656 = vld [vmem:[%s143 + $0xed8] sm:$0xff]
        %v657 = vld [vmem:[%s143 + $0xee0] sm:$0xff]
        %v658 = vld [vmem:[%s143 + $0xee8] sm:$0xff]
        %v659 = vld [vmem:[%s143 + $0xef0] sm:$0xff]
        %v660 = vld [vmem:[%s143 + $0xef8] sm:$0xff]
        %v661 = vld [vmem:[%s143 + $0xf00] sm:$0xff]
        %v662 = vld [vmem:[%s143 + $0xf08] sm:$0xff]
        %v663 = vld [vmem:[%s143 + $0xf10] sm:$0xff]
        %v664 = vld [vmem:[%s143 + $0xf18] sm:$0xff]
        %v665 = vld [vmem:[%s143 + $0xf20] sm:$0xff]
        %v666 = vld [vmem:[%s143 + $0xf28] sm:$0xff]
        %v667 = vld [vmem:[%s143 + $0xf30] sm:$0xff]
        %v668 = vld [vmem:[%s143 + $0xf38] sm:$0xff]
        %v669 = vld [vmem:[%s143 + $0xf40] sm:$0xff]
        %v670 = vld [vmem:[%s143 + $0xf48] sm:$0xff]
        %v671 = vld [vmem:[%s143 + $0xf50] sm:$0xff]
        %v672 = vld [vmem:[%s143 + $0xf58] sm:$0xff]
        %v673 = vld [vmem:[%s143 + $0xf60] sm:$0xff]
        %v674 = vld [vmem:[%s143 + $0xf68] sm:$0xff]
        %v675 = vld [vmem:[%s143 + $0xf70] sm:$0xff]
        %v676 = vld [vmem:[%s143 + $0xf78] sm:$0xff]
        %v677 = vld [vmem:[%s143 + $0xf80] sm:$0xff]
        %v678 = vld [vmem:[%s143 + $0xf88] sm:$0xff]
        %v679 = vld [vmem:[%s143 + $0xf90] sm:$0xff]
        %v680 = vld [vmem:[%s143 + $0xf98] sm:$0xff]
        %v681 = vld [vmem:[%s143 + $0xfa0] sm:$0xff]
        %v682 = vld [vmem:[%s143 + $0xfa8] sm:$0xff]
        %v683 = vld [vmem:[%s143 + $0xfb0] sm:$0xff]
        %v684 = vld [vmem:[%s143 + $0xfb8] sm:$0xff]
        %v685 = vld [vmem:[%s143 + $0xfc0] sm:$0xff]
        %v686 = vld [vmem:[%s143 + $0xfc8] sm:$0xff]
        %v687 = vld [vmem:[%s143 + $0xfd0] sm:$0xff]
        %v688 = vld [vmem:[%s143 + $0xfd8] sm:$0xff]
        %v689 = vld [vmem:[%s143 + $0xfe0] sm:$0xff]
        %v690 = vld [vmem:[%s143 + $0xfe8] sm:$0xff]
        %v691 = vld [vmem:[%s143 + $0xff0] sm:$0xff]
        %v692 = vld [vmem:[%s143 + $0xff8] sm:$0xff]
        %v693 = vld [vmem:[%s143 + $0x1000] sm:$0xff]
        %v694 = vld [vmem:[%s143 + $0x1008] sm:$0xff]
        %v695 = vld [vmem:[%s143 + $0x1010] sm:$0xff]
        %v696 = vld [vmem:[%s143 + $0x1018] sm:$0xff]
        %v697 = vld [vmem:[%s143 + $0x1020] sm:$0xff]
        %v698 = vld [vmem:[%s143 + $0x1028] sm:$0xff]
        %v699 = vld [vmem:[%s143 + $0x1030] sm:$0xff]
        %v700 = vld [vmem:[%s143 + $0x1038] sm:$0xff]
        %v701 = vld [vmem:[%s143 + $0x1040] sm:$0xff]
        %v702 = vld [vmem:[%s143 + $0x1048] sm:$0xff]
        %v703 = vld [vmem:[%s143 + $0x1050] sm:$0xff]
        %v704 = vld [vmem:[%s143 + $0x1058] sm:$0xff]
        %v705 = vld [vmem:[%s143 + $0x1060] sm:$0xff]
        %v706 = vld [vmem:[%s143 + $0x1068] sm:$0xff]
        %v707 = vld [vmem:[%s143 + $0x1070] sm:$0xff]
        %v708 = vld [vmem:[%s143 + $0x1078] sm:$0xff]
        %v709 = vld [vmem:[%s143 + $0x1080] sm:$0xff]
        %v710 = vld [vmem:[%s143 + $0x1088] sm:$0xff]
        %v711 = vld [vmem:[%s143 + $0x1090] sm:$0xff]
        %v712 = vld [vmem:[%s143 + $0x1098] sm:$0xff]
        %v713 = vld [vmem:[%s143 + $0x10a0] sm:$0xff]
        %v714 = vld [vmem:[%s143 + $0x10a8] sm:$0xff]
        %v715 = vld [vmem:[%s143 + $0x10b0] sm:$0xff]
        %v716 = vld [vmem:[%s143 + $0x10b8] sm:$0xff]
        %v717 = vld [vmem:[%s143 + $0x10c0] sm:$0xff]
        %v718 = vld [vmem:[%s143 + $0x10c8] sm:$0xff]
        %v719 = vld [vmem:[%s143 + $0x10d0] sm:$0xff]
        %v720 = vld [vmem:[%s143 + $0x10d8] sm:$0xff]
        %v721 = vld [vmem:[%s143 + $0x10e0] sm:$0xff]
        %v722 = vld [vmem:[%s143 + $0x10e8] sm:$0xff]
        %v723 = vld [vmem:[%s143 + $0x10f0] sm:$0xff]
        %v724 = vld [vmem:[%s143 + $0x10f8] sm:$0xff]
        %v725 = vld [vmem:[%s143 + $0x1100] sm:$0xff]
        %v726 = vld [vmem:[%s143 + $0x1108] sm:$0xff]
        %v727 = vld [vmem:[%s143 + $0x1110] sm:$0xff]
        %v728 = vld [vmem:[%s143 + $0x1118] sm:$0xff]
        %v729 = vld [vmem:[%s143 + $0x1120] sm:$0xff]
        %v730 = vld [vmem:[%s143 + $0x1128] sm:$0xff]
        %v731 = vld [vmem:[%s143 + $0x1130] sm:$0xff]
        %v732 = vld [vmem:[%s143 + $0x1138] sm:$0xff]
        %v733 = vld [vmem:[%s143 + $0x1140] sm:$0xff]
        %v734 = vld [vmem:[%s143 + $0x1148] sm:$0xff]
        %v735 = vld [vmem:[%s143 + $0x1150] sm:$0xff]
        %v736 = vld [vmem:[%s143 + $0x1158] sm:$0xff]
        %v737 = vld [vmem:[%s143 + $0x1160] sm:$0xff]
        %v738 = vld [vmem:[%s143 + $0x1168] sm:$0xff]
        %v739 = vld [vmem:[%s143 + $0x1170] sm:$0xff]
        %v740 = vld [vmem:[%s143 + $0x1178] sm:$0xff]
        %v741 = vld [vmem:[%s143 + $0x1180] sm:$0xff]
        %v742 = vld [vmem:[%s143 + $0x1188] sm:$0xff]
        %v743 = vld [vmem:[%s143 + $0x1190] sm:$0xff]
        %v744 = vld [vmem:[%s143 + $0x1198] sm:$0xff]
        %v745 = vld [vmem:[%s143 + $0x11a0] sm:$0xff]
        %v746 = vld [vmem:[%s143 + $0x11a8] sm:$0xff]
        %v747 = vld [vmem:[%s143 + $0x11b0] sm:$0xff]
        %v748 = vld [vmem:[%s143 + $0x11b8] sm:$0xff]
        %v749 = vld [vmem:[%s143 + $0x11c0] sm:$0xff]
        %v750 = vld [vmem:[%s143 + $0x11c8] sm:$0xff]
        %v751 = vld [vmem:[%s143 + $0x11d0] sm:$0xff]
        %v752 = vld [vmem:[%s143 + $0x11d8] sm:$0xff]
        %v753 = vld [vmem:[%s143 + $0x11e0] sm:$0xff]
        %v754 = vld [vmem:[%s143 + $0x11e8] sm:$0xff]
        %v755 = vld [vmem:[%s143 + $0x11f0] sm:$0xff]
        %v756 = vld [vmem:[%s143 + $0x11f8] sm:$0xff]
        %v757 = vld [vmem:[%s143 + $0x1200] sm:$0xff]
        %v758 = vld [vmem:[%s143 + $0x1208] sm:$0xff]
        %v759 = vld [vmem:[%s143 + $0x1210] sm:$0xff]
        %v760 = vld [vmem:[%s143 + $0x1218] sm:$0xff]
        %v761 = vld [vmem:[%s143 + $0x1220] sm:$0xff]
        %v762 = vld [vmem:[%s143 + $0x1228] sm:$0xff]
        %v763 = vld [vmem:[%s143 + $0x1230] sm:$0xff]
        %v764 = vld [vmem:[%s143 + $0x1238] sm:$0xff]
        %v765 = vld [vmem:[%s143 + $0x1240] sm:$0xff]
        %v766 = vld [vmem:[%s143 + $0x1248] sm:$0xff]
        %v767 = vld [vmem:[%s143 + $0x1250] sm:$0xff]
        %v768 = vld [vmem:[%s143 + $0x1258] sm:$0xff]
        %v769 = vld [vmem:[%s143 + $0x1260] sm:$0xff]
        %v770 = vld [vmem:[%s143 + $0x1268] sm:$0xff]
        %v771 = vld [vmem:[%s143 + $0x1270] sm:$0xff]
        %v772 = vld [vmem:[%s143 + $0x1278] sm:$0xff]
        %v773 = vld [vmem:[%s143 + $0x1280] sm:$0xff]
        %v774 = vld [vmem:[%s143 + $0x1288] sm:$0xff]
        %v775 = vld [vmem:[%s143 + $0x1290] sm:$0xff]
        %v776 = vld [vmem:[%s143 + $0x1298] sm:$0xff]
        %v777 = vld [vmem:[%s143 + $0x12a0] sm:$0xff]
        %v778 = vld [vmem:[%s143 + $0x12a8] sm:$0xff]
        %v779 = vld [vmem:[%s143 + $0x12b0] sm:$0xff]
        %v780 = vld [vmem:[%s143 + $0x12b8] sm:$0xff]
        %v781 = vld [vmem:[%s143 + $0x12c0] sm:$0xff]
        %v782 = vld [vmem:[%s143 + $0x12c8] sm:$0xff]
        %v783 = vld [vmem:[%s143 + $0x12d0] sm:$0xff]
        %v784 = vld [vmem:[%s143 + $0x12d8] sm:$0xff]
        %v785 = vld [vmem:[%s143 + $0x12e0] sm:$0xff]
        %v786 = vld [vmem:[%s143 + $0x12e8] sm:$0xff]
        %v787 = vld [vmem:[%s143 + $0x12f0] sm:$0xff]
        %v788 = vld [vmem:[%s143 + $0x12f8] sm:$0xff]
        %v789 = vld [vmem:[%s143 + $0x1300] sm:$0xff]
        %v790 = vld [vmem:[%s143 + $0x1308] sm:$0xff]
        %v791 = vld [vmem:[%s143 + $0x1310] sm:$0xff]
        %v792 = vld [vmem:[%s143 + $0x1318] sm:$0xff]
        %v793 = vld [vmem:[%s143 + $0x1320] sm:$0xff]
        %v794 = vld [vmem:[%s143 + $0x1328] sm:$0xff]
        %v795 = vld [vmem:[%s143 + $0x1330] sm:$0xff]
        %v796 = vld [vmem:[%s143 + $0x1338] sm:$0xff]
        %v797 = vld [vmem:[%s143 + $0x1340] sm:$0xff]
        %v798 = vld [vmem:[%s143 + $0x1348] sm:$0xff]
        %v799 = vld [vmem:[%s143 + $0x1350] sm:$0xff]
        %v800 = vld [vmem:[%s143 + $0x1358] sm:$0xff]
        %v801 = vld [vmem:[%s143 + $0x1360] sm:$0xff]
        %v802 = vld [vmem:[%s143 + $0x1368] sm:$0xff]
        %v803 = vld [vmem:[%s143 + $0x1370] sm:$0xff]
        %v804 = vld [vmem:[%s143 + $0x1378] sm:$0xff]
        %v805 = vld [vmem:[%s143 + $0x1380] sm:$0xff]
        %v806 = vld [vmem:[%s143 + $0x1388] sm:$0xff]
        %v807 = vld [vmem:[%s143 + $0x1390] sm:$0xff]
        %v808 = vld [vmem:[%s143 + $0x1398] sm:$0xff]
        %v809 = vld [vmem:[%s143 + $0x13a0] sm:$0xff]
        %v810 = vld [vmem:[%s143 + $0x13a8] sm:$0xff]
        %v811 = vld [vmem:[%s143 + $0x13b0] sm:$0xff]
        %v812 = vld [vmem:[%s143 + $0x13b8] sm:$0xff]
        %v813 = vld [vmem:[%s143 + $0x13c0] sm:$0xff]
        %v814 = vld [vmem:[%s143 + $0x13c8] sm:$0xff]
        %v815 = vld [vmem:[%s143 + $0x13d0] sm:$0xff]
        %v816 = vld [vmem:[%s143 + $0x13d8] sm:$0xff]
        %v817 = vld [vmem:[%s143 + $0x13e0] sm:$0xff]
        %v818 = vld [vmem:[%s143 + $0x13e8] sm:$0xff]
        %v819 = vld [vmem:[%s143 + $0x13f0] sm:$0xff]
        %v820 = vld [vmem:[%s143 + $0x13f8] sm:$0xff]
        %v821 = vld [vmem:[%s143 + $0x1400] sm:$0xff]
        %v822 = vld [vmem:[%s143 + $0x1408] sm:$0xff]
        %v823 = vld [vmem:[%s143 + $0x1410] sm:$0xff]
        %v824 = vld [vmem:[%s143 + $0x1418] sm:$0xff]
        %v825 = vld [vmem:[%s143 + $0x1420] sm:$0xff]
        %v826 = vld [vmem:[%s143 + $0x1428] sm:$0xff]
        %v827 = vld [vmem:[%s143 + $0x1430] sm:$0xff]
        %v828 = vld [vmem:[%s143 + $0x1438] sm:$0xff]
        %v829 = vld [vmem:[%s143 + $0x1440] sm:$0xff]
        %v830 = vld [vmem:[%s143 + $0x1448] sm:$0xff]
        %v831 = vld [vmem:[%s143 + $0x1450] sm:$0xff]
        %v832 = vld [vmem:[%s143 + $0x1458] sm:$0xff]
        %v833 = vld [vmem:[%s143 + $0x1460] sm:$0xff]
        %v834 = vld [vmem:[%s143 + $0x1468] sm:$0xff]
        %v835 = vld [vmem:[%s143 + $0x1470] sm:$0xff]
        %v836 = vld [vmem:[%s143 + $0x1478] sm:$0xff]
        %v837 = vld [vmem:[%s143 + $0x1480] sm:$0xff]
        %v838 = vld [vmem:[%s143 + $0x1488] sm:$0xff]
        %v839 = vld [vmem:[%s143 + $0x1490] sm:$0xff]
        %v840 = vld [vmem:[%s143 + $0x1498] sm:$0xff]
        %v841 = vld [vmem:[%s143 + $0x14a0] sm:$0xff]
        %v842 = vld [vmem:[%s143 + $0x14a8] sm:$0xff]
        %v843 = vld [vmem:[%s143 + $0x14b0] sm:$0xff]
        %v844 = vld [vmem:[%s143 + $0x14b8] sm:$0xff]
        %v845 = vld [vmem:[%s143 + $0x14c0] sm:$0xff]
        %v846 = vld [vmem:[%s143 + $0x14c8] sm:$0xff]
        %v847 = vld [vmem:[%s143 + $0x14d0] sm:$0xff]
        %v848 = vld [vmem:[%s143 + $0x14d8] sm:$0xff]
        %v849 = vld [vmem:[%s143 + $0x14e0] sm:$0xff]
        %v850 = vld [vmem:[%s143 + $0x14e8] sm:$0xff]
        %v851 = vld [vmem:[%s143 + $0x14f0] sm:$0xff]
        %v852 = vld [vmem:[%s143 + $0x14f8] sm:$0xff]
        %v853 = vld [vmem:[%s143 + $0x1500] sm:$0xff]
        %v854 = vld [vmem:[%s143 + $0x1508] sm:$0xff]
        %v855 = vld [vmem:[%s143 + $0x1510] sm:$0xff]
        %v856 = vld [vmem:[%s143 + $0x1518] sm:$0xff]
        %v857 = vld [vmem:[%s143 + $0x1520] sm:$0xff]
        %v858 = vld [vmem:[%s143 + $0x1528] sm:$0xff]
        %v859 = vld [vmem:[%s143 + $0x1530] sm:$0xff]
        %v860 = vld [vmem:[%s143 + $0x1538] sm:$0xff]
        %v861 = vld [vmem:[%s143 + $0x1540] sm:$0xff]
        %v862 = vld [vmem:[%s143 + $0x1548] sm:$0xff]
        %v863 = vld [vmem:[%s143 + $0x1550] sm:$0xff]
        %v864 = vld [vmem:[%s143 + $0x1558] sm:$0xff]
        %v865 = vld [vmem:[%s143 + $0x1560] sm:$0xff]
        %v866 = vld [vmem:[%s143 + $0x1568] sm:$0xff]
        %v867 = vld [vmem:[%s143 + $0x1570] sm:$0xff]
        %v868 = vld [vmem:[%s143 + $0x1578] sm:$0xff]
        %v869 = vld [vmem:[%s143 + $0x1580] sm:$0xff]
        %v870 = vld [vmem:[%s143 + $0x1588] sm:$0xff]
        %v871 = vld [vmem:[%s143 + $0x1590] sm:$0xff]
        %v872 = vld [vmem:[%s143 + $0x1598] sm:$0xff]
        %v873 = vld [vmem:[%s143 + $0x15a0] sm:$0xff]
        %v874 = vld [vmem:[%s143 + $0x15a8] sm:$0xff]
        %v875 = vld [vmem:[%s143 + $0x15b0] sm:$0xff]
        %v876 = vld [vmem:[%s143 + $0x15b8] sm:$0xff]
        %v877 = vld [vmem:[%s143 + $0x15c0] sm:$0xff]
        %v878 = vld [vmem:[%s143 + $0x15c8] sm:$0xff]
        %v879 = vld [vmem:[%s143 + $0x15d0] sm:$0xff]
        %v880 = vld [vmem:[%s143 + $0x15d8] sm:$0xff]
        %v881 = vld [vmem:[%s143 + $0x15e0] sm:$0xff]
        %v882 = vld [vmem:[%s143 + $0x15e8] sm:$0xff]
        %v883 = vld [vmem:[%s143 + $0x15f0] sm:$0xff]
        %v884 = vld [vmem:[%s143 + $0x15f8] sm:$0xff]
        %v885 = vld [vmem:[%s143 + $0x1600] sm:$0xff]
        %v886 = vld [vmem:[%s143 + $0x1608] sm:$0xff]
        %v887 = vld [vmem:[%s143 + $0x1610] sm:$0xff]
        %v888 = vld [vmem:[%s143 + $0x1618] sm:$0xff]
        %v889 = vld [vmem:[%s143 + $0x1620] sm:$0xff]
        %v890 = vld [vmem:[%s143 + $0x1628] sm:$0xff]
        %v891 = vld [vmem:[%s143 + $0x1630] sm:$0xff]
        %v892 = vld [vmem:[%s143 + $0x1638] sm:$0xff]
        %v893 = vld [vmem:[%s143 + $0x1640] sm:$0xff]
        %v894 = vld [vmem:[%s143 + $0x1648] sm:$0xff]
        %v895 = vld [vmem:[%s143 + $0x1650] sm:$0xff]
        %v896 = vld [vmem:[%s143 + $0x1658] sm:$0xff]
        %v897 = vld [vmem:[%s143 + $0x1660] sm:$0xff]
        %v898 = vld [vmem:[%s143 + $0x1668] sm:$0xff]
        %v899 = vld [vmem:[%s143 + $0x1670] sm:$0xff]
        %v900 = vld [vmem:[%s143 + $0x1678] sm:$0xff]
        %v901 = vld [vmem:[%s143 + $0x1680] sm:$0xff]
        %v902 = vld [vmem:[%s143 + $0x1688] sm:$0xff]
        %v903 = vld [vmem:[%s143 + $0x1690] sm:$0xff]
        %v904 = vld [vmem:[%s143 + $0x1698] sm:$0xff]
        %v905 = vld [vmem:[%s143 + $0x16a0] sm:$0xff]
        %v906 = vld [vmem:[%s143 + $0x16a8] sm:$0xff]
        %v907 = vld [vmem:[%s143 + $0x16b0] sm:$0xff]
        %v908 = vld [vmem:[%s143 + $0x16b8] sm:$0xff]
        %v909 = vld [vmem:[%s143 + $0x16c0] sm:$0xff]
        %v910 = vld [vmem:[%s143 + $0x16c8] sm:$0xff]
        %v911 = vld [vmem:[%s143 + $0x16d0] sm:$0xff]
        %v912 = vld [vmem:[%s143 + $0x16d8] sm:$0xff]
        %v913 = vld [vmem:[%s143 + $0x16e0] sm:$0xff]
        %v914 = vld [vmem:[%s143 + $0x16e8] sm:$0xff]
        %v915 = vld [vmem:[%s143 + $0x16f0] sm:$0xff]
        %v916 = vld [vmem:[%s143 + $0x16f8] sm:$0xff]
        %v917 = vld [vmem:[%s143 + $0x1700] sm:$0xff]
        %v918 = vld [vmem:[%s143 + $0x1708] sm:$0xff]
        %v919 = vld [vmem:[%s143 + $0x1710] sm:$0xff]
        %v920 = vld [vmem:[%s143 + $0x1718] sm:$0xff]
        %v921 = vld [vmem:[%s143 + $0x1720] sm:$0xff]
        %v922 = vld [vmem:[%s143 + $0x1728] sm:$0xff]
        %v923 = vld [vmem:[%s143 + $0x1730] sm:$0xff]
        %v924 = vld [vmem:[%s143 + $0x1738] sm:$0xff]
        %v925 = vld [vmem:[%s143 + $0x1740] sm:$0xff]
        %v926 = vld [vmem:[%s143 + $0x1748] sm:$0xff]
        %v927 = vld [vmem:[%s143 + $0x1750] sm:$0xff]
        %v928 = vld [vmem:[%s143 + $0x1758] sm:$0xff]
        %v929 = vld [vmem:[%s143 + $0x1760] sm:$0xff]
        %v930 = vld [vmem:[%s143 + $0x1768] sm:$0xff]
        %v931 = vld [vmem:[%s143 + $0x1770] sm:$0xff]
        %v932 = vld [vmem:[%s143 + $0x1778] sm:$0xff]
        %v933 = vld [vmem:[%s143 + $0x1780] sm:$0xff]
        %v934 = vld [vmem:[%s143 + $0x1788] sm:$0xff]
        %v935 = vld [vmem:[%s143 + $0x1790] sm:$0xff]
        %v936 = vld [vmem:[%s143 + $0x1798] sm:$0xff]
        %v937 = vld [vmem:[%s143 + $0x17a0] sm:$0xff]
        %v938 = vld [vmem:[%s143 + $0x17a8] sm:$0xff]
        %v939 = vld [vmem:[%s143 + $0x17b0] sm:$0xff]
        %v940 = vld [vmem:[%s143 + $0x17b8] sm:$0xff]
        %v941 = vld [vmem:[%s143 + $0x17c0] sm:$0xff]
        %v942 = vld [vmem:[%s143 + $0x17c8] sm:$0xff]
        %v943 = vld [vmem:[%s143 + $0x17d0] sm:$0xff]
        %v944 = vld [vmem:[%s143 + $0x17d8] sm:$0xff]
        %v945 = vld [vmem:[%s143 + $0x17e0] sm:$0xff]
        %v946 = vld [vmem:[%s143 + $0x17e8] sm:$0xff]
        %v947 = vld [vmem:[%s143 + $0x17f0] sm:$0xff]
        %v948 = vld [vmem:[%s143 + $0x17f8] sm:$0xff]
        %v949 = vld [vmem:[%s143 + $0x1800] sm:$0xff]
        %v950 = vld [vmem:[%s143 + $0x1808] sm:$0xff]
        %v951 = vld [vmem:[%s143 + $0x1810] sm:$0xff]
        %v952 = vld [vmem:[%s143 + $0x1818] sm:$0xff]
        %v953 = vld [vmem:[%s143 + $0x1820] sm:$0xff]
        %v954 = vld [vmem:[%s143 + $0x1828] sm:$0xff]
        %v955 = vld [vmem:[%s143 + $0x1830] sm:$0xff]
        %v956 = vld [vmem:[%s143 + $0x1838] sm:$0xff]
        %v957 = vld [vmem:[%s143 + $0x1840] sm:$0xff]
        %v958 = vld [vmem:[%s143 + $0x1848] sm:$0xff]
        %v959 = vld [vmem:[%s143 + $0x1850] sm:$0xff]
        %v960 = vld [vmem:[%s143 + $0x1858] sm:$0xff]
        %v961 = vld [vmem:[%s143 + $0x1860] sm:$0xff]
        %v962 = vld [vmem:[%s143 + $0x1868] sm:$0xff]
        %v963 = vld [vmem:[%s143 + $0x1870] sm:$0xff]
        %v964 = vld [vmem:[%s143 + $0x1878] sm:$0xff]
        %v965 = vld [vmem:[%s143 + $0x1880] sm:$0xff]
        %v966 = vld [vmem:[%s143 + $0x1888] sm:$0xff]
        %v967 = vld [vmem:[%s143 + $0x1890] sm:$0xff]
        %v968 = vld [vmem:[%s143 + $0x1898] sm:$0xff]
        %v969 = vld [vmem:[%s143 + $0x18a0] sm:$0xff]
        %v970 = vld [vmem:[%s143 + $0x18a8] sm:$0xff]
        %v971 = vld [vmem:[%s143 + $0x18b0] sm:$0xff]
        %v972 = vld [vmem:[%s143 + $0x18b8] sm:$0xff]
        %v973 = vld [vmem:[%s143 + $0x18c0] sm:$0xff]
        %v974 = vld [vmem:[%s143 + $0x18c8] sm:$0xff]
        %v975 = vld [vmem:[%s143 + $0x18d0] sm:$0xff]
        %v976 = vld [vmem:[%s143 + $0x18d8] sm:$0xff]
        %v977 = vld [vmem:[%s143 + $0x18e0] sm:$0xff]
        %v978 = vld [vmem:[%s143 + $0x18e8] sm:$0xff]
        %v979 = vld [vmem:[%s143 + $0x18f0] sm:$0xff]
        %v980 = vld [vmem:[%s143 + $0x18f8] sm:$0xff]
        %v981 = vld [vmem:[%s143 + $0x1900] sm:$0xff]
        %v982 = vld [vmem:[%s143 + $0x1908] sm:$0xff]
        %v983 = vld [vmem:[%s143 + $0x1910] sm:$0xff]
        %v984 = vld [vmem:[%s143 + $0x1918] sm:$0xff]
        %v985 = vld [vmem:[%s143 + $0x1920] sm:$0xff]
        %v986 = vld [vmem:[%s143 + $0x1928] sm:$0xff]
        %v987 = vld [vmem:[%s143 + $0x1930] sm:$0xff]
        %v988 = vld [vmem:[%s143 + $0x1938] sm:$0xff]
        %v989 = vld [vmem:[%s143 + $0x1940] sm:$0xff]
        %v990 = vld [vmem:[%s143 + $0x1948] sm:$0xff]
        %v991 = vld [vmem:[%s143 + $0x1950] sm:$0xff]
        %v992 = vld [vmem:[%s143 + $0x1958] sm:$0xff]
        %v993 = vld [vmem:[%s143 + $0x1960] sm:$0xff]
        %v994 = vld [vmem:[%s143 + $0x1968] sm:$0xff]
        %v995 = vld [vmem:[%s143 + $0x1970] sm:$0xff]
        %v996 = vld [vmem:[%s143 + $0x1978] sm:$0xff]
        %v997 = vld [vmem:[%s143 + $0x1980] sm:$0xff]
        %v998 = vld [vmem:[%s143 + $0x1988] sm:$0xff]
        %v999 = vld [vmem:[%s143 + $0x1990] sm:$0xff]
        %v1000 = vld [vmem:[%s143 + $0x1998] sm:$0xff]
        %v1001 = vld [vmem:[%s143 + $0x19a0] sm:$0xff]
        %v1002 = vld [vmem:[%s143 + $0x19a8] sm:$0xff]
        %v1003 = vld [vmem:[%s143 + $0x19b0] sm:$0xff]
        %v1004 = vld [vmem:[%s143 + $0x19b8] sm:$0xff]
        %v1005 = vld [vmem:[%s143 + $0x19c0] sm:$0xff]
        %v1006 = vld [vmem:[%s143 + $0x19c8] sm:$0xff]
        %v1007 = vld [vmem:[%s143 + $0x19d0] sm:$0xff]
        %v1008 = vld [vmem:[%s143 + $0x19d8] sm:$0xff]
        %v1009 = vld [vmem:[%s143 + $0x19e0] sm:$0xff]
        %v1010 = vld [vmem:[%s143 + $0x19e8] sm:$0xff]
        %v1011 = vld [vmem:[%s143 + $0x19f0] sm:$0xff]
        %v1012 = vld [vmem:[%s143 + $0x19f8] sm:$0xff]
        %v1013 = vld [vmem:[%s143 + $0x1a00] sm:$0xff]
        %v1014 = vld [vmem:[%s143 + $0x1a08] sm:$0xff]
        %v1015 = vld [vmem:[%s143 + $0x1a10] sm:$0xff]
        %v1016 = vld [vmem:[%s143 + $0x1a18] sm:$0xff]
        %v1017 = vld [vmem:[%s143 + $0x1a20] sm:$0xff]
        %v1018 = vld [vmem:[%s143 + $0x1a28] sm:$0xff]
        %v1019 = vld [vmem:[%s143 + $0x1a30] sm:$0xff]
        %v1020 = vld [vmem:[%s143 + $0x1a38] sm:$0xff]
        %v1021 = vld [vmem:[%s143 + $0x1a40] sm:$0xff]
        %v1022 = vld [vmem:[%s143 + $0x1a48] sm:$0xff]
        %v1023 = vld [vmem:[%s143 + $0x1a50] sm:$0xff]
        %v1024 = vld [vmem:[%s143 + $0x1a58] sm:$0xff]
        %v1025 = vld [vmem:[%s143 + $0x1a60] sm:$0xff]
        %v1026 = vld [vmem:[%s143 + $0x1a68] sm:$0xff]
        %v1027 = vld [vmem:[%s143 + $0x1a70] sm:$0xff]
        %v1028 = vld [vmem:[%s143 + $0x1a78] sm:$0xff]
        %v1029 = vld [vmem:[%s143 + $0x1a80] sm:$0xff]
        %v1030 = vld [vmem:[%s143 + $0x1a88] sm:$0xff]
        %v1031 = vld [vmem:[%s143 + $0x1a90] sm:$0xff]
        %v1032 = vld [vmem:[%s143 + $0x1a98] sm:$0xff]
        %v1033 = vld [vmem:[%s143 + $0x1aa0] sm:$0xff]
        %v1034 = vld [vmem:[%s143 + $0x1aa8] sm:$0xff]
        %v1035 = vld [vmem:[%s143 + $0x1ab0] sm:$0xff]
        %v1036 = vld [vmem:[%s143 + $0x1ab8] sm:$0xff]
        %v1037 = vld [vmem:[%s143 + $0x1ac0] sm:$0xff]
        %v1038 = vld [vmem:[%s143 + $0x1ac8] sm:$0xff]
        %v1039 = vld [vmem:[%s143 + $0x1ad0] sm:$0xff]
        %v1040 = vld [vmem:[%s143 + $0x1ad8] sm:$0xff]
        %v1041 = vld [vmem:[%s143 + $0x1ae0] sm:$0xff]
        %v1042 = vld [vmem:[%s143 + $0x1ae8] sm:$0xff]
        %v1043 = vld [vmem:[%s143 + $0x1af0] sm:$0xff]
        %v1044 = vld [vmem:[%s143 + $0x1af8] sm:$0xff]
        %v1045 = vld [vmem:[%s143 + $0x1b00] sm:$0xff]
        %v1046 = vld [vmem:[%s143 + $0x1b08] sm:$0xff]
        %v1047 = vld [vmem:[%s143 + $0x1b10] sm:$0xff]
        %v1048 = vld [vmem:[%s143 + $0x1b18] sm:$0xff]
        %v1049 = vld [vmem:[%s143 + $0x1b20] sm:$0xff]
        %v1050 = vld [vmem:[%s143 + $0x1b28] sm:$0xff]
        %v1051 = vld [vmem:[%s143 + $0x1b30] sm:$0xff]
        %v1052 = vld [vmem:[%s143 + $0x1b38] sm:$0xff]
        %v1053 = vld [vmem:[%s143 + $0x1b40] sm:$0xff]
        %v1054 = vld [vmem:[%s143 + $0x1b48] sm:$0xff]
        %v1055 = vld [vmem:[%s143 + $0x1b50] sm:$0xff]
        %v1056 = vld [vmem:[%s143 + $0x1b58] sm:$0xff]
        %v1057 = vld [vmem:[%s143 + $0x1b60] sm:$0xff]
        %v1058 = vld [vmem:[%s143 + $0x1b68] sm:$0xff]
        %v1059 = vld [vmem:[%s143 + $0x1b70] sm:$0xff]
        %v1060 = vld [vmem:[%s143 + $0x1b78] sm:$0xff]
        %v1061 = vld [vmem:[%s143 + $0x1b80] sm:$0xff]
        %v1062 = vld [vmem:[%s143 + $0x1b88] sm:$0xff]
        %v1063 = vld [vmem:[%s143 + $0x1b90] sm:$0xff]
        %v1064 = vld [vmem:[%s143 + $0x1b98] sm:$0xff]
        %v1065 = vld [vmem:[%s143 + $0x1ba0] sm:$0xff]
        %v1066 = vld [vmem:[%s143 + $0x1ba8] sm:$0xff]
        %v1067 = vld [vmem:[%s143 + $0x1bb0] sm:$0xff]
        %v1068 = vld [vmem:[%s143 + $0x1bb8] sm:$0xff]
        %v1069 = vld [vmem:[%s143 + $0x1bc0] sm:$0xff]
        %v1070 = vld [vmem:[%s143 + $0x1bc8] sm:$0xff]
        %v1071 = vld [vmem:[%s143 + $0x1bd0] sm:$0xff]
        %v1072 = vld [vmem:[%s143 + $0x1bd8] sm:$0xff]
        %v1073 = vld [vmem:[%s143 + $0x1be0] sm:$0xff]
        %v1074 = vld [vmem:[%s143 + $0x1be8] sm:$0xff]
        %v1075 = vld [vmem:[%s143 + $0x1bf0] sm:$0xff]
        %v1076 = vld [vmem:[%s143 + $0x1bf8] sm:$0xff]
        %v1077 = vld [vmem:[%s143 + $0x1c00] sm:$0xff]
        %v1078 = vld [vmem:[%s143 + $0x1c08] sm:$0xff]
        %v1079 = vld [vmem:[%s143 + $0x1c10] sm:$0xff]
        %v1080 = vld [vmem:[%s143 + $0x1c18] sm:$0xff]
        %v1081 = vld [vmem:[%s143 + $0x1c20] sm:$0xff]
        %v1082 = vld [vmem:[%s143 + $0x1c28] sm:$0xff]
        %v1083 = vld [vmem:[%s143 + $0x1c30] sm:$0xff]
        %v1084 = vld [vmem:[%s143 + $0x1c38] sm:$0xff]
        %v1085 = vld [vmem:[%s143 + $0x1c40] sm:$0xff]
        %v1086 = vld [vmem:[%s143 + $0x1c48] sm:$0xff]
        %v1087 = vld [vmem:[%s143 + $0x1c50] sm:$0xff]
        %v1088 = vld [vmem:[%s143 + $0x1c58] sm:$0xff]
        %v1089 = vld [vmem:[%s143 + $0x1c60] sm:$0xff]
        %v1090 = vld [vmem:[%s143 + $0x1c68] sm:$0xff]
        %v1091 = vld [vmem:[%s143 + $0x1c70] sm:$0xff]
        %v1092 = vld [vmem:[%s143 + $0x1c78] sm:$0xff]
        %v1093 = vld [vmem:[%s143 + $0x1c80] sm:$0xff]
        %v1094 = vld [vmem:[%s143 + $0x1c88] sm:$0xff]
        %v1095 = vld [vmem:[%s143 + $0x1c90] sm:$0xff]
        %v1096 = vld [vmem:[%s143 + $0x1c98] sm:$0xff]
        %v1097 = vld [vmem:[%s143 + $0x1ca0] sm:$0xff]
        %v1098 = vld [vmem:[%s143 + $0x1ca8] sm:$0xff]
        %v1099 = vld [vmem:[%s143 + $0x1cb0] sm:$0xff]
        %v1100 = vld [vmem:[%s143 + $0x1cb8] sm:$0xff]
        %v1101 = vld [vmem:[%s143 + $0x1cc0] sm:$0xff]
        %v1102 = vld [vmem:[%s143 + $0x1cc8] sm:$0xff]
        %v1103 = vld [vmem:[%s143 + $0x1cd0] sm:$0xff]
        %v1104 = vld [vmem:[%s143 + $0x1cd8] sm:$0xff]
        %v1105 = vld [vmem:[%s143 + $0x1ce0] sm:$0xff]
        %v1106 = vld [vmem:[%s143 + $0x1ce8] sm:$0xff]
        %v1107 = vld [vmem:[%s143 + $0x1cf0] sm:$0xff]
        %v1108 = vld [vmem:[%s143 + $0x1cf8] sm:$0xff]
        %v1109 = vld [vmem:[%s143 + $0x1d00] sm:$0xff]
        %v1110 = vld [vmem:[%s143 + $0x1d08] sm:$0xff]
        %v1111 = vld [vmem:[%s143 + $0x1d10] sm:$0xff]
        %v1112 = vld [vmem:[%s143 + $0x1d18] sm:$0xff]
        %v1113 = vld [vmem:[%s143 + $0x1d20] sm:$0xff]
        %v1114 = vld [vmem:[%s143 + $0x1d28] sm:$0xff]
        %v1115 = vld [vmem:[%s143 + $0x1d30] sm:$0xff]
        %v1116 = vld [vmem:[%s143 + $0x1d38] sm:$0xff]
        %v1117 = vld [vmem:[%s143 + $0x1d40] sm:$0xff]
        %v1118 = vld [vmem:[%s143 + $0x1d48] sm:$0xff]
        %v1119 = vld [vmem:[%s143 + $0x1d50] sm:$0xff]
        %v1120 = vld [vmem:[%s143 + $0x1d58] sm:$0xff]
        %v1121 = vld [vmem:[%s143 + $0x1d60] sm:$0xff]
        %v1122 = vld [vmem:[%s143 + $0x1d68] sm:$0xff]
        %v1123 = vld [vmem:[%s143 + $0x1d70] sm:$0xff]
        %v1124 = vld [vmem:[%s143 + $0x1d78] sm:$0xff]
        %v1125 = vld [vmem:[%s143 + $0x1d80] sm:$0xff]
        %v1126 = vld [vmem:[%s143 + $0x1d88] sm:$0xff]
        %v1127 = vld [vmem:[%s143 + $0x1d90] sm:$0xff]
        %v1128 = vld [vmem:[%s143 + $0x1d98] sm:$0xff]
        %v1129 = vld [vmem:[%s143 + $0x1da0] sm:$0xff]
        %v1130 = vld [vmem:[%s143 + $0x1da8] sm:$0xff]
        %v1131 = vld [vmem:[%s143 + $0x1db0] sm:$0xff]
        %v1132 = vld [vmem:[%s143 + $0x1db8] sm:$0xff]
        %v1133 = vld [vmem:[%s143 + $0x1dc0] sm:$0xff]
        %v1134 = vld [vmem:[%s143 + $0x1dc8] sm:$0xff]
        %v1135 = vld [vmem:[%s143 + $0x1dd0] sm:$0xff]
        %v1136 = vld [vmem:[%s143 + $0x1dd8] sm:$0xff]
        %v1137 = vld [vmem:[%s143 + $0x1de0] sm:$0xff]
        %v1138 = vld [vmem:[%s143 + $0x1de8] sm:$0xff]
        %v1139 = vld [vmem:[%s143 + $0x1df0] sm:$0xff]
        %v1140 = vld [vmem:[%s143 + $0x1df8] sm:$0xff]
        %v1141 = vld [vmem:[%s143 + $0x1e00] sm:$0xff]
        %v1142 = vld [vmem:[%s143 + $0x1e08] sm:$0xff]
        %v1143 = vld [vmem:[%s143 + $0x1e10] sm:$0xff]
        %v1144 = vld [vmem:[%s143 + $0x1e18] sm:$0xff]
        %v1145 = vld [vmem:[%s143 + $0x1e20] sm:$0xff]
        %v1146 = vld [vmem:[%s143 + $0x1e28] sm:$0xff]
        %v1147 = vld [vmem:[%s143 + $0x1e30] sm:$0xff]
        %v1148 = vld [vmem:[%s143 + $0x1e38] sm:$0xff]
        %v1149 = vld [vmem:[%s143 + $0x1e40] sm:$0xff]
        %v1150 = vld [vmem:[%s143 + $0x1e48] sm:$0xff]
        %v1151 = vld [vmem:[%s143 + $0x1e50] sm:$0xff]
        %v1152 = vld [vmem:[%s143 + $0x1e58] sm:$0xff]
        %v1153 = vld [vmem:[%s143 + $0x1e60] sm:$0xff]
        %v1154 = vld [vmem:[%s143 + $0x1e68] sm:$0xff]
        %v1155 = vld [vmem:[%s143 + $0x1e70] sm:$0xff]
        %v1156 = vld [vmem:[%s143 + $0x1e78] sm:$0xff]
        %v1157 = vld [vmem:[%s143 + $0x1e80] sm:$0xff]
        %v1158 = vld [vmem:[%s143 + $0x1e88] sm:$0xff]
        %v1159 = vld [vmem:[%s143 + $0x1e90] sm:$0xff]
        %v1160 = vld [vmem:[%s143 + $0x1e98] sm:$0xff]
        %v1161 = vld [vmem:[%s143 + $0x1ea0] sm:$0xff]
        %v1162 = vld [vmem:[%s143 + $0x1ea8] sm:$0xff]
        %v1163 = vld [vmem:[%s143 + $0x1eb0] sm:$0xff]
        %v1164 = vld [vmem:[%s143 + $0x1eb8] sm:$0xff]
        %v1165 = vld [vmem:[%s143 + $0x1ec0] sm:$0xff]
        %v1166 = vld [vmem:[%s143 + $0x1ec8] sm:$0xff]
        %v1167 = vld [vmem:[%s143 + $0x1ed0] sm:$0xff]
        %v1168 = vld [vmem:[%s143 + $0x1ed8] sm:$0xff]
        %v1169 = vld [vmem:[%s143 + $0x1ee0] sm:$0xff]
        %v1170 = vld [vmem:[%s143 + $0x1ee8] sm:$0xff]
        %v1171 = vld [vmem:[%s143 + $0x1ef0] sm:$0xff]
        %v1172 = vld [vmem:[%s143 + $0x1ef8] sm:$0xff]
        %v1173 = vld [vmem:[%s143 + $0x1f00] sm:$0xff]
        %v1174 = vld [vmem:[%s143 + $0x1f08] sm:$0xff]
        %v1175 = vld [vmem:[%s143 + $0x1f10] sm:$0xff]
        %v1176 = vld [vmem:[%s143 + $0x1f18] sm:$0xff]
        %v1177 = vld [vmem:[%s143 + $0x1f20] sm:$0xff]
        %v1178 = vld [vmem:[%s143 + $0x1f28] sm:$0xff]
        %v1179 = vld [vmem:[%s143 + $0x1f30] sm:$0xff]
        %v1180 = vld [vmem:[%s143 + $0x1f38] sm:$0xff]
        %v1181 = vld [vmem:[%s143 + $0x1f40] sm:$0xff]
        %v1182 = vld [vmem:[%s143 + $0x1f48] sm:$0xff]
        %v1183 = vld [vmem:[%s143 + $0x1f50] sm:$0xff]
        %v1184 = vld [vmem:[%s143 + $0x1f58] sm:$0xff]
        %v1185 = vld [vmem:[%s143 + $0x1f60] sm:$0xff]
        %v1186 = vld [vmem:[%s143 + $0x1f68] sm:$0xff]
        %v1187 = vld [vmem:[%s143 + $0x1f70] sm:$0xff]
        %v1188 = vld [vmem:[%s143 + $0x1f78] sm:$0xff]
        %v1189 = vld [vmem:[%s143 + $0x1f80] sm:$0xff]
        %v1190 = vld [vmem:[%s143 + $0x1f88] sm:$0xff]
        %v1191 = vld [vmem:[%s143 + $0x1f90] sm:$0xff]
        %v1192 = vld [vmem:[%s143 + $0x1f98] sm:$0xff]
        %v1193 = vld [vmem:[%s143 + $0x1fa0] sm:$0xff]
        %v1194 = vld [vmem:[%s143 + $0x1fa8] sm:$0xff]
        %v1195 = vld [vmem:[%s143 + $0x1fb0] sm:$0xff]
        %v1196 = vld [vmem:[%s143 + $0x1fb8] sm:$0xff]
        %v1197 = vld [vmem:[%s143 + $0x1fc0] sm:$0xff]
        %v1198 = vld [vmem:[%s143 + $0x1fc8] sm:$0xff]
        %v1199 = vld [vmem:[%s143 + $0x1fd0] sm:$0xff]
        %v1200 = vld [vmem:[%s143 + $0x1fd8] sm:$0xff]
        %v1201 = vld [vmem:[%s143 + $0x1fe0] sm:$0xff]
        %v1202 = vld [vmem:[%s143 + $0x1fe8] sm:$0xff]
        %v1203 = vld [vmem:[%s143 + $0x1ff0] sm:$0xff]
        %v1204 = vld [vmem:[%s143 + $0x1ff8] sm:$0xff]
        %1205 = vxpose.xlu0.b32.start [1/16] %v181, 128
        %1206 = vxpose.xlu0.b32.cont [2/16] %v189, 128
        %1207 = vxpose.xlu0.b32.cont [3/16] %v197, 128
        %1208 = vxpose.xlu0.b32.cont [4/16] %v205, 128
        %1209 = vxpose.xlu0.b32.cont [5/16] %v213, 128
        %1210 = vxpose.xlu0.b32.cont [6/16] %v221, 128
        %1211 = vxpose.xlu0.b32.cont [7/16] %v229, 128
        %1212 = vxpose.xlu0.b32.cont [8/16] %v237, 128
        %1213 = vxpose.xlu0.b32.cont [9/16] %v245, 128
        %1214 = vxpose.xlu0.b32.cont [10/16] %v253, 128
        %1215 = vxpose.xlu0.b32.cont [11/16] %v261, 128
        %1216 = vxpose.xlu0.b32.cont [12/16] %v269, 128
        %1217 = vxpose.xlu0.b32.cont [13/16] %v277, 128
        %1218 = vxpose.xlu0.b32.cont [14/16] %v285, 128
        %1219 = vxpose.xlu0.b32.cont [15/16] %v293, 128
        %1220 = vxpose.xlu0.b32.end [16/16] %v301, 128
        %v1221 = vpop.trf.xlu0
        %v1222 = vpop.trf.xlu0
        %v1223 = vpop.trf.xlu0
        %v1224 = vpop.trf.xlu0
        %v1225 = vpop.trf.xlu0
        %v1226 = vpop.trf.xlu0
        %v1227 = vpop.trf.xlu0
        %v1228 = vpop.trf.xlu0
        %v1229 = vpop.trf.xlu0
        %v1230 = vpop.trf.xlu0
        %v1231 = vpop.trf.xlu0
        %v1232 = vpop.trf.xlu0
        %v1233 = vpop.trf.xlu0
        %v1234 = vpop.trf.xlu0
        %v1235 = vpop.trf.xlu0
        %v1236 = vpop.trf.xlu0
        %1237 = vxpose.xlu0.b32.start [1/16] %v182, 128
        %1238 = vxpose.xlu0.b32.cont [2/16] %v190, 128
        %1239 = vxpose.xlu0.b32.cont [3/16] %v198, 128
        %1240 = vxpose.xlu0.b32.cont [4/16] %v206, 128
        %1241 = vxpose.xlu0.b32.cont [5/16] %v214, 128
        %1242 = vxpose.xlu0.b32.cont [6/16] %v222, 128
        %1243 = vxpose.xlu0.b32.cont [7/16] %v230, 128
        %1244 = vxpose.xlu0.b32.cont [8/16] %v238, 128
        %1245 = vxpose.xlu0.b32.cont [9/16] %v246, 128
        %1246 = vxpose.xlu0.b32.cont [10/16] %v254, 128
        %1247 = vxpose.xlu0.b32.cont [11/16] %v262, 128
        %1248 = vxpose.xlu0.b32.cont [12/16] %v270, 128
        %1249 = vxpose.xlu0.b32.cont [13/16] %v278, 128
        %1250 = vxpose.xlu0.b32.cont [14/16] %v286, 128
        %1251 = vxpose.xlu0.b32.cont [15/16] %v294, 128
        %1252 = vxpose.xlu0.b32.end [16/16] %v302, 128
        %v1253 = vpop.trf.xlu0
        %v1254 = vpop.trf.xlu0
        %v1255 = vpop.trf.xlu0
        %v1256 = vpop.trf.xlu0
        %v1257 = vpop.trf.xlu0
        %v1258 = vpop.trf.xlu0
        %v1259 = vpop.trf.xlu0
        %v1260 = vpop.trf.xlu0
        %v1261 = vpop.trf.xlu0
        %v1262 = vpop.trf.xlu0
        %v1263 = vpop.trf.xlu0
        %v1264 = vpop.trf.xlu0
        %v1265 = vpop.trf.xlu0
        %v1266 = vpop.trf.xlu0
        %v1267 = vpop.trf.xlu0
        %v1268 = vpop.trf.xlu0
        %1269 = vxpose.xlu0.b32.start [1/16] %v183, 128
        %1270 = vxpose.xlu0.b32.cont [2/16] %v191, 128
        %1271 = vxpose.xlu0.b32.cont [3/16] %v199, 128
        %1272 = vxpose.xlu0.b32.cont [4/16] %v207, 128
        %1273 = vxpose.xlu0.b32.cont [5/16] %v215, 128
        %1274 = vxpose.xlu0.b32.cont [6/16] %v223, 128
        %1275 = vxpose.xlu0.b32.cont [7/16] %v231, 128
        %1276 = vxpose.xlu0.b32.cont [8/16] %v239, 128
        %1277 = vxpose.xlu0.b32.cont [9/16] %v247, 128
        %1278 = vxpose.xlu0.b32.cont [10/16] %v255, 128
        %1279 = vxpose.xlu0.b32.cont [11/16] %v263, 128
        %1280 = vxpose.xlu0.b32.cont [12/16] %v271, 128
        %1281 = vxpose.xlu0.b32.cont [13/16] %v279, 128
        %1282 = vxpose.xlu0.b32.cont [14/16] %v287, 128
        %1283 = vxpose.xlu0.b32.cont [15/16] %v295, 128
        %1284 = vxpose.xlu0.b32.end [16/16] %v303, 128
        %v1285 = vpop.trf.xlu0
        %v1286 = vpop.trf.xlu0
        %v1287 = vpop.trf.xlu0
        %v1288 = vpop.trf.xlu0
        %v1289 = vpop.trf.xlu0
        %v1290 = vpop.trf.xlu0
        %v1291 = vpop.trf.xlu0
        %v1292 = vpop.trf.xlu0
        %v1293 = vpop.trf.xlu0
        %v1294 = vpop.trf.xlu0
        %v1295 = vpop.trf.xlu0
        %v1296 = vpop.trf.xlu0
        %v1297 = vpop.trf.xlu0
        %v1298 = vpop.trf.xlu0
        %v1299 = vpop.trf.xlu0
        %v1300 = vpop.trf.xlu0
        %1301 = vxpose.xlu0.b32.start [1/16] %v184, 128
        %1302 = vxpose.xlu0.b32.cont [2/16] %v192, 128
        %1303 = vxpose.xlu0.b32.cont [3/16] %v200, 128
        %1304 = vxpose.xlu0.b32.cont [4/16] %v208, 128
        %1305 = vxpose.xlu0.b32.cont [5/16] %v216, 128
        %1306 = vxpose.xlu0.b32.cont [6/16] %v224, 128
        %1307 = vxpose.xlu0.b32.cont [7/16] %v232, 128
        %1308 = vxpose.xlu0.b32.cont [8/16] %v240, 128
        %1309 = vxpose.xlu0.b32.cont [9/16] %v248, 128
        %1310 = vxpose.xlu0.b32.cont [10/16] %v256, 128
        %1311 = vxpose.xlu0.b32.cont [11/16] %v264, 128
        %1312 = vxpose.xlu0.b32.cont [12/16] %v272, 128
        %1313 = vxpose.xlu0.b32.cont [13/16] %v280, 128
        %1314 = vxpose.xlu0.b32.cont [14/16] %v288, 128
        %1315 = vxpose.xlu0.b32.cont [15/16] %v296, 128
        %1316 = vxpose.xlu0.b32.end [16/16] %v304, 128
        %v1317 = vpop.trf.xlu0
        %v1318 = vpop.trf.xlu0
        %v1319 = vpop.trf.xlu0
        %v1320 = vpop.trf.xlu0
        %v1321 = vpop.trf.xlu0
        %v1322 = vpop.trf.xlu0
        %v1323 = vpop.trf.xlu0
        %v1324 = vpop.trf.xlu0
        %v1325 = vpop.trf.xlu0
        %v1326 = vpop.trf.xlu0
        %v1327 = vpop.trf.xlu0
        %v1328 = vpop.trf.xlu0
        %v1329 = vpop.trf.xlu0
        %v1330 = vpop.trf.xlu0
        %v1331 = vpop.trf.xlu0
        %v1332 = vpop.trf.xlu0
        %1333 = vxpose.xlu0.b32.start [1/16] %v185, 128
        %1334 = vxpose.xlu0.b32.cont [2/16] %v193, 128
        %1335 = vxpose.xlu0.b32.cont [3/16] %v201, 128
        %1336 = vxpose.xlu0.b32.cont [4/16] %v209, 128
        %1337 = vxpose.xlu0.b32.cont [5/16] %v217, 128
        %1338 = vxpose.xlu0.b32.cont [6/16] %v225, 128
        %1339 = vxpose.xlu0.b32.cont [7/16] %v233, 128
        %1340 = vxpose.xlu0.b32.cont [8/16] %v241, 128
        %1341 = vxpose.xlu0.b32.cont [9/16] %v249, 128
        %1342 = vxpose.xlu0.b32.cont [10/16] %v257, 128
        %1343 = vxpose.xlu0.b32.cont [11/16] %v265, 128
        %1344 = vxpose.xlu0.b32.cont [12/16] %v273, 128
        %1345 = vxpose.xlu0.b32.cont [13/16] %v281, 128
        %1346 = vxpose.xlu0.b32.cont [14/16] %v289, 128
        %1347 = vxpose.xlu0.b32.cont [15/16] %v297, 128
        %1348 = vxpose.xlu0.b32.end [16/16] %v305, 128
        %v1349 = vpop.trf.xlu0
        %v1350 = vpop.trf.xlu0
        %v1351 = vpop.trf.xlu0
        %v1352 = vpop.trf.xlu0
        %v1353 = vpop.trf.xlu0
        %v1354 = vpop.trf.xlu0
        %v1355 = vpop.trf.xlu0
        %v1356 = vpop.trf.xlu0
        %v1357 = vpop.trf.xlu0
        %v1358 = vpop.trf.xlu0
        %v1359 = vpop.trf.xlu0
        %v1360 = vpop.trf.xlu0
        %v1361 = vpop.trf.xlu0
        %v1362 = vpop.trf.xlu0
        %v1363 = vpop.trf.xlu0
        %v1364 = vpop.trf.xlu0
        %1365 = vxpose.xlu0.b32.start [1/16] %v186, 128
        %1366 = vxpose.xlu0.b32.cont [2/16] %v194, 128
        %1367 = vxpose.xlu0.b32.cont [3/16] %v202, 128
        %1368 = vxpose.xlu0.b32.cont [4/16] %v210, 128
        %1369 = vxpose.xlu0.b32.cont [5/16] %v218, 128
        %1370 = vxpose.xlu0.b32.cont [6/16] %v226, 128
        %1371 = vxpose.xlu0.b32.cont [7/16] %v234, 128
        %1372 = vxpose.xlu0.b32.cont [8/16] %v242, 128
        %1373 = vxpose.xlu0.b32.cont [9/16] %v250, 128
        %1374 = vxpose.xlu0.b32.cont [10/16] %v258, 128
        %1375 = vxpose.xlu0.b32.cont [11/16] %v266, 128
        %1376 = vxpose.xlu0.b32.cont [12/16] %v274, 128
        %1377 = vxpose.xlu0.b32.cont [13/16] %v282, 128
        %1378 = vxpose.xlu0.b32.cont [14/16] %v290, 128
        %1379 = vxpose.xlu0.b32.cont [15/16] %v298, 128
        %1380 = vxpose.xlu0.b32.end [16/16] %v306, 128
        %v1381 = vpop.trf.xlu0
        %v1382 = vpop.trf.xlu0
        %v1383 = vpop.trf.xlu0
        %v1384 = vpop.trf.xlu0
        %v1385 = vpop.trf.xlu0
        %v1386 = vpop.trf.xlu0
        %v1387 = vpop.trf.xlu0
        %v1388 = vpop.trf.xlu0
        %v1389 = vpop.trf.xlu0
        %v1390 = vpop.trf.xlu0
        %v1391 = vpop.trf.xlu0
        %v1392 = vpop.trf.xlu0
        %v1393 = vpop.trf.xlu0
        %v1394 = vpop.trf.xlu0
        %v1395 = vpop.trf.xlu0
        %v1396 = vpop.trf.xlu0
        %1397 = vxpose.xlu0.b32.start [1/16] %v187, 128
        %1398 = vxpose.xlu0.b32.cont [2/16] %v195, 128
        %1399 = vxpose.xlu0.b32.cont [3/16] %v203, 128
        %1400 = vxpose.xlu0.b32.cont [4/16] %v211, 128
        %1401 = vxpose.xlu0.b32.cont [5/16] %v219, 128
        %1402 = vxpose.xlu0.b32.cont [6/16] %v227, 128
        %1403 = vxpose.xlu0.b32.cont [7/16] %v235, 128
        %1404 = vxpose.xlu0.b32.cont [8/16] %v243, 128
        %1405 = vxpose.xlu0.b32.cont [9/16] %v251, 128
        %1406 = vxpose.xlu0.b32.cont [10/16] %v259, 128
        %1407 = vxpose.xlu0.b32.cont [11/16] %v267, 128
        %1408 = vxpose.xlu0.b32.cont [12/16] %v275, 128
        %1409 = vxpose.xlu0.b32.cont [13/16] %v283, 128
        %1410 = vxpose.xlu0.b32.cont [14/16] %v291, 128
        %1411 = vxpose.xlu0.b32.cont [15/16] %v299, 128
        %1412 = vxpose.xlu0.b32.end [16/16] %v307, 128
        %v1413 = vpop.trf.xlu0
        %v1414 = vpop.trf.xlu0
        %v1415 = vpop.trf.xlu0
        %v1416 = vpop.trf.xlu0
        %v1417 = vpop.trf.xlu0
        %v1418 = vpop.trf.xlu0
        %v1419 = vpop.trf.xlu0
        %v1420 = vpop.trf.xlu0
        %v1421 = vpop.trf.xlu0
        %v1422 = vpop.trf.xlu0
        %v1423 = vpop.trf.xlu0
        %v1424 = vpop.trf.xlu0
        %v1425 = vpop.trf.xlu0
        %v1426 = vpop.trf.xlu0
        %v1427 = vpop.trf.xlu0
        %v1428 = vpop.trf.xlu0
        %1429 = vxpose.xlu0.b32.start [1/16] %v188, 128
        %1430 = vxpose.xlu0.b32.cont [2/16] %v196, 128
        %1431 = vxpose.xlu0.b32.cont [3/16] %v204, 128
        %1432 = vxpose.xlu0.b32.cont [4/16] %v212, 128
        %1433 = vxpose.xlu0.b32.cont [5/16] %v220, 128
        %1434 = vxpose.xlu0.b32.cont [6/16] %v228, 128
        %1435 = vxpose.xlu0.b32.cont [7/16] %v236, 128
        %1436 = vxpose.xlu0.b32.cont [8/16] %v244, 128
        %1437 = vxpose.xlu0.b32.cont [9/16] %v252, 128
        %1438 = vxpose.xlu0.b32.cont [10/16] %v260, 128
        %1439 = vxpose.xlu0.b32.cont [11/16] %v268, 128
        %1440 = vxpose.xlu0.b32.cont [12/16] %v276, 128
        %1441 = vxpose.xlu0.b32.cont [13/16] %v284, 128
        %1442 = vxpose.xlu0.b32.cont [14/16] %v292, 128
        %1443 = vxpose.xlu0.b32.cont [15/16] %v300, 128
        %1444 = vxpose.xlu0.b32.end [16/16] %v308, 128
        %v1445 = vpop.trf.xlu0
        %v1446 = vpop.trf.xlu0
        %v1447 = vpop.trf.xlu0
        %v1448 = vpop.trf.xlu0
        %v1449 = vpop.trf.xlu0
        %v1450 = vpop.trf.xlu0
        %v1451 = vpop.trf.xlu0
        %v1452 = vpop.trf.xlu0
        %v1453 = vpop.trf.xlu0
        %v1454 = vpop.trf.xlu0
        %v1455 = vpop.trf.xlu0
        %v1456 = vpop.trf.xlu0
        %v1457 = vpop.trf.xlu0
        %v1458 = vpop.trf.xlu0
        %v1459 = vpop.trf.xlu0
        %v1460 = vpop.trf.xlu0
        %1461 = vxpose.xlu0.b32.start [1/16] %v309, 128
        %1462 = vxpose.xlu0.b32.cont [2/16] %v317, 128
        %1463 = vxpose.xlu0.b32.cont [3/16] %v325, 128
        %1464 = vxpose.xlu0.b32.cont [4/16] %v333, 128
        %1465 = vxpose.xlu0.b32.cont [5/16] %v341, 128
        %1466 = vxpose.xlu0.b32.cont [6/16] %v349, 128
        %1467 = vxpose.xlu0.b32.cont [7/16] %v357, 128
        %1468 = vxpose.xlu0.b32.cont [8/16] %v365, 128
        %1469 = vxpose.xlu0.b32.cont [9/16] %v373, 128
        %1470 = vxpose.xlu0.b32.cont [10/16] %v381, 128
        %1471 = vxpose.xlu0.b32.cont [11/16] %v389, 128
        %1472 = vxpose.xlu0.b32.cont [12/16] %v397, 128
        %1473 = vxpose.xlu0.b32.cont [13/16] %v405, 128
        %1474 = vxpose.xlu0.b32.cont [14/16] %v413, 128
        %1475 = vxpose.xlu0.b32.cont [15/16] %v421, 128
        %1476 = vxpose.xlu0.b32.end [16/16] %v429, 128
        %v1477 = vpop.trf.xlu0
        %v1478 = vpop.trf.xlu0
        %v1479 = vpop.trf.xlu0
        %v1480 = vpop.trf.xlu0
        %v1481 = vpop.trf.xlu0
        %v1482 = vpop.trf.xlu0
        %v1483 = vpop.trf.xlu0
        %v1484 = vpop.trf.xlu0
        %v1485 = vpop.trf.xlu0
        %v1486 = vpop.trf.xlu0
        %v1487 = vpop.trf.xlu0
        %v1488 = vpop.trf.xlu0
        %v1489 = vpop.trf.xlu0
        %v1490 = vpop.trf.xlu0
        %v1491 = vpop.trf.xlu0
        %v1492 = vpop.trf.xlu0
        %1493 = vxpose.xlu0.b32.start [1/16] %v310, 128
        %1494 = vxpose.xlu0.b32.cont [2/16] %v318, 128
        %1495 = vxpose.xlu0.b32.cont [3/16] %v326, 128
        %1496 = vxpose.xlu0.b32.cont [4/16] %v334, 128
        %1497 = vxpose.xlu0.b32.cont [5/16] %v342, 128
        %1498 = vxpose.xlu0.b32.cont [6/16] %v350, 128
        %1499 = vxpose.xlu0.b32.cont [7/16] %v358, 128
        %1500 = vxpose.xlu0.b32.cont [8/16] %v366, 128
        %1501 = vxpose.xlu0.b32.cont [9/16] %v374, 128
        %1502 = vxpose.xlu0.b32.cont [10/16] %v382, 128
        %1503 = vxpose.xlu0.b32.cont [11/16] %v390, 128
        %1504 = vxpose.xlu0.b32.cont [12/16] %v398, 128
        %1505 = vxpose.xlu0.b32.cont [13/16] %v406, 128
        %1506 = vxpose.xlu0.b32.cont [14/16] %v414, 128
        %1507 = vxpose.xlu0.b32.cont [15/16] %v422, 128
        %1508 = vxpose.xlu0.b32.end [16/16] %v430, 128
        %v1509 = vpop.trf.xlu0
        %v1510 = vpop.trf.xlu0
        %v1511 = vpop.trf.xlu0
        %v1512 = vpop.trf.xlu0
        %v1513 = vpop.trf.xlu0
        %v1514 = vpop.trf.xlu0
        %v1515 = vpop.trf.xlu0
        %v1516 = vpop.trf.xlu0
        %v1517 = vpop.trf.xlu0
        %v1518 = vpop.trf.xlu0
        %v1519 = vpop.trf.xlu0
        %v1520 = vpop.trf.xlu0
        %v1521 = vpop.trf.xlu0
        %v1522 = vpop.trf.xlu0
        %v1523 = vpop.trf.xlu0
        %v1524 = vpop.trf.xlu0
        %1525 = vxpose.xlu0.b32.start [1/16] %v311, 128
        %1526 = vxpose.xlu0.b32.cont [2/16] %v319, 128
        %1527 = vxpose.xlu0.b32.cont [3/16] %v327, 128
        %1528 = vxpose.xlu0.b32.cont [4/16] %v335, 128
        %1529 = vxpose.xlu0.b32.cont [5/16] %v343, 128
        %1530 = vxpose.xlu0.b32.cont [6/16] %v351, 128
        %1531 = vxpose.xlu0.b32.cont [7/16] %v359, 128
        %1532 = vxpose.xlu0.b32.cont [8/16] %v367, 128
        %1533 = vxpose.xlu0.b32.cont [9/16] %v375, 128
        %1534 = vxpose.xlu0.b32.cont [10/16] %v383, 128
        %1535 = vxpose.xlu0.b32.cont [11/16] %v391, 128
        %1536 = vxpose.xlu0.b32.cont [12/16] %v399, 128
        %1537 = vxpose.xlu0.b32.cont [13/16] %v407, 128
        %1538 = vxpose.xlu0.b32.cont [14/16] %v415, 128
        %1539 = vxpose.xlu0.b32.cont [15/16] %v423, 128
        %1540 = vxpose.xlu0.b32.end [16/16] %v431, 128
        %v1541 = vpop.trf.xlu0
        %v1542 = vpop.trf.xlu0
        %v1543 = vpop.trf.xlu0
        %v1544 = vpop.trf.xlu0
        %v1545 = vpop.trf.xlu0
        %v1546 = vpop.trf.xlu0
        %v1547 = vpop.trf.xlu0
        %v1548 = vpop.trf.xlu0
        %v1549 = vpop.trf.xlu0
        %v1550 = vpop.trf.xlu0
        %v1551 = vpop.trf.xlu0
        %v1552 = vpop.trf.xlu0
        %v1553 = vpop.trf.xlu0
        %v1554 = vpop.trf.xlu0
        %v1555 = vpop.trf.xlu0
        %v1556 = vpop.trf.xlu0
        %1557 = vxpose.xlu0.b32.start [1/16] %v312, 128
        %1558 = vxpose.xlu0.b32.cont [2/16] %v320, 128
        %1559 = vxpose.xlu0.b32.cont [3/16] %v328, 128
        %1560 = vxpose.xlu0.b32.cont [4/16] %v336, 128
        %1561 = vxpose.xlu0.b32.cont [5/16] %v344, 128
        %1562 = vxpose.xlu0.b32.cont [6/16] %v352, 128
        %1563 = vxpose.xlu0.b32.cont [7/16] %v360, 128
        %1564 = vxpose.xlu0.b32.cont [8/16] %v368, 128
        %1565 = vxpose.xlu0.b32.cont [9/16] %v376, 128
        %1566 = vxpose.xlu0.b32.cont [10/16] %v384, 128
        %1567 = vxpose.xlu0.b32.cont [11/16] %v392, 128
        %1568 = vxpose.xlu0.b32.cont [12/16] %v400, 128
        %1569 = vxpose.xlu0.b32.cont [13/16] %v408, 128
        %1570 = vxpose.xlu0.b32.cont [14/16] %v416, 128
        %1571 = vxpose.xlu0.b32.cont [15/16] %v424, 128
        %1572 = vxpose.xlu0.b32.end [16/16] %v432, 128
        %v1573 = vpop.trf.xlu0
        %v1574 = vpop.trf.xlu0
        %v1575 = vpop.trf.xlu0
        %v1576 = vpop.trf.xlu0
        %v1577 = vpop.trf.xlu0
        %v1578 = vpop.trf.xlu0
        %v1579 = vpop.trf.xlu0
        %v1580 = vpop.trf.xlu0
        %v1581 = vpop.trf.xlu0
        %v1582 = vpop.trf.xlu0
        %v1583 = vpop.trf.xlu0
        %v1584 = vpop.trf.xlu0
        %v1585 = vpop.trf.xlu0
        %v1586 = vpop.trf.xlu0
        %v1587 = vpop.trf.xlu0
        %v1588 = vpop.trf.xlu0
        %1589 = vxpose.xlu0.b32.start [1/16] %v313, 128
        %1590 = vxpose.xlu0.b32.cont [2/16] %v321, 128
        %1591 = vxpose.xlu0.b32.cont [3/16] %v329, 128
        %1592 = vxpose.xlu0.b32.cont [4/16] %v337, 128
        %1593 = vxpose.xlu0.b32.cont [5/16] %v345, 128
        %1594 = vxpose.xlu0.b32.cont [6/16] %v353, 128
        %1595 = vxpose.xlu0.b32.cont [7/16] %v361, 128
        %1596 = vxpose.xlu0.b32.cont [8/16] %v369, 128
        %1597 = vxpose.xlu0.b32.cont [9/16] %v377, 128
        %1598 = vxpose.xlu0.b32.cont [10/16] %v385, 128
        %1599 = vxpose.xlu0.b32.cont [11/16] %v393, 128
        %1600 = vxpose.xlu0.b32.cont [12/16] %v401, 128
        %1601 = vxpose.xlu0.b32.cont [13/16] %v409, 128
        %1602 = vxpose.xlu0.b32.cont [14/16] %v417, 128
        %1603 = vxpose.xlu0.b32.cont [15/16] %v425, 128
        %1604 = vxpose.xlu0.b32.end [16/16] %v433, 128
        %v1605 = vpop.trf.xlu0
        %v1606 = vpop.trf.xlu0
        %v1607 = vpop.trf.xlu0
        %v1608 = vpop.trf.xlu0
        %v1609 = vpop.trf.xlu0
        %v1610 = vpop.trf.xlu0
        %v1611 = vpop.trf.xlu0
        %v1612 = vpop.trf.xlu0
        %v1613 = vpop.trf.xlu0
        %v1614 = vpop.trf.xlu0
        %v1615 = vpop.trf.xlu0
        %v1616 = vpop.trf.xlu0
        %v1617 = vpop.trf.xlu0
        %v1618 = vpop.trf.xlu0
        %v1619 = vpop.trf.xlu0
        %v1620 = vpop.trf.xlu0
        %1621 = vxpose.xlu0.b32.start [1/16] %v314, 128
        %1622 = vxpose.xlu0.b32.cont [2/16] %v322, 128
        %1623 = vxpose.xlu0.b32.cont [3/16] %v330, 128
        %1624 = vxpose.xlu0.b32.cont [4/16] %v338, 128
        %1625 = vxpose.xlu0.b32.cont [5/16] %v346, 128
        %1626 = vxpose.xlu0.b32.cont [6/16] %v354, 128
        %1627 = vxpose.xlu0.b32.cont [7/16] %v362, 128
        %1628 = vxpose.xlu0.b32.cont [8/16] %v370, 128
        %1629 = vxpose.xlu0.b32.cont [9/16] %v378, 128
        %1630 = vxpose.xlu0.b32.cont [10/16] %v386, 128
        %1631 = vxpose.xlu0.b32.cont [11/16] %v394, 128
        %1632 = vxpose.xlu0.b32.cont [12/16] %v402, 128
        %1633 = vxpose.xlu0.b32.cont [13/16] %v410, 128
        %1634 = vxpose.xlu0.b32.cont [14/16] %v418, 128
        %1635 = vxpose.xlu0.b32.cont [15/16] %v426, 128
        %1636 = vxpose.xlu0.b32.end [16/16] %v434, 128
        %v1637 = vpop.trf.xlu0
        %v1638 = vpop.trf.xlu0
        %v1639 = vpop.trf.xlu0
        %v1640 = vpop.trf.xlu0
        %v1641 = vpop.trf.xlu0
        %v1642 = vpop.trf.xlu0
        %v1643 = vpop.trf.xlu0
        %v1644 = vpop.trf.xlu0
        %v1645 = vpop.trf.xlu0
        %v1646 = vpop.trf.xlu0
        %v1647 = vpop.trf.xlu0
        %v1648 = vpop.trf.xlu0
        %v1649 = vpop.trf.xlu0
        %v1650 = vpop.trf.xlu0
        %v1651 = vpop.trf.xlu0
        %v1652 = vpop.trf.xlu0
        %1653 = vxpose.xlu0.b32.start [1/16] %v315, 128
        %1654 = vxpose.xlu0.b32.cont [2/16] %v323, 128
        %1655 = vxpose.xlu0.b32.cont [3/16] %v331, 128
        %1656 = vxpose.xlu0.b32.cont [4/16] %v339, 128
        %1657 = vxpose.xlu0.b32.cont [5/16] %v347, 128
        %1658 = vxpose.xlu0.b32.cont [6/16] %v355, 128
        %1659 = vxpose.xlu0.b32.cont [7/16] %v363, 128
        %1660 = vxpose.xlu0.b32.cont [8/16] %v371, 128
        %1661 = vxpose.xlu0.b32.cont [9/16] %v379, 128
        %1662 = vxpose.xlu0.b32.cont [10/16] %v387, 128
        %1663 = vxpose.xlu0.b32.cont [11/16] %v395, 128
        %1664 = vxpose.xlu0.b32.cont [12/16] %v403, 128
        %1665 = vxpose.xlu0.b32.cont [13/16] %v411, 128
        %1666 = vxpose.xlu0.b32.cont [14/16] %v419, 128
        %1667 = vxpose.xlu0.b32.cont [15/16] %v427, 128
        %1668 = vxpose.xlu0.b32.end [16/16] %v435, 128
        %v1669 = vpop.trf.xlu0
        %v1670 = vpop.trf.xlu0
        %v1671 = vpop.trf.xlu0
        %v1672 = vpop.trf.xlu0
        %v1673 = vpop.trf.xlu0
        %v1674 = vpop.trf.xlu0
        %v1675 = vpop.trf.xlu0
        %v1676 = vpop.trf.xlu0
        %v1677 = vpop.trf.xlu0
        %v1678 = vpop.trf.xlu0
        %v1679 = vpop.trf.xlu0
        %v1680 = vpop.trf.xlu0
        %v1681 = vpop.trf.xlu0
        %v1682 = vpop.trf.xlu0
        %v1683 = vpop.trf.xlu0
        %v1684 = vpop.trf.xlu0
        %1685 = vxpose.xlu0.b32.start [1/16] %v316, 128
        %1686 = vxpose.xlu0.b32.cont [2/16] %v324, 128
        %1687 = vxpose.xlu0.b32.cont [3/16] %v332, 128
        %1688 = vxpose.xlu0.b32.cont [4/16] %v340, 128
        %1689 = vxpose.xlu0.b32.cont [5/16] %v348, 128
        %1690 = vxpose.xlu0.b32.cont [6/16] %v356, 128
        %1691 = vxpose.xlu0.b32.cont [7/16] %v364, 128
        %1692 = vxpose.xlu0.b32.cont [8/16] %v372, 128
        %1693 = vxpose.xlu0.b32.cont [9/16] %v380, 128
        %1694 = vxpose.xlu0.b32.cont [10/16] %v388, 128
        %1695 = vxpose.xlu0.b32.cont [11/16] %v396, 128
        %1696 = vxpose.xlu0.b32.cont [12/16] %v404, 128
        %1697 = vxpose.xlu0.b32.cont [13/16] %v412, 128
        %1698 = vxpose.xlu0.b32.cont [14/16] %v420, 128
        %1699 = vxpose.xlu0.b32.cont [15/16] %v428, 128
        %1700 = vxpose.xlu0.b32.end [16/16] %v436, 128
        %v1701 = vpop.trf.xlu0
        %v1702 = vpop.trf.xlu0
        %v1703 = vpop.trf.xlu0
        %v1704 = vpop.trf.xlu0
        %v1705 = vpop.trf.xlu0
        %v1706 = vpop.trf.xlu0
        %v1707 = vpop.trf.xlu0
        %v1708 = vpop.trf.xlu0
        %v1709 = vpop.trf.xlu0
        %v1710 = vpop.trf.xlu0
        %v1711 = vpop.trf.xlu0
        %v1712 = vpop.trf.xlu0
        %v1713 = vpop.trf.xlu0
        %v1714 = vpop.trf.xlu0
        %v1715 = vpop.trf.xlu0
        %v1716 = vpop.trf.xlu0
        %1717 = vxpose.xlu0.b32.start [1/16] %v437, 128
        %1718 = vxpose.xlu0.b32.cont [2/16] %v445, 128
        %1719 = vxpose.xlu0.b32.cont [3/16] %v453, 128
        %1720 = vxpose.xlu0.b32.cont [4/16] %v461, 128
        %1721 = vxpose.xlu0.b32.cont [5/16] %v469, 128
        %1722 = vxpose.xlu0.b32.cont [6/16] %v477, 128
        %1723 = vxpose.xlu0.b32.cont [7/16] %v485, 128
        %1724 = vxpose.xlu0.b32.cont [8/16] %v493, 128
        %1725 = vxpose.xlu0.b32.cont [9/16] %v501, 128
        %1726 = vxpose.xlu0.b32.cont [10/16] %v509, 128
        %1727 = vxpose.xlu0.b32.cont [11/16] %v517, 128
        %1728 = vxpose.xlu0.b32.cont [12/16] %v525, 128
        %1729 = vxpose.xlu0.b32.cont [13/16] %v533, 128
        %1730 = vxpose.xlu0.b32.cont [14/16] %v541, 128
        %1731 = vxpose.xlu0.b32.cont [15/16] %v549, 128
        %1732 = vxpose.xlu0.b32.end [16/16] %v557, 128
        %v1733 = vpop.trf.xlu0
        %v1734 = vpop.trf.xlu0
        %v1735 = vpop.trf.xlu0
        %v1736 = vpop.trf.xlu0
        %v1737 = vpop.trf.xlu0
        %v1738 = vpop.trf.xlu0
        %v1739 = vpop.trf.xlu0
        %v1740 = vpop.trf.xlu0
        %v1741 = vpop.trf.xlu0
        %v1742 = vpop.trf.xlu0
        %v1743 = vpop.trf.xlu0
        %v1744 = vpop.trf.xlu0
        %v1745 = vpop.trf.xlu0
        %v1746 = vpop.trf.xlu0
        %v1747 = vpop.trf.xlu0
        %v1748 = vpop.trf.xlu0
        %1749 = vxpose.xlu0.b32.start [1/16] %v438, 128
        %1750 = vxpose.xlu0.b32.cont [2/16] %v446, 128
        %1751 = vxpose.xlu0.b32.cont [3/16] %v454, 128
        %1752 = vxpose.xlu0.b32.cont [4/16] %v462, 128
        %1753 = vxpose.xlu0.b32.cont [5/16] %v470, 128
        %1754 = vxpose.xlu0.b32.cont [6/16] %v478, 128
        %1755 = vxpose.xlu0.b32.cont [7/16] %v486, 128
        %1756 = vxpose.xlu0.b32.cont [8/16] %v494, 128
        %1757 = vxpose.xlu0.b32.cont [9/16] %v502, 128
        %1758 = vxpose.xlu0.b32.cont [10/16] %v510, 128
        %1759 = vxpose.xlu0.b32.cont [11/16] %v518, 128
        %1760 = vxpose.xlu0.b32.cont [12/16] %v526, 128
        %1761 = vxpose.xlu0.b32.cont [13/16] %v534, 128
        %1762 = vxpose.xlu0.b32.cont [14/16] %v542, 128
        %1763 = vxpose.xlu0.b32.cont [15/16] %v550, 128
        %1764 = vxpose.xlu0.b32.end [16/16] %v558, 128
        %v1765 = vpop.trf.xlu0
        %v1766 = vpop.trf.xlu0
        %v1767 = vpop.trf.xlu0
        %v1768 = vpop.trf.xlu0
        %v1769 = vpop.trf.xlu0
        %v1770 = vpop.trf.xlu0
        %v1771 = vpop.trf.xlu0
        %v1772 = vpop.trf.xlu0
        %v1773 = vpop.trf.xlu0
        %v1774 = vpop.trf.xlu0
        %v1775 = vpop.trf.xlu0
        %v1776 = vpop.trf.xlu0
        %v1777 = vpop.trf.xlu0
        %v1778 = vpop.trf.xlu0
        %v1779 = vpop.trf.xlu0
        %v1780 = vpop.trf.xlu0
        %1781 = vxpose.xlu0.b32.start [1/16] %v439, 128
        %1782 = vxpose.xlu0.b32.cont [2/16] %v447, 128
        %1783 = vxpose.xlu0.b32.cont [3/16] %v455, 128
        %1784 = vxpose.xlu0.b32.cont [4/16] %v463, 128
        %1785 = vxpose.xlu0.b32.cont [5/16] %v471, 128
        %1786 = vxpose.xlu0.b32.cont [6/16] %v479, 128
        %1787 = vxpose.xlu0.b32.cont [7/16] %v487, 128
        %1788 = vxpose.xlu0.b32.cont [8/16] %v495, 128
        %1789 = vxpose.xlu0.b32.cont [9/16] %v503, 128
        %1790 = vxpose.xlu0.b32.cont [10/16] %v511, 128
        %1791 = vxpose.xlu0.b32.cont [11/16] %v519, 128
        %1792 = vxpose.xlu0.b32.cont [12/16] %v527, 128
        %1793 = vxpose.xlu0.b32.cont [13/16] %v535, 128
        %1794 = vxpose.xlu0.b32.cont [14/16] %v543, 128
        %1795 = vxpose.xlu0.b32.cont [15/16] %v551, 128
        %1796 = vxpose.xlu0.b32.end [16/16] %v559, 128
        %v1797 = vpop.trf.xlu0
        %v1798 = vpop.trf.xlu0
        %v1799 = vpop.trf.xlu0
        %v1800 = vpop.trf.xlu0
        %v1801 = vpop.trf.xlu0
        %v1802 = vpop.trf.xlu0
        %v1803 = vpop.trf.xlu0
        %v1804 = vpop.trf.xlu0
        %v1805 = vpop.trf.xlu0
        %v1806 = vpop.trf.xlu0
        %v1807 = vpop.trf.xlu0
        %v1808 = vpop.trf.xlu0
        %v1809 = vpop.trf.xlu0
        %v1810 = vpop.trf.xlu0
        %v1811 = vpop.trf.xlu0
        %v1812 = vpop.trf.xlu0
        %1813 = vxpose.xlu0.b32.start [1/16] %v440, 128
        %1814 = vxpose.xlu0.b32.cont [2/16] %v448, 128
        %1815 = vxpose.xlu0.b32.cont [3/16] %v456, 128
        %1816 = vxpose.xlu0.b32.cont [4/16] %v464, 128
        %1817 = vxpose.xlu0.b32.cont [5/16] %v472, 128
        %1818 = vxpose.xlu0.b32.cont [6/16] %v480, 128
        %1819 = vxpose.xlu0.b32.cont [7/16] %v488, 128
        %1820 = vxpose.xlu0.b32.cont [8/16] %v496, 128
        %1821 = vxpose.xlu0.b32.cont [9/16] %v504, 128
        %1822 = vxpose.xlu0.b32.cont [10/16] %v512, 128
        %1823 = vxpose.xlu0.b32.cont [11/16] %v520, 128
        %1824 = vxpose.xlu0.b32.cont [12/16] %v528, 128
        %1825 = vxpose.xlu0.b32.cont [13/16] %v536, 128
        %1826 = vxpose.xlu0.b32.cont [14/16] %v544, 128
        %1827 = vxpose.xlu0.b32.cont [15/16] %v552, 128
        %1828 = vxpose.xlu0.b32.end [16/16] %v560, 128
        %v1829 = vpop.trf.xlu0
        %v1830 = vpop.trf.xlu0
        %v1831 = vpop.trf.xlu0
        %v1832 = vpop.trf.xlu0
        %v1833 = vpop.trf.xlu0
        %v1834 = vpop.trf.xlu0
        %v1835 = vpop.trf.xlu0
        %v1836 = vpop.trf.xlu0
        %v1837 = vpop.trf.xlu0
        %v1838 = vpop.trf.xlu0
        %v1839 = vpop.trf.xlu0
        %v1840 = vpop.trf.xlu0
        %v1841 = vpop.trf.xlu0
        %v1842 = vpop.trf.xlu0
        %v1843 = vpop.trf.xlu0
        %v1844 = vpop.trf.xlu0
        %1845 = vxpose.xlu0.b32.start [1/16] %v441, 128
        %1846 = vxpose.xlu0.b32.cont [2/16] %v449, 128
        %1847 = vxpose.xlu0.b32.cont [3/16] %v457, 128
        %1848 = vxpose.xlu0.b32.cont [4/16] %v465, 128
        %1849 = vxpose.xlu0.b32.cont [5/16] %v473, 128
        %1850 = vxpose.xlu0.b32.cont [6/16] %v481, 128
        %1851 = vxpose.xlu0.b32.cont [7/16] %v489, 128
        %1852 = vxpose.xlu0.b32.cont [8/16] %v497, 128
        %1853 = vxpose.xlu0.b32.cont [9/16] %v505, 128
        %1854 = vxpose.xlu0.b32.cont [10/16] %v513, 128
        %1855 = vxpose.xlu0.b32.cont [11/16] %v521, 128
        %1856 = vxpose.xlu0.b32.cont [12/16] %v529, 128
        %1857 = vxpose.xlu0.b32.cont [13/16] %v537, 128
        %1858 = vxpose.xlu0.b32.cont [14/16] %v545, 128
        %1859 = vxpose.xlu0.b32.cont [15/16] %v553, 128
        %1860 = vxpose.xlu0.b32.end [16/16] %v561, 128
        %v1861 = vpop.trf.xlu0
        %v1862 = vpop.trf.xlu0
        %v1863 = vpop.trf.xlu0
        %v1864 = vpop.trf.xlu0
        %v1865 = vpop.trf.xlu0
        %v1866 = vpop.trf.xlu0
        %v1867 = vpop.trf.xlu0
        %v1868 = vpop.trf.xlu0
        %v1869 = vpop.trf.xlu0
        %v1870 = vpop.trf.xlu0
        %v1871 = vpop.trf.xlu0
        %v1872 = vpop.trf.xlu0
        %v1873 = vpop.trf.xlu0
        %v1874 = vpop.trf.xlu0
        %v1875 = vpop.trf.xlu0
        %v1876 = vpop.trf.xlu0
        %1877 = vxpose.xlu0.b32.start [1/16] %v442, 128
        %1878 = vxpose.xlu0.b32.cont [2/16] %v450, 128
        %1879 = vxpose.xlu0.b32.cont [3/16] %v458, 128
        %1880 = vxpose.xlu0.b32.cont [4/16] %v466, 128
        %1881 = vxpose.xlu0.b32.cont [5/16] %v474, 128
        %1882 = vxpose.xlu0.b32.cont [6/16] %v482, 128
        %1883 = vxpose.xlu0.b32.cont [7/16] %v490, 128
        %1884 = vxpose.xlu0.b32.cont [8/16] %v498, 128
        %1885 = vxpose.xlu0.b32.cont [9/16] %v506, 128
        %1886 = vxpose.xlu0.b32.cont [10/16] %v514, 128
        %1887 = vxpose.xlu0.b32.cont [11/16] %v522, 128
        %1888 = vxpose.xlu0.b32.cont [12/16] %v530, 128
        %1889 = vxpose.xlu0.b32.cont [13/16] %v538, 128
        %1890 = vxpose.xlu0.b32.cont [14/16] %v546, 128
        %1891 = vxpose.xlu0.b32.cont [15/16] %v554, 128
        %1892 = vxpose.xlu0.b32.end [16/16] %v562, 128
        %v1893 = vpop.trf.xlu0
        %v1894 = vpop.trf.xlu0
        %v1895 = vpop.trf.xlu0
        %v1896 = vpop.trf.xlu0
        %v1897 = vpop.trf.xlu0
        %v1898 = vpop.trf.xlu0
        %v1899 = vpop.trf.xlu0
        %v1900 = vpop.trf.xlu0
        %v1901 = vpop.trf.xlu0
        %v1902 = vpop.trf.xlu0
        %v1903 = vpop.trf.xlu0
        %v1904 = vpop.trf.xlu0
        %v1905 = vpop.trf.xlu0
        %v1906 = vpop.trf.xlu0
        %v1907 = vpop.trf.xlu0
        %v1908 = vpop.trf.xlu0
        %1909 = vxpose.xlu0.b32.start [1/16] %v443, 128
        %1910 = vxpose.xlu0.b32.cont [2/16] %v451, 128
        %1911 = vxpose.xlu0.b32.cont [3/16] %v459, 128
        %1912 = vxpose.xlu0.b32.cont [4/16] %v467, 128
        %1913 = vxpose.xlu0.b32.cont [5/16] %v475, 128
        %1914 = vxpose.xlu0.b32.cont [6/16] %v483, 128
        %1915 = vxpose.xlu0.b32.cont [7/16] %v491, 128
        %1916 = vxpose.xlu0.b32.cont [8/16] %v499, 128
        %1917 = vxpose.xlu0.b32.cont [9/16] %v507, 128
        %1918 = vxpose.xlu0.b32.cont [10/16] %v515, 128
        %1919 = vxpose.xlu0.b32.cont [11/16] %v523, 128
        %1920 = vxpose.xlu0.b32.cont [12/16] %v531, 128
        %1921 = vxpose.xlu0.b32.cont [13/16] %v539, 128
        %1922 = vxpose.xlu0.b32.cont [14/16] %v547, 128
        %1923 = vxpose.xlu0.b32.cont [15/16] %v555, 128
        %1924 = vxpose.xlu0.b32.end [16/16] %v563, 128
        %v1925 = vpop.trf.xlu0
        %v1926 = vpop.trf.xlu0
        %v1927 = vpop.trf.xlu0
        %v1928 = vpop.trf.xlu0
        %v1929 = vpop.trf.xlu0
        %v1930 = vpop.trf.xlu0
        %v1931 = vpop.trf.xlu0
        %v1932 = vpop.trf.xlu0
        %v1933 = vpop.trf.xlu0
        %v1934 = vpop.trf.xlu0
        %v1935 = vpop.trf.xlu0
        %v1936 = vpop.trf.xlu0
        %v1937 = vpop.trf.xlu0
        %v1938 = vpop.trf.xlu0
        %v1939 = vpop.trf.xlu0
        %v1940 = vpop.trf.xlu0
        %1941 = vxpose.xlu0.b32.start [1/16] %v444, 128
        %1942 = vxpose.xlu0.b32.cont [2/16] %v452, 128
        %1943 = vxpose.xlu0.b32.cont [3/16] %v460, 128
        %1944 = vxpose.xlu0.b32.cont [4/16] %v468, 128
        %1945 = vxpose.xlu0.b32.cont [5/16] %v476, 128
        %1946 = vxpose.xlu0.b32.cont [6/16] %v484, 128
        %1947 = vxpose.xlu0.b32.cont [7/16] %v492, 128
        %1948 = vxpose.xlu0.b32.cont [8/16] %v500, 128
        %1949 = vxpose.xlu0.b32.cont [9/16] %v508, 128
        %1950 = vxpose.xlu0.b32.cont [10/16] %v516, 128
        %1951 = vxpose.xlu0.b32.cont [11/16] %v524, 128
        %1952 = vxpose.xlu0.b32.cont [12/16] %v532, 128
        %1953 = vxpose.xlu0.b32.cont [13/16] %v540, 128
        %1954 = vxpose.xlu0.b32.cont [14/16] %v548, 128
        %1955 = vxpose.xlu0.b32.cont [15/16] %v556, 128
        %1956 = vxpose.xlu0.b32.end [16/16] %v564, 128
        %v1957 = vpop.trf.xlu0
        %v1958 = vpop.trf.xlu0
        %v1959 = vpop.trf.xlu0
        %v1960 = vpop.trf.xlu0
        %v1961 = vpop.trf.xlu0
        %v1962 = vpop.trf.xlu0
        %v1963 = vpop.trf.xlu0
        %v1964 = vpop.trf.xlu0
        %v1965 = vpop.trf.xlu0
        %v1966 = vpop.trf.xlu0
        %v1967 = vpop.trf.xlu0
        %v1968 = vpop.trf.xlu0
        %v1969 = vpop.trf.xlu0
        %v1970 = vpop.trf.xlu0
        %v1971 = vpop.trf.xlu0
        %v1972 = vpop.trf.xlu0
        %1973 = vxpose.xlu0.b32.start [1/16] %v565, 128
        %1974 = vxpose.xlu0.b32.cont [2/16] %v573, 128
        %1975 = vxpose.xlu0.b32.cont [3/16] %v581, 128
        %1976 = vxpose.xlu0.b32.cont [4/16] %v589, 128
        %1977 = vxpose.xlu0.b32.cont [5/16] %v597, 128
        %1978 = vxpose.xlu0.b32.cont [6/16] %v605, 128
        %1979 = vxpose.xlu0.b32.cont [7/16] %v613, 128
        %1980 = vxpose.xlu0.b32.cont [8/16] %v621, 128
        %1981 = vxpose.xlu0.b32.cont [9/16] %v629, 128
        %1982 = vxpose.xlu0.b32.cont [10/16] %v637, 128
        %1983 = vxpose.xlu0.b32.cont [11/16] %v645, 128
        %1984 = vxpose.xlu0.b32.cont [12/16] %v653, 128
        %1985 = vxpose.xlu0.b32.cont [13/16] %v661, 128
        %1986 = vxpose.xlu0.b32.cont [14/16] %v669, 128
        %1987 = vxpose.xlu0.b32.cont [15/16] %v677, 128
        %1988 = vxpose.xlu0.b32.end [16/16] %v685, 128
        %v1989 = vpop.trf.xlu0
        %v1990 = vpop.trf.xlu0
        %v1991 = vpop.trf.xlu0
        %v1992 = vpop.trf.xlu0
        %v1993 = vpop.trf.xlu0
        %v1994 = vpop.trf.xlu0
        %v1995 = vpop.trf.xlu0
        %v1996 = vpop.trf.xlu0
        %v1997 = vpop.trf.xlu0
        %v1998 = vpop.trf.xlu0
        %v1999 = vpop.trf.xlu0
        %v2000 = vpop.trf.xlu0
        %v2001 = vpop.trf.xlu0
        %v2002 = vpop.trf.xlu0
        %v2003 = vpop.trf.xlu0
        %v2004 = vpop.trf.xlu0
        %2005 = vxpose.xlu0.b32.start [1/16] %v566, 128
        %2006 = vxpose.xlu0.b32.cont [2/16] %v574, 128
        %2007 = vxpose.xlu0.b32.cont [3/16] %v582, 128
        %2008 = vxpose.xlu0.b32.cont [4/16] %v590, 128
        %2009 = vxpose.xlu0.b32.cont [5/16] %v598, 128
        %2010 = vxpose.xlu0.b32.cont [6/16] %v606, 128
        %2011 = vxpose.xlu0.b32.cont [7/16] %v614, 128
        %2012 = vxpose.xlu0.b32.cont [8/16] %v622, 128
        %2013 = vxpose.xlu0.b32.cont [9/16] %v630, 128
        %2014 = vxpose.xlu0.b32.cont [10/16] %v638, 128
        %2015 = vxpose.xlu0.b32.cont [11/16] %v646, 128
        %2016 = vxpose.xlu0.b32.cont [12/16] %v654, 128
        %2017 = vxpose.xlu0.b32.cont [13/16] %v662, 128
        %2018 = vxpose.xlu0.b32.cont [14/16] %v670, 128
        %2019 = vxpose.xlu0.b32.cont [15/16] %v678, 128
        %2020 = vxpose.xlu0.b32.end [16/16] %v686, 128
        %v2021 = vpop.trf.xlu0
        %v2022 = vpop.trf.xlu0
        %v2023 = vpop.trf.xlu0
        %v2024 = vpop.trf.xlu0
        %v2025 = vpop.trf.xlu0
        %v2026 = vpop.trf.xlu0
        %v2027 = vpop.trf.xlu0
        %v2028 = vpop.trf.xlu0
        %v2029 = vpop.trf.xlu0
        %v2030 = vpop.trf.xlu0
        %v2031 = vpop.trf.xlu0
        %v2032 = vpop.trf.xlu0
        %v2033 = vpop.trf.xlu0
        %v2034 = vpop.trf.xlu0
        %v2035 = vpop.trf.xlu0
        %v2036 = vpop.trf.xlu0
        %2037 = vxpose.xlu0.b32.start [1/16] %v567, 128
        %2038 = vxpose.xlu0.b32.cont [2/16] %v575, 128
        %2039 = vxpose.xlu0.b32.cont [3/16] %v583, 128
        %2040 = vxpose.xlu0.b32.cont [4/16] %v591, 128
        %2041 = vxpose.xlu0.b32.cont [5/16] %v599, 128
        %2042 = vxpose.xlu0.b32.cont [6/16] %v607, 128
        %2043 = vxpose.xlu0.b32.cont [7/16] %v615, 128
        %2044 = vxpose.xlu0.b32.cont [8/16] %v623, 128
        %2045 = vxpose.xlu0.b32.cont [9/16] %v631, 128
        %2046 = vxpose.xlu0.b32.cont [10/16] %v639, 128
        %2047 = vxpose.xlu0.b32.cont [11/16] %v647, 128
        %2048 = vxpose.xlu0.b32.cont [12/16] %v655, 128
        %2049 = vxpose.xlu0.b32.cont [13/16] %v663, 128
        %2050 = vxpose.xlu0.b32.cont [14/16] %v671, 128
        %2051 = vxpose.xlu0.b32.cont [15/16] %v679, 128
        %2052 = vxpose.xlu0.b32.end [16/16] %v687, 128
        %v2053 = vpop.trf.xlu0
        %v2054 = vpop.trf.xlu0
        %v2055 = vpop.trf.xlu0
        %v2056 = vpop.trf.xlu0
        %v2057 = vpop.trf.xlu0
        %v2058 = vpop.trf.xlu0
        %v2059 = vpop.trf.xlu0
        %v2060 = vpop.trf.xlu0
        %v2061 = vpop.trf.xlu0
        %v2062 = vpop.trf.xlu0
        %v2063 = vpop.trf.xlu0
        %v2064 = vpop.trf.xlu0
        %v2065 = vpop.trf.xlu0
        %v2066 = vpop.trf.xlu0
        %v2067 = vpop.trf.xlu0
        %v2068 = vpop.trf.xlu0
        %2069 = vxpose.xlu0.b32.start [1/16] %v568, 128
        %2070 = vxpose.xlu0.b32.cont [2/16] %v576, 128
        %2071 = vxpose.xlu0.b32.cont [3/16] %v584, 128
        %2072 = vxpose.xlu0.b32.cont [4/16] %v592, 128
        %2073 = vxpose.xlu0.b32.cont [5/16] %v600, 128
        %2074 = vxpose.xlu0.b32.cont [6/16] %v608, 128
        %2075 = vxpose.xlu0.b32.cont [7/16] %v616, 128
        %2076 = vxpose.xlu0.b32.cont [8/16] %v624, 128
        %2077 = vxpose.xlu0.b32.cont [9/16] %v632, 128
        %2078 = vxpose.xlu0.b32.cont [10/16] %v640, 128
        %2079 = vxpose.xlu0.b32.cont [11/16] %v648, 128
        %2080 = vxpose.xlu0.b32.cont [12/16] %v656, 128
        %2081 = vxpose.xlu0.b32.cont [13/16] %v664, 128
        %2082 = vxpose.xlu0.b32.cont [14/16] %v672, 128
        %2083 = vxpose.xlu0.b32.cont [15/16] %v680, 128
        %2084 = vxpose.xlu0.b32.end [16/16] %v688, 128
        %v2085 = vpop.trf.xlu0
        %v2086 = vpop.trf.xlu0
        %v2087 = vpop.trf.xlu0
        %v2088 = vpop.trf.xlu0
        %v2089 = vpop.trf.xlu0
        %v2090 = vpop.trf.xlu0
        %v2091 = vpop.trf.xlu0
        %v2092 = vpop.trf.xlu0
        %v2093 = vpop.trf.xlu0
        %v2094 = vpop.trf.xlu0
        %v2095 = vpop.trf.xlu0
        %v2096 = vpop.trf.xlu0
        %v2097 = vpop.trf.xlu0
        %v2098 = vpop.trf.xlu0
        %v2099 = vpop.trf.xlu0
        %v2100 = vpop.trf.xlu0
        %2101 = vxpose.xlu0.b32.start [1/16] %v569, 128
        %2102 = vxpose.xlu0.b32.cont [2/16] %v577, 128
        %2103 = vxpose.xlu0.b32.cont [3/16] %v585, 128
        %2104 = vxpose.xlu0.b32.cont [4/16] %v593, 128
        %2105 = vxpose.xlu0.b32.cont [5/16] %v601, 128
        %2106 = vxpose.xlu0.b32.cont [6/16] %v609, 128
        %2107 = vxpose.xlu0.b32.cont [7/16] %v617, 128
        %2108 = vxpose.xlu0.b32.cont [8/16] %v625, 128
        %2109 = vxpose.xlu0.b32.cont [9/16] %v633, 128
        %2110 = vxpose.xlu0.b32.cont [10/16] %v641, 128
        %2111 = vxpose.xlu0.b32.cont [11/16] %v649, 128
        %2112 = vxpose.xlu0.b32.cont [12/16] %v657, 128
        %2113 = vxpose.xlu0.b32.cont [13/16] %v665, 128
        %2114 = vxpose.xlu0.b32.cont [14/16] %v673, 128
        %2115 = vxpose.xlu0.b32.cont [15/16] %v681, 128
        %2116 = vxpose.xlu0.b32.end [16/16] %v689, 128
        %v2117 = vpop.trf.xlu0
        %v2118 = vpop.trf.xlu0
        %v2119 = vpop.trf.xlu0
        %v2120 = vpop.trf.xlu0
        %v2121 = vpop.trf.xlu0
        %v2122 = vpop.trf.xlu0
        %v2123 = vpop.trf.xlu0
        %v2124 = vpop.trf.xlu0
        %v2125 = vpop.trf.xlu0
        %v2126 = vpop.trf.xlu0
        %v2127 = vpop.trf.xlu0
        %v2128 = vpop.trf.xlu0
        %v2129 = vpop.trf.xlu0
        %v2130 = vpop.trf.xlu0
        %v2131 = vpop.trf.xlu0
        %v2132 = vpop.trf.xlu0
        %2133 = vxpose.xlu0.b32.start [1/16] %v570, 128
        %2134 = vxpose.xlu0.b32.cont [2/16] %v578, 128
        %2135 = vxpose.xlu0.b32.cont [3/16] %v586, 128
        %2136 = vxpose.xlu0.b32.cont [4/16] %v594, 128
        %2137 = vxpose.xlu0.b32.cont [5/16] %v602, 128
        %2138 = vxpose.xlu0.b32.cont [6/16] %v610, 128
        %2139 = vxpose.xlu0.b32.cont [7/16] %v618, 128
        %2140 = vxpose.xlu0.b32.cont [8/16] %v626, 128
        %2141 = vxpose.xlu0.b32.cont [9/16] %v634, 128
        %2142 = vxpose.xlu0.b32.cont [10/16] %v642, 128
        %2143 = vxpose.xlu0.b32.cont [11/16] %v650, 128
        %2144 = vxpose.xlu0.b32.cont [12/16] %v658, 128
        %2145 = vxpose.xlu0.b32.cont [13/16] %v666, 128
        %2146 = vxpose.xlu0.b32.cont [14/16] %v674, 128
        %2147 = vxpose.xlu0.b32.cont [15/16] %v682, 128
        %2148 = vxpose.xlu0.b32.end [16/16] %v690, 128
        %v2149 = vpop.trf.xlu0
        %v2150 = vpop.trf.xlu0
        %v2151 = vpop.trf.xlu0
        %v2152 = vpop.trf.xlu0
        %v2153 = vpop.trf.xlu0
        %v2154 = vpop.trf.xlu0
        %v2155 = vpop.trf.xlu0
        %v2156 = vpop.trf.xlu0
        %v2157 = vpop.trf.xlu0
        %v2158 = vpop.trf.xlu0
        %v2159 = vpop.trf.xlu0
        %v2160 = vpop.trf.xlu0
        %v2161 = vpop.trf.xlu0
        %v2162 = vpop.trf.xlu0
        %v2163 = vpop.trf.xlu0
        %v2164 = vpop.trf.xlu0
        %2165 = vxpose.xlu0.b32.start [1/16] %v571, 128
        %2166 = vxpose.xlu0.b32.cont [2/16] %v579, 128
        %2167 = vxpose.xlu0.b32.cont [3/16] %v587, 128
        %2168 = vxpose.xlu0.b32.cont [4/16] %v595, 128
        %2169 = vxpose.xlu0.b32.cont [5/16] %v603, 128
        %2170 = vxpose.xlu0.b32.cont [6/16] %v611, 128
        %2171 = vxpose.xlu0.b32.cont [7/16] %v619, 128
        %2172 = vxpose.xlu0.b32.cont [8/16] %v627, 128
        %2173 = vxpose.xlu0.b32.cont [9/16] %v635, 128
        %2174 = vxpose.xlu0.b32.cont [10/16] %v643, 128
        %2175 = vxpose.xlu0.b32.cont [11/16] %v651, 128
        %2176 = vxpose.xlu0.b32.cont [12/16] %v659, 128
        %2177 = vxpose.xlu0.b32.cont [13/16] %v667, 128
        %2178 = vxpose.xlu0.b32.cont [14/16] %v675, 128
        %2179 = vxpose.xlu0.b32.cont [15/16] %v683, 128
        %2180 = vxpose.xlu0.b32.end [16/16] %v691, 128
        %v2181 = vpop.trf.xlu0
        %v2182 = vpop.trf.xlu0
        %v2183 = vpop.trf.xlu0
        %v2184 = vpop.trf.xlu0
        %v2185 = vpop.trf.xlu0
        %v2186 = vpop.trf.xlu0
        %v2187 = vpop.trf.xlu0
        %v2188 = vpop.trf.xlu0
        %v2189 = vpop.trf.xlu0
        %v2190 = vpop.trf.xlu0
        %v2191 = vpop.trf.xlu0
        %v2192 = vpop.trf.xlu0
        %v2193 = vpop.trf.xlu0
        %v2194 = vpop.trf.xlu0
        %v2195 = vpop.trf.xlu0
        %v2196 = vpop.trf.xlu0
        %2197 = vxpose.xlu0.b32.start [1/16] %v572, 128
        %2198 = vxpose.xlu0.b32.cont [2/16] %v580, 128
        %2199 = vxpose.xlu0.b32.cont [3/16] %v588, 128
        %2200 = vxpose.xlu0.b32.cont [4/16] %v596, 128
        %2201 = vxpose.xlu0.b32.cont [5/16] %v604, 128
        %2202 = vxpose.xlu0.b32.cont [6/16] %v612, 128
        %2203 = vxpose.xlu0.b32.cont [7/16] %v620, 128
        %2204 = vxpose.xlu0.b32.cont [8/16] %v628, 128
        %2205 = vxpose.xlu0.b32.cont [9/16] %v636, 128
        %2206 = vxpose.xlu0.b32.cont [10/16] %v644, 128
        %2207 = vxpose.xlu0.b32.cont [11/16] %v652, 128
        %2208 = vxpose.xlu0.b32.cont [12/16] %v660, 128
        %2209 = vxpose.xlu0.b32.cont [13/16] %v668, 128
        %2210 = vxpose.xlu0.b32.cont [14/16] %v676, 128
        %2211 = vxpose.xlu0.b32.cont [15/16] %v684, 128
        %2212 = vxpose.xlu0.b32.end [16/16] %v692, 128
        %v2213 = vpop.trf.xlu0
        %v2214 = vpop.trf.xlu0
        %v2215 = vpop.trf.xlu0
        %v2216 = vpop.trf.xlu0
        %v2217 = vpop.trf.xlu0
        %v2218 = vpop.trf.xlu0
        %v2219 = vpop.trf.xlu0
        %v2220 = vpop.trf.xlu0
        %v2221 = vpop.trf.xlu0
        %v2222 = vpop.trf.xlu0
        %v2223 = vpop.trf.xlu0
        %v2224 = vpop.trf.xlu0
        %v2225 = vpop.trf.xlu0
        %v2226 = vpop.trf.xlu0
        %v2227 = vpop.trf.xlu0
        %v2228 = vpop.trf.xlu0
        %2229 = vxpose.xlu0.b32.start [1/16] %v693, 128
        %2230 = vxpose.xlu0.b32.cont [2/16] %v701, 128
        %2231 = vxpose.xlu0.b32.cont [3/16] %v709, 128
        %2232 = vxpose.xlu0.b32.cont [4/16] %v717, 128
        %2233 = vxpose.xlu0.b32.cont [5/16] %v725, 128
        %2234 = vxpose.xlu0.b32.cont [6/16] %v733, 128
        %2235 = vxpose.xlu0.b32.cont [7/16] %v741, 128
        %2236 = vxpose.xlu0.b32.cont [8/16] %v749, 128
        %2237 = vxpose.xlu0.b32.cont [9/16] %v757, 128
        %2238 = vxpose.xlu0.b32.cont [10/16] %v765, 128
        %2239 = vxpose.xlu0.b32.cont [11/16] %v773, 128
        %2240 = vxpose.xlu0.b32.cont [12/16] %v781, 128
        %2241 = vxpose.xlu0.b32.cont [13/16] %v789, 128
        %2242 = vxpose.xlu0.b32.cont [14/16] %v797, 128
        %2243 = vxpose.xlu0.b32.cont [15/16] %v805, 128
        %2244 = vxpose.xlu0.b32.end [16/16] %v813, 128
        %v2245 = vpop.trf.xlu0
        %v2246 = vpop.trf.xlu0
        %v2247 = vpop.trf.xlu0
        %v2248 = vpop.trf.xlu0
        %v2249 = vpop.trf.xlu0
        %v2250 = vpop.trf.xlu0
        %v2251 = vpop.trf.xlu0
        %v2252 = vpop.trf.xlu0
        %v2253 = vpop.trf.xlu0
        %v2254 = vpop.trf.xlu0
        %v2255 = vpop.trf.xlu0
        %v2256 = vpop.trf.xlu0
        %v2257 = vpop.trf.xlu0
        %v2258 = vpop.trf.xlu0
        %v2259 = vpop.trf.xlu0
        %v2260 = vpop.trf.xlu0
        %2261 = vxpose.xlu0.b32.start [1/16] %v694, 128
        %2262 = vxpose.xlu0.b32.cont [2/16] %v702, 128
        %2263 = vxpose.xlu0.b32.cont [3/16] %v710, 128
        %2264 = vxpose.xlu0.b32.cont [4/16] %v718, 128
        %2265 = vxpose.xlu0.b32.cont [5/16] %v726, 128
        %2266 = vxpose.xlu0.b32.cont [6/16] %v734, 128
        %2267 = vxpose.xlu0.b32.cont [7/16] %v742, 128
        %2268 = vxpose.xlu0.b32.cont [8/16] %v750, 128
        %2269 = vxpose.xlu0.b32.cont [9/16] %v758, 128
        %2270 = vxpose.xlu0.b32.cont [10/16] %v766, 128
        %2271 = vxpose.xlu0.b32.cont [11/16] %v774, 128
        %2272 = vxpose.xlu0.b32.cont [12/16] %v782, 128
        %2273 = vxpose.xlu0.b32.cont [13/16] %v790, 128
        %2274 = vxpose.xlu0.b32.cont [14/16] %v798, 128
        %2275 = vxpose.xlu0.b32.cont [15/16] %v806, 128
        %2276 = vxpose.xlu0.b32.end [16/16] %v814, 128
        %v2277 = vpop.trf.xlu0
        %v2278 = vpop.trf.xlu0
        %v2279 = vpop.trf.xlu0
        %v2280 = vpop.trf.xlu0
        %v2281 = vpop.trf.xlu0
        %v2282 = vpop.trf.xlu0
        %v2283 = vpop.trf.xlu0
        %v2284 = vpop.trf.xlu0
        %v2285 = vpop.trf.xlu0
        %v2286 = vpop.trf.xlu0
        %v2287 = vpop.trf.xlu0
        %v2288 = vpop.trf.xlu0
        %v2289 = vpop.trf.xlu0
        %v2290 = vpop.trf.xlu0
        %v2291 = vpop.trf.xlu0
        %v2292 = vpop.trf.xlu0
        %2293 = vxpose.xlu0.b32.start [1/16] %v695, 128
        %2294 = vxpose.xlu0.b32.cont [2/16] %v703, 128
        %2295 = vxpose.xlu0.b32.cont [3/16] %v711, 128
        %2296 = vxpose.xlu0.b32.cont [4/16] %v719, 128
        %2297 = vxpose.xlu0.b32.cont [5/16] %v727, 128
        %2298 = vxpose.xlu0.b32.cont [6/16] %v735, 128
        %2299 = vxpose.xlu0.b32.cont [7/16] %v743, 128
        %2300 = vxpose.xlu0.b32.cont [8/16] %v751, 128
        %2301 = vxpose.xlu0.b32.cont [9/16] %v759, 128
        %2302 = vxpose.xlu0.b32.cont [10/16] %v767, 128
        %2303 = vxpose.xlu0.b32.cont [11/16] %v775, 128
        %2304 = vxpose.xlu0.b32.cont [12/16] %v783, 128
        %2305 = vxpose.xlu0.b32.cont [13/16] %v791, 128
        %2306 = vxpose.xlu0.b32.cont [14/16] %v799, 128
        %2307 = vxpose.xlu0.b32.cont [15/16] %v807, 128
        %2308 = vxpose.xlu0.b32.end [16/16] %v815, 128
        %v2309 = vpop.trf.xlu0
        %v2310 = vpop.trf.xlu0
        %v2311 = vpop.trf.xlu0
        %v2312 = vpop.trf.xlu0
        %v2313 = vpop.trf.xlu0
        %v2314 = vpop.trf.xlu0
        %v2315 = vpop.trf.xlu0
        %v2316 = vpop.trf.xlu0
        %v2317 = vpop.trf.xlu0
        %v2318 = vpop.trf.xlu0
        %v2319 = vpop.trf.xlu0
        %v2320 = vpop.trf.xlu0
        %v2321 = vpop.trf.xlu0
        %v2322 = vpop.trf.xlu0
        %v2323 = vpop.trf.xlu0
        %v2324 = vpop.trf.xlu0
        %2325 = vxpose.xlu0.b32.start [1/16] %v696, 128
        %2326 = vxpose.xlu0.b32.cont [2/16] %v704, 128
        %2327 = vxpose.xlu0.b32.cont [3/16] %v712, 128
        %2328 = vxpose.xlu0.b32.cont [4/16] %v720, 128
        %2329 = vxpose.xlu0.b32.cont [5/16] %v728, 128
        %2330 = vxpose.xlu0.b32.cont [6/16] %v736, 128
        %2331 = vxpose.xlu0.b32.cont [7/16] %v744, 128
        %2332 = vxpose.xlu0.b32.cont [8/16] %v752, 128
        %2333 = vxpose.xlu0.b32.cont [9/16] %v760, 128
        %2334 = vxpose.xlu0.b32.cont [10/16] %v768, 128
        %2335 = vxpose.xlu0.b32.cont [11/16] %v776, 128
        %2336 = vxpose.xlu0.b32.cont [12/16] %v784, 128
        %2337 = vxpose.xlu0.b32.cont [13/16] %v792, 128
        %2338 = vxpose.xlu0.b32.cont [14/16] %v800, 128
        %2339 = vxpose.xlu0.b32.cont [15/16] %v808, 128
        %2340 = vxpose.xlu0.b32.end [16/16] %v816, 128
        %v2341 = vpop.trf.xlu0
        %v2342 = vpop.trf.xlu0
        %v2343 = vpop.trf.xlu0
        %v2344 = vpop.trf.xlu0
        %v2345 = vpop.trf.xlu0
        %v2346 = vpop.trf.xlu0
        %v2347 = vpop.trf.xlu0
        %v2348 = vpop.trf.xlu0
        %v2349 = vpop.trf.xlu0
        %v2350 = vpop.trf.xlu0
        %v2351 = vpop.trf.xlu0
        %v2352 = vpop.trf.xlu0
        %v2353 = vpop.trf.xlu0
        %v2354 = vpop.trf.xlu0
        %v2355 = vpop.trf.xlu0
        %v2356 = vpop.trf.xlu0
        %2357 = vxpose.xlu0.b32.start [1/16] %v697, 128
        %2358 = vxpose.xlu0.b32.cont [2/16] %v705, 128
        %2359 = vxpose.xlu0.b32.cont [3/16] %v713, 128
        %2360 = vxpose.xlu0.b32.cont [4/16] %v721, 128
        %2361 = vxpose.xlu0.b32.cont [5/16] %v729, 128
        %2362 = vxpose.xlu0.b32.cont [6/16] %v737, 128
        %2363 = vxpose.xlu0.b32.cont [7/16] %v745, 128
        %2364 = vxpose.xlu0.b32.cont [8/16] %v753, 128
        %2365 = vxpose.xlu0.b32.cont [9/16] %v761, 128
        %2366 = vxpose.xlu0.b32.cont [10/16] %v769, 128
        %2367 = vxpose.xlu0.b32.cont [11/16] %v777, 128
        %2368 = vxpose.xlu0.b32.cont [12/16] %v785, 128
        %2369 = vxpose.xlu0.b32.cont [13/16] %v793, 128
        %2370 = vxpose.xlu0.b32.cont [14/16] %v801, 128
        %2371 = vxpose.xlu0.b32.cont [15/16] %v809, 128
        %2372 = vxpose.xlu0.b32.end [16/16] %v817, 128
        %v2373 = vpop.trf.xlu0
        %v2374 = vpop.trf.xlu0
        %v2375 = vpop.trf.xlu0
        %v2376 = vpop.trf.xlu0
        %v2377 = vpop.trf.xlu0
        %v2378 = vpop.trf.xlu0
        %v2379 = vpop.trf.xlu0
        %v2380 = vpop.trf.xlu0
        %v2381 = vpop.trf.xlu0
        %v2382 = vpop.trf.xlu0
        %v2383 = vpop.trf.xlu0
        %v2384 = vpop.trf.xlu0
        %v2385 = vpop.trf.xlu0
        %v2386 = vpop.trf.xlu0
        %v2387 = vpop.trf.xlu0
        %v2388 = vpop.trf.xlu0
        %2389 = vxpose.xlu0.b32.start [1/16] %v698, 128
        %2390 = vxpose.xlu0.b32.cont [2/16] %v706, 128
        %2391 = vxpose.xlu0.b32.cont [3/16] %v714, 128
        %2392 = vxpose.xlu0.b32.cont [4/16] %v722, 128
        %2393 = vxpose.xlu0.b32.cont [5/16] %v730, 128
        %2394 = vxpose.xlu0.b32.cont [6/16] %v738, 128
        %2395 = vxpose.xlu0.b32.cont [7/16] %v746, 128
        %2396 = vxpose.xlu0.b32.cont [8/16] %v754, 128
        %2397 = vxpose.xlu0.b32.cont [9/16] %v762, 128
        %2398 = vxpose.xlu0.b32.cont [10/16] %v770, 128
        %2399 = vxpose.xlu0.b32.cont [11/16] %v778, 128
        %2400 = vxpose.xlu0.b32.cont [12/16] %v786, 128
        %2401 = vxpose.xlu0.b32.cont [13/16] %v794, 128
        %2402 = vxpose.xlu0.b32.cont [14/16] %v802, 128
        %2403 = vxpose.xlu0.b32.cont [15/16] %v810, 128
        %2404 = vxpose.xlu0.b32.end [16/16] %v818, 128
        %v2405 = vpop.trf.xlu0
        %v2406 = vpop.trf.xlu0
        %v2407 = vpop.trf.xlu0
        %v2408 = vpop.trf.xlu0
        %v2409 = vpop.trf.xlu0
        %v2410 = vpop.trf.xlu0
        %v2411 = vpop.trf.xlu0
        %v2412 = vpop.trf.xlu0
        %v2413 = vpop.trf.xlu0
        %v2414 = vpop.trf.xlu0
        %v2415 = vpop.trf.xlu0
        %v2416 = vpop.trf.xlu0
        %v2417 = vpop.trf.xlu0
        %v2418 = vpop.trf.xlu0
        %v2419 = vpop.trf.xlu0
        %v2420 = vpop.trf.xlu0
        %2421 = vxpose.xlu0.b32.start [1/16] %v699, 128
        %2422 = vxpose.xlu0.b32.cont [2/16] %v707, 128
        %2423 = vxpose.xlu0.b32.cont [3/16] %v715, 128
        %2424 = vxpose.xlu0.b32.cont [4/16] %v723, 128
        %2425 = vxpose.xlu0.b32.cont [5/16] %v731, 128
        %2426 = vxpose.xlu0.b32.cont [6/16] %v739, 128
        %2427 = vxpose.xlu0.b32.cont [7/16] %v747, 128
        %2428 = vxpose.xlu0.b32.cont [8/16] %v755, 128
        %2429 = vxpose.xlu0.b32.cont [9/16] %v763, 128
        %2430 = vxpose.xlu0.b32.cont [10/16] %v771, 128
        %2431 = vxpose.xlu0.b32.cont [11/16] %v779, 128
        %2432 = vxpose.xlu0.b32.cont [12/16] %v787, 128
        %2433 = vxpose.xlu0.b32.cont [13/16] %v795, 128
        %2434 = vxpose.xlu0.b32.cont [14/16] %v803, 128
        %2435 = vxpose.xlu0.b32.cont [15/16] %v811, 128
        %2436 = vxpose.xlu0.b32.end [16/16] %v819, 128
        %v2437 = vpop.trf.xlu0
        %v2438 = vpop.trf.xlu0
        %v2439 = vpop.trf.xlu0
        %v2440 = vpop.trf.xlu0
        %v2441 = vpop.trf.xlu0
        %v2442 = vpop.trf.xlu0
        %v2443 = vpop.trf.xlu0
        %v2444 = vpop.trf.xlu0
        %v2445 = vpop.trf.xlu0
        %v2446 = vpop.trf.xlu0
        %v2447 = vpop.trf.xlu0
        %v2448 = vpop.trf.xlu0
        %v2449 = vpop.trf.xlu0
        %v2450 = vpop.trf.xlu0
        %v2451 = vpop.trf.xlu0
        %v2452 = vpop.trf.xlu0
        %2453 = vxpose.xlu0.b32.start [1/16] %v700, 128
        %2454 = vxpose.xlu0.b32.cont [2/16] %v708, 128
        %2455 = vxpose.xlu0.b32.cont [3/16] %v716, 128
        %2456 = vxpose.xlu0.b32.cont [4/16] %v724, 128
        %2457 = vxpose.xlu0.b32.cont [5/16] %v732, 128
        %2458 = vxpose.xlu0.b32.cont [6/16] %v740, 128
        %2459 = vxpose.xlu0.b32.cont [7/16] %v748, 128
        %2460 = vxpose.xlu0.b32.cont [8/16] %v756, 128
        %2461 = vxpose.xlu0.b32.cont [9/16] %v764, 128
        %2462 = vxpose.xlu0.b32.cont [10/16] %v772, 128
        %2463 = vxpose.xlu0.b32.cont [11/16] %v780, 128
        %2464 = vxpose.xlu0.b32.cont [12/16] %v788, 128
        %2465 = vxpose.xlu0.b32.cont [13/16] %v796, 128
        %2466 = vxpose.xlu0.b32.cont [14/16] %v804, 128
        %2467 = vxpose.xlu0.b32.cont [15/16] %v812, 128
        %2468 = vxpose.xlu0.b32.end [16/16] %v820, 128
        %v2469 = vpop.trf.xlu0
        %v2470 = vpop.trf.xlu0
        %v2471 = vpop.trf.xlu0
        %v2472 = vpop.trf.xlu0
        %v2473 = vpop.trf.xlu0
        %v2474 = vpop.trf.xlu0
        %v2475 = vpop.trf.xlu0
        %v2476 = vpop.trf.xlu0
        %v2477 = vpop.trf.xlu0
        %v2478 = vpop.trf.xlu0
        %v2479 = vpop.trf.xlu0
        %v2480 = vpop.trf.xlu0
        %v2481 = vpop.trf.xlu0
        %v2482 = vpop.trf.xlu0
        %v2483 = vpop.trf.xlu0
        %v2484 = vpop.trf.xlu0
        %2485 = vxpose.xlu0.b32.start [1/16] %v821, 128
        %2486 = vxpose.xlu0.b32.cont [2/16] %v829, 128
        %2487 = vxpose.xlu0.b32.cont [3/16] %v837, 128
        %2488 = vxpose.xlu0.b32.cont [4/16] %v845, 128
        %2489 = vxpose.xlu0.b32.cont [5/16] %v853, 128
        %2490 = vxpose.xlu0.b32.cont [6/16] %v861, 128
        %2491 = vxpose.xlu0.b32.cont [7/16] %v869, 128
        %2492 = vxpose.xlu0.b32.cont [8/16] %v877, 128
        %2493 = vxpose.xlu0.b32.cont [9/16] %v885, 128
        %2494 = vxpose.xlu0.b32.cont [10/16] %v893, 128
        %2495 = vxpose.xlu0.b32.cont [11/16] %v901, 128
        %2496 = vxpose.xlu0.b32.cont [12/16] %v909, 128
        %2497 = vxpose.xlu0.b32.cont [13/16] %v917, 128
        %2498 = vxpose.xlu0.b32.cont [14/16] %v925, 128
        %2499 = vxpose.xlu0.b32.cont [15/16] %v933, 128
        %2500 = vxpose.xlu0.b32.end [16/16] %v941, 128
        %v2501 = vpop.trf.xlu0
        %v2502 = vpop.trf.xlu0
        %v2503 = vpop.trf.xlu0
        %v2504 = vpop.trf.xlu0
        %v2505 = vpop.trf.xlu0
        %v2506 = vpop.trf.xlu0
        %v2507 = vpop.trf.xlu0
        %v2508 = vpop.trf.xlu0
        %v2509 = vpop.trf.xlu0
        %v2510 = vpop.trf.xlu0
        %v2511 = vpop.trf.xlu0
        %v2512 = vpop.trf.xlu0
        %v2513 = vpop.trf.xlu0
        %v2514 = vpop.trf.xlu0
        %v2515 = vpop.trf.xlu0
        %v2516 = vpop.trf.xlu0
        %2517 = vxpose.xlu0.b32.start [1/16] %v822, 128
        %2518 = vxpose.xlu0.b32.cont [2/16] %v830, 128
        %2519 = vxpose.xlu0.b32.cont [3/16] %v838, 128
        %2520 = vxpose.xlu0.b32.cont [4/16] %v846, 128
        %2521 = vxpose.xlu0.b32.cont [5/16] %v854, 128
        %2522 = vxpose.xlu0.b32.cont [6/16] %v862, 128
        %2523 = vxpose.xlu0.b32.cont [7/16] %v870, 128
        %2524 = vxpose.xlu0.b32.cont [8/16] %v878, 128
        %2525 = vxpose.xlu0.b32.cont [9/16] %v886, 128
        %2526 = vxpose.xlu0.b32.cont [10/16] %v894, 128
        %2527 = vxpose.xlu0.b32.cont [11/16] %v902, 128
        %2528 = vxpose.xlu0.b32.cont [12/16] %v910, 128
        %2529 = vxpose.xlu0.b32.cont [13/16] %v918, 128
        %2530 = vxpose.xlu0.b32.cont [14/16] %v926, 128
        %2531 = vxpose.xlu0.b32.cont [15/16] %v934, 128
        %2532 = vxpose.xlu0.b32.end [16/16] %v942, 128
        %v2533 = vpop.trf.xlu0
        %v2534 = vpop.trf.xlu0
        %v2535 = vpop.trf.xlu0
        %v2536 = vpop.trf.xlu0
        %v2537 = vpop.trf.xlu0
        %v2538 = vpop.trf.xlu0
        %v2539 = vpop.trf.xlu0
        %v2540 = vpop.trf.xlu0
        %v2541 = vpop.trf.xlu0
        %v2542 = vpop.trf.xlu0
        %v2543 = vpop.trf.xlu0
        %v2544 = vpop.trf.xlu0
        %v2545 = vpop.trf.xlu0
        %v2546 = vpop.trf.xlu0
        %v2547 = vpop.trf.xlu0
        %v2548 = vpop.trf.xlu0
        %2549 = vxpose.xlu0.b32.start [1/16] %v823, 128
        %2550 = vxpose.xlu0.b32.cont [2/16] %v831, 128
        %2551 = vxpose.xlu0.b32.cont [3/16] %v839, 128
        %2552 = vxpose.xlu0.b32.cont [4/16] %v847, 128
        %2553 = vxpose.xlu0.b32.cont [5/16] %v855, 128
        %2554 = vxpose.xlu0.b32.cont [6/16] %v863, 128
        %2555 = vxpose.xlu0.b32.cont [7/16] %v871, 128
        %2556 = vxpose.xlu0.b32.cont [8/16] %v879, 128
        %2557 = vxpose.xlu0.b32.cont [9/16] %v887, 128
        %2558 = vxpose.xlu0.b32.cont [10/16] %v895, 128
        %2559 = vxpose.xlu0.b32.cont [11/16] %v903, 128
        %2560 = vxpose.xlu0.b32.cont [12/16] %v911, 128
        %2561 = vxpose.xlu0.b32.cont [13/16] %v919, 128
        %2562 = vxpose.xlu0.b32.cont [14/16] %v927, 128
        %2563 = vxpose.xlu0.b32.cont [15/16] %v935, 128
        %2564 = vxpose.xlu0.b32.end [16/16] %v943, 128
        %v2565 = vpop.trf.xlu0
        %v2566 = vpop.trf.xlu0
        %v2567 = vpop.trf.xlu0
        %v2568 = vpop.trf.xlu0
        %v2569 = vpop.trf.xlu0
        %v2570 = vpop.trf.xlu0
        %v2571 = vpop.trf.xlu0
        %v2572 = vpop.trf.xlu0
        %v2573 = vpop.trf.xlu0
        %v2574 = vpop.trf.xlu0
        %v2575 = vpop.trf.xlu0
        %v2576 = vpop.trf.xlu0
        %v2577 = vpop.trf.xlu0
        %v2578 = vpop.trf.xlu0
        %v2579 = vpop.trf.xlu0
        %v2580 = vpop.trf.xlu0
        %2581 = vxpose.xlu0.b32.start [1/16] %v824, 128
        %2582 = vxpose.xlu0.b32.cont [2/16] %v832, 128
        %2583 = vxpose.xlu0.b32.cont [3/16] %v840, 128
        %2584 = vxpose.xlu0.b32.cont [4/16] %v848, 128
        %2585 = vxpose.xlu0.b32.cont [5/16] %v856, 128
        %2586 = vxpose.xlu0.b32.cont [6/16] %v864, 128
        %2587 = vxpose.xlu0.b32.cont [7/16] %v872, 128
        %2588 = vxpose.xlu0.b32.cont [8/16] %v880, 128
        %2589 = vxpose.xlu0.b32.cont [9/16] %v888, 128
        %2590 = vxpose.xlu0.b32.cont [10/16] %v896, 128
        %2591 = vxpose.xlu0.b32.cont [11/16] %v904, 128
        %2592 = vxpose.xlu0.b32.cont [12/16] %v912, 128
        %2593 = vxpose.xlu0.b32.cont [13/16] %v920, 128
        %2594 = vxpose.xlu0.b32.cont [14/16] %v928, 128
        %2595 = vxpose.xlu0.b32.cont [15/16] %v936, 128
        %2596 = vxpose.xlu0.b32.end [16/16] %v944, 128
        %v2597 = vpop.trf.xlu0
        %v2598 = vpop.trf.xlu0
        %v2599 = vpop.trf.xlu0
        %v2600 = vpop.trf.xlu0
        %v2601 = vpop.trf.xlu0
        %v2602 = vpop.trf.xlu0
        %v2603 = vpop.trf.xlu0
        %v2604 = vpop.trf.xlu0
        %v2605 = vpop.trf.xlu0
        %v2606 = vpop.trf.xlu0
        %v2607 = vpop.trf.xlu0
        %v2608 = vpop.trf.xlu0
        %v2609 = vpop.trf.xlu0
        %v2610 = vpop.trf.xlu0
        %v2611 = vpop.trf.xlu0
        %v2612 = vpop.trf.xlu0
        %2613 = vxpose.xlu0.b32.start [1/16] %v825, 128
        %2614 = vxpose.xlu0.b32.cont [2/16] %v833, 128
        %2615 = vxpose.xlu0.b32.cont [3/16] %v841, 128
        %2616 = vxpose.xlu0.b32.cont [4/16] %v849, 128
        %2617 = vxpose.xlu0.b32.cont [5/16] %v857, 128
        %2618 = vxpose.xlu0.b32.cont [6/16] %v865, 128
        %2619 = vxpose.xlu0.b32.cont [7/16] %v873, 128
        %2620 = vxpose.xlu0.b32.cont [8/16] %v881, 128
        %2621 = vxpose.xlu0.b32.cont [9/16] %v889, 128
        %2622 = vxpose.xlu0.b32.cont [10/16] %v897, 128
        %2623 = vxpose.xlu0.b32.cont [11/16] %v905, 128
        %2624 = vxpose.xlu0.b32.cont [12/16] %v913, 128
        %2625 = vxpose.xlu0.b32.cont [13/16] %v921, 128
        %2626 = vxpose.xlu0.b32.cont [14/16] %v929, 128
        %2627 = vxpose.xlu0.b32.cont [15/16] %v937, 128
        %2628 = vxpose.xlu0.b32.end [16/16] %v945, 128
        %v2629 = vpop.trf.xlu0
        %v2630 = vpop.trf.xlu0
        %v2631 = vpop.trf.xlu0
        %v2632 = vpop.trf.xlu0
        %v2633 = vpop.trf.xlu0
        %v2634 = vpop.trf.xlu0
        %v2635 = vpop.trf.xlu0
        %v2636 = vpop.trf.xlu0
        %v2637 = vpop.trf.xlu0
        %v2638 = vpop.trf.xlu0
        %v2639 = vpop.trf.xlu0
        %v2640 = vpop.trf.xlu0
        %v2641 = vpop.trf.xlu0
        %v2642 = vpop.trf.xlu0
        %v2643 = vpop.trf.xlu0
        %v2644 = vpop.trf.xlu0
        %2645 = vxpose.xlu0.b32.start [1/16] %v826, 128
        %2646 = vxpose.xlu0.b32.cont [2/16] %v834, 128
        %2647 = vxpose.xlu0.b32.cont [3/16] %v842, 128
        %2648 = vxpose.xlu0.b32.cont [4/16] %v850, 128
        %2649 = vxpose.xlu0.b32.cont [5/16] %v858, 128
        %2650 = vxpose.xlu0.b32.cont [6/16] %v866, 128
        %2651 = vxpose.xlu0.b32.cont [7/16] %v874, 128
        %2652 = vxpose.xlu0.b32.cont [8/16] %v882, 128
        %2653 = vxpose.xlu0.b32.cont [9/16] %v890, 128
        %2654 = vxpose.xlu0.b32.cont [10/16] %v898, 128
        %2655 = vxpose.xlu0.b32.cont [11/16] %v906, 128
        %2656 = vxpose.xlu0.b32.cont [12/16] %v914, 128
        %2657 = vxpose.xlu0.b32.cont [13/16] %v922, 128
        %2658 = vxpose.xlu0.b32.cont [14/16] %v930, 128
        %2659 = vxpose.xlu0.b32.cont [15/16] %v938, 128
        %2660 = vxpose.xlu0.b32.end [16/16] %v946, 128
        %v2661 = vpop.trf.xlu0
        %v2662 = vpop.trf.xlu0
        %v2663 = vpop.trf.xlu0
        %v2664 = vpop.trf.xlu0
        %v2665 = vpop.trf.xlu0
        %v2666 = vpop.trf.xlu0
        %v2667 = vpop.trf.xlu0
        %v2668 = vpop.trf.xlu0
        %v2669 = vpop.trf.xlu0
        %v2670 = vpop.trf.xlu0
        %v2671 = vpop.trf.xlu0
        %v2672 = vpop.trf.xlu0
        %v2673 = vpop.trf.xlu0
        %v2674 = vpop.trf.xlu0
        %v2675 = vpop.trf.xlu0
        %v2676 = vpop.trf.xlu0
        %2677 = vxpose.xlu0.b32.start [1/16] %v827, 128
        %2678 = vxpose.xlu0.b32.cont [2/16] %v835, 128
        %2679 = vxpose.xlu0.b32.cont [3/16] %v843, 128
        %2680 = vxpose.xlu0.b32.cont [4/16] %v851, 128
        %2681 = vxpose.xlu0.b32.cont [5/16] %v859, 128
        %2682 = vxpose.xlu0.b32.cont [6/16] %v867, 128
        %2683 = vxpose.xlu0.b32.cont [7/16] %v875, 128
        %2684 = vxpose.xlu0.b32.cont [8/16] %v883, 128
        %2685 = vxpose.xlu0.b32.cont [9/16] %v891, 128
        %2686 = vxpose.xlu0.b32.cont [10/16] %v899, 128
        %2687 = vxpose.xlu0.b32.cont [11/16] %v907, 128
        %2688 = vxpose.xlu0.b32.cont [12/16] %v915, 128
        %2689 = vxpose.xlu0.b32.cont [13/16] %v923, 128
        %2690 = vxpose.xlu0.b32.cont [14/16] %v931, 128
        %2691 = vxpose.xlu0.b32.cont [15/16] %v939, 128
        %2692 = vxpose.xlu0.b32.end [16/16] %v947, 128
        %v2693 = vpop.trf.xlu0
        %v2694 = vpop.trf.xlu0
        %v2695 = vpop.trf.xlu0
        %v2696 = vpop.trf.xlu0
        %v2697 = vpop.trf.xlu0
        %v2698 = vpop.trf.xlu0
        %v2699 = vpop.trf.xlu0
        %v2700 = vpop.trf.xlu0
        %v2701 = vpop.trf.xlu0
        %v2702 = vpop.trf.xlu0
        %v2703 = vpop.trf.xlu0
        %v2704 = vpop.trf.xlu0
        %v2705 = vpop.trf.xlu0
        %v2706 = vpop.trf.xlu0
        %v2707 = vpop.trf.xlu0
        %v2708 = vpop.trf.xlu0
        %2709 = vxpose.xlu0.b32.start [1/16] %v828, 128
        %2710 = vxpose.xlu0.b32.cont [2/16] %v836, 128
        %2711 = vxpose.xlu0.b32.cont [3/16] %v844, 128
        %2712 = vxpose.xlu0.b32.cont [4/16] %v852, 128
        %2713 = vxpose.xlu0.b32.cont [5/16] %v860, 128
        %2714 = vxpose.xlu0.b32.cont [6/16] %v868, 128
        %2715 = vxpose.xlu0.b32.cont [7/16] %v876, 128
        %2716 = vxpose.xlu0.b32.cont [8/16] %v884, 128
        %2717 = vxpose.xlu0.b32.cont [9/16] %v892, 128
        %2718 = vxpose.xlu0.b32.cont [10/16] %v900, 128
        %2719 = vxpose.xlu0.b32.cont [11/16] %v908, 128
        %2720 = vxpose.xlu0.b32.cont [12/16] %v916, 128
        %2721 = vxpose.xlu0.b32.cont [13/16] %v924, 128
        %2722 = vxpose.xlu0.b32.cont [14/16] %v932, 128
        %2723 = vxpose.xlu0.b32.cont [15/16] %v940, 128
        %2724 = vxpose.xlu0.b32.end [16/16] %v948, 128
        %v2725 = vpop.trf.xlu0
        %v2726 = vpop.trf.xlu0
        %v2727 = vpop.trf.xlu0
        %v2728 = vpop.trf.xlu0
        %v2729 = vpop.trf.xlu0
        %v2730 = vpop.trf.xlu0
        %v2731 = vpop.trf.xlu0
        %v2732 = vpop.trf.xlu0
        %v2733 = vpop.trf.xlu0
        %v2734 = vpop.trf.xlu0
        %v2735 = vpop.trf.xlu0
        %v2736 = vpop.trf.xlu0
        %v2737 = vpop.trf.xlu0
        %v2738 = vpop.trf.xlu0
        %v2739 = vpop.trf.xlu0
        %v2740 = vpop.trf.xlu0
        %2741 = vxpose.xlu0.b32.start [1/16] %v949, 128
        %2742 = vxpose.xlu0.b32.cont [2/16] %v957, 128
        %2743 = vxpose.xlu0.b32.cont [3/16] %v965, 128
        %2744 = vxpose.xlu0.b32.cont [4/16] %v973, 128
        %2745 = vxpose.xlu0.b32.cont [5/16] %v981, 128
        %2746 = vxpose.xlu0.b32.cont [6/16] %v989, 128
        %2747 = vxpose.xlu0.b32.cont [7/16] %v997, 128
        %2748 = vxpose.xlu0.b32.cont [8/16] %v1005, 128
        %2749 = vxpose.xlu0.b32.cont [9/16] %v1013, 128
        %2750 = vxpose.xlu0.b32.cont [10/16] %v1021, 128
        %2751 = vxpose.xlu0.b32.cont [11/16] %v1029, 128
        %2752 = vxpose.xlu0.b32.cont [12/16] %v1037, 128
        %2753 = vxpose.xlu0.b32.cont [13/16] %v1045, 128
        %2754 = vxpose.xlu0.b32.cont [14/16] %v1053, 128
        %2755 = vxpose.xlu0.b32.cont [15/16] %v1061, 128
        %2756 = vxpose.xlu0.b32.end [16/16] %v1069, 128
        %v2757 = vpop.trf.xlu0
        %v2758 = vpop.trf.xlu0
        %v2759 = vpop.trf.xlu0
        %v2760 = vpop.trf.xlu0
        %v2761 = vpop.trf.xlu0
        %v2762 = vpop.trf.xlu0
        %v2763 = vpop.trf.xlu0
        %v2764 = vpop.trf.xlu0
        %v2765 = vpop.trf.xlu0
        %v2766 = vpop.trf.xlu0
        %v2767 = vpop.trf.xlu0
        %v2768 = vpop.trf.xlu0
        %v2769 = vpop.trf.xlu0
        %v2770 = vpop.trf.xlu0
        %v2771 = vpop.trf.xlu0
        %v2772 = vpop.trf.xlu0
        %2773 = vxpose.xlu0.b32.start [1/16] %v950, 128
        %2774 = vxpose.xlu0.b32.cont [2/16] %v958, 128
        %2775 = vxpose.xlu0.b32.cont [3/16] %v966, 128
        %2776 = vxpose.xlu0.b32.cont [4/16] %v974, 128
        %2777 = vxpose.xlu0.b32.cont [5/16] %v982, 128
        %2778 = vxpose.xlu0.b32.cont [6/16] %v990, 128
        %2779 = vxpose.xlu0.b32.cont [7/16] %v998, 128
        %2780 = vxpose.xlu0.b32.cont [8/16] %v1006, 128
        %2781 = vxpose.xlu0.b32.cont [9/16] %v1014, 128
        %2782 = vxpose.xlu0.b32.cont [10/16] %v1022, 128
        %2783 = vxpose.xlu0.b32.cont [11/16] %v1030, 128
        %2784 = vxpose.xlu0.b32.cont [12/16] %v1038, 128
        %2785 = vxpose.xlu0.b32.cont [13/16] %v1046, 128
        %2786 = vxpose.xlu0.b32.cont [14/16] %v1054, 128
        %2787 = vxpose.xlu0.b32.cont [15/16] %v1062, 128
        %2788 = vxpose.xlu0.b32.end [16/16] %v1070, 128
        %v2789 = vpop.trf.xlu0
        %v2790 = vpop.trf.xlu0
        %v2791 = vpop.trf.xlu0
        %v2792 = vpop.trf.xlu0
        %v2793 = vpop.trf.xlu0
        %v2794 = vpop.trf.xlu0
        %v2795 = vpop.trf.xlu0
        %v2796 = vpop.trf.xlu0
        %v2797 = vpop.trf.xlu0
        %v2798 = vpop.trf.xlu0
        %v2799 = vpop.trf.xlu0
        %v2800 = vpop.trf.xlu0
        %v2801 = vpop.trf.xlu0
        %v2802 = vpop.trf.xlu0
        %v2803 = vpop.trf.xlu0
        %v2804 = vpop.trf.xlu0
        %2805 = vxpose.xlu0.b32.start [1/16] %v951, 128
        %2806 = vxpose.xlu0.b32.cont [2/16] %v959, 128
        %2807 = vxpose.xlu0.b32.cont [3/16] %v967, 128
        %2808 = vxpose.xlu0.b32.cont [4/16] %v975, 128
        %2809 = vxpose.xlu0.b32.cont [5/16] %v983, 128
        %2810 = vxpose.xlu0.b32.cont [6/16] %v991, 128
        %2811 = vxpose.xlu0.b32.cont [7/16] %v999, 128
        %2812 = vxpose.xlu0.b32.cont [8/16] %v1007, 128
        %2813 = vxpose.xlu0.b32.cont [9/16] %v1015, 128
        %2814 = vxpose.xlu0.b32.cont [10/16] %v1023, 128
        %2815 = vxpose.xlu0.b32.cont [11/16] %v1031, 128
        %2816 = vxpose.xlu0.b32.cont [12/16] %v1039, 128
        %2817 = vxpose.xlu0.b32.cont [13/16] %v1047, 128
        %2818 = vxpose.xlu0.b32.cont [14/16] %v1055, 128
        %2819 = vxpose.xlu0.b32.cont [15/16] %v1063, 128
        %2820 = vxpose.xlu0.b32.end [16/16] %v1071, 128
        %v2821 = vpop.trf.xlu0
        %v2822 = vpop.trf.xlu0
        %v2823 = vpop.trf.xlu0
        %v2824 = vpop.trf.xlu0
        %v2825 = vpop.trf.xlu0
        %v2826 = vpop.trf.xlu0
        %v2827 = vpop.trf.xlu0
        %v2828 = vpop.trf.xlu0
        %v2829 = vpop.trf.xlu0
        %v2830 = vpop.trf.xlu0
        %v2831 = vpop.trf.xlu0
        %v2832 = vpop.trf.xlu0
        %v2833 = vpop.trf.xlu0
        %v2834 = vpop.trf.xlu0
        %v2835 = vpop.trf.xlu0
        %v2836 = vpop.trf.xlu0
        %2837 = vxpose.xlu0.b32.start [1/16] %v952, 128
        %2838 = vxpose.xlu0.b32.cont [2/16] %v960, 128
        %2839 = vxpose.xlu0.b32.cont [3/16] %v968, 128
        %2840 = vxpose.xlu0.b32.cont [4/16] %v976, 128
        %2841 = vxpose.xlu0.b32.cont [5/16] %v984, 128
        %2842 = vxpose.xlu0.b32.cont [6/16] %v992, 128
        %2843 = vxpose.xlu0.b32.cont [7/16] %v1000, 128
        %2844 = vxpose.xlu0.b32.cont [8/16] %v1008, 128
        %2845 = vxpose.xlu0.b32.cont [9/16] %v1016, 128
        %2846 = vxpose.xlu0.b32.cont [10/16] %v1024, 128
        %2847 = vxpose.xlu0.b32.cont [11/16] %v1032, 128
        %2848 = vxpose.xlu0.b32.cont [12/16] %v1040, 128
        %2849 = vxpose.xlu0.b32.cont [13/16] %v1048, 128
        %2850 = vxpose.xlu0.b32.cont [14/16] %v1056, 128
        %2851 = vxpose.xlu0.b32.cont [15/16] %v1064, 128
        %2852 = vxpose.xlu0.b32.end [16/16] %v1072, 128
        %v2853 = vpop.trf.xlu0
        %v2854 = vpop.trf.xlu0
        %v2855 = vpop.trf.xlu0
        %v2856 = vpop.trf.xlu0
        %v2857 = vpop.trf.xlu0
        %v2858 = vpop.trf.xlu0
        %v2859 = vpop.trf.xlu0
        %v2860 = vpop.trf.xlu0
        %v2861 = vpop.trf.xlu0
        %v2862 = vpop.trf.xlu0
        %v2863 = vpop.trf.xlu0
        %v2864 = vpop.trf.xlu0
        %v2865 = vpop.trf.xlu0
        %v2866 = vpop.trf.xlu0
        %v2867 = vpop.trf.xlu0
        %v2868 = vpop.trf.xlu0
        %2869 = vxpose.xlu0.b32.start [1/16] %v953, 128
        %2870 = vxpose.xlu0.b32.cont [2/16] %v961, 128
        %2871 = vxpose.xlu0.b32.cont [3/16] %v969, 128
        %2872 = vxpose.xlu0.b32.cont [4/16] %v977, 128
        %2873 = vxpose.xlu0.b32.cont [5/16] %v985, 128
        %2874 = vxpose.xlu0.b32.cont [6/16] %v993, 128
        %2875 = vxpose.xlu0.b32.cont [7/16] %v1001, 128
        %2876 = vxpose.xlu0.b32.cont [8/16] %v1009, 128
        %2877 = vxpose.xlu0.b32.cont [9/16] %v1017, 128
        %2878 = vxpose.xlu0.b32.cont [10/16] %v1025, 128
        %2879 = vxpose.xlu0.b32.cont [11/16] %v1033, 128
        %2880 = vxpose.xlu0.b32.cont [12/16] %v1041, 128
        %2881 = vxpose.xlu0.b32.cont [13/16] %v1049, 128
        %2882 = vxpose.xlu0.b32.cont [14/16] %v1057, 128
        %2883 = vxpose.xlu0.b32.cont [15/16] %v1065, 128
        %2884 = vxpose.xlu0.b32.end [16/16] %v1073, 128
        %v2885 = vpop.trf.xlu0
        %v2886 = vpop.trf.xlu0
        %v2887 = vpop.trf.xlu0
        %v2888 = vpop.trf.xlu0
        %v2889 = vpop.trf.xlu0
        %v2890 = vpop.trf.xlu0
        %v2891 = vpop.trf.xlu0
        %v2892 = vpop.trf.xlu0
        %v2893 = vpop.trf.xlu0
        %v2894 = vpop.trf.xlu0
        %v2895 = vpop.trf.xlu0
        %v2896 = vpop.trf.xlu0
        %v2897 = vpop.trf.xlu0
        %v2898 = vpop.trf.xlu0
        %v2899 = vpop.trf.xlu0
        %v2900 = vpop.trf.xlu0
        %2901 = vxpose.xlu0.b32.start [1/16] %v954, 128
        %2902 = vxpose.xlu0.b32.cont [2/16] %v962, 128
        %2903 = vxpose.xlu0.b32.cont [3/16] %v970, 128
        %2904 = vxpose.xlu0.b32.cont [4/16] %v978, 128
        %2905 = vxpose.xlu0.b32.cont [5/16] %v986, 128
        %2906 = vxpose.xlu0.b32.cont [6/16] %v994, 128
        %2907 = vxpose.xlu0.b32.cont [7/16] %v1002, 128
        %2908 = vxpose.xlu0.b32.cont [8/16] %v1010, 128
        %2909 = vxpose.xlu0.b32.cont [9/16] %v1018, 128
        %2910 = vxpose.xlu0.b32.cont [10/16] %v1026, 128
        %2911 = vxpose.xlu0.b32.cont [11/16] %v1034, 128
        %2912 = vxpose.xlu0.b32.cont [12/16] %v1042, 128
        %2913 = vxpose.xlu0.b32.cont [13/16] %v1050, 128
        %2914 = vxpose.xlu0.b32.cont [14/16] %v1058, 128
        %2915 = vxpose.xlu0.b32.cont [15/16] %v1066, 128
        %2916 = vxpose.xlu0.b32.end [16/16] %v1074, 128
        %v2917 = vpop.trf.xlu0
        %v2918 = vpop.trf.xlu0
        %v2919 = vpop.trf.xlu0
        %v2920 = vpop.trf.xlu0
        %v2921 = vpop.trf.xlu0
        %v2922 = vpop.trf.xlu0
        %v2923 = vpop.trf.xlu0
        %v2924 = vpop.trf.xlu0
        %v2925 = vpop.trf.xlu0
        %v2926 = vpop.trf.xlu0
        %v2927 = vpop.trf.xlu0
        %v2928 = vpop.trf.xlu0
        %v2929 = vpop.trf.xlu0
        %v2930 = vpop.trf.xlu0
        %v2931 = vpop.trf.xlu0
        %v2932 = vpop.trf.xlu0
        %2933 = vxpose.xlu0.b32.start [1/16] %v955, 128
        %2934 = vxpose.xlu0.b32.cont [2/16] %v963, 128
        %2935 = vxpose.xlu0.b32.cont [3/16] %v971, 128
        %2936 = vxpose.xlu0.b32.cont [4/16] %v979, 128
        %2937 = vxpose.xlu0.b32.cont [5/16] %v987, 128
        %2938 = vxpose.xlu0.b32.cont [6/16] %v995, 128
        %2939 = vxpose.xlu0.b32.cont [7/16] %v1003, 128
        %2940 = vxpose.xlu0.b32.cont [8/16] %v1011, 128
        %2941 = vxpose.xlu0.b32.cont [9/16] %v1019, 128
        %2942 = vxpose.xlu0.b32.cont [10/16] %v1027, 128
        %2943 = vxpose.xlu0.b32.cont [11/16] %v1035, 128
        %2944 = vxpose.xlu0.b32.cont [12/16] %v1043, 128
        %2945 = vxpose.xlu0.b32.cont [13/16] %v1051, 128
        %2946 = vxpose.xlu0.b32.cont [14/16] %v1059, 128
        %2947 = vxpose.xlu0.b32.cont [15/16] %v1067, 128
        %2948 = vxpose.xlu0.b32.end [16/16] %v1075, 128
        %v2949 = vpop.trf.xlu0
        %v2950 = vpop.trf.xlu0
        %v2951 = vpop.trf.xlu0
        %v2952 = vpop.trf.xlu0
        %v2953 = vpop.trf.xlu0
        %v2954 = vpop.trf.xlu0
        %v2955 = vpop.trf.xlu0
        %v2956 = vpop.trf.xlu0
        %v2957 = vpop.trf.xlu0
        %v2958 = vpop.trf.xlu0
        %v2959 = vpop.trf.xlu0
        %v2960 = vpop.trf.xlu0
        %v2961 = vpop.trf.xlu0
        %v2962 = vpop.trf.xlu0
        %v2963 = vpop.trf.xlu0
        %v2964 = vpop.trf.xlu0
        %2965 = vxpose.xlu0.b32.start [1/16] %v956, 128
        %2966 = vxpose.xlu0.b32.cont [2/16] %v964, 128
        %2967 = vxpose.xlu0.b32.cont [3/16] %v972, 128
        %2968 = vxpose.xlu0.b32.cont [4/16] %v980, 128
        %2969 = vxpose.xlu0.b32.cont [5/16] %v988, 128
        %2970 = vxpose.xlu0.b32.cont [6/16] %v996, 128
        %2971 = vxpose.xlu0.b32.cont [7/16] %v1004, 128
        %2972 = vxpose.xlu0.b32.cont [8/16] %v1012, 128
        %2973 = vxpose.xlu0.b32.cont [9/16] %v1020, 128
        %2974 = vxpose.xlu0.b32.cont [10/16] %v1028, 128
        %2975 = vxpose.xlu0.b32.cont [11/16] %v1036, 128
        %2976 = vxpose.xlu0.b32.cont [12/16] %v1044, 128
        %2977 = vxpose.xlu0.b32.cont [13/16] %v1052, 128
        %2978 = vxpose.xlu0.b32.cont [14/16] %v1060, 128
        %2979 = vxpose.xlu0.b32.cont [15/16] %v1068, 128
        %2980 = vxpose.xlu0.b32.end [16/16] %v1076, 128
        %v2981 = vpop.trf.xlu0
        %v2982 = vpop.trf.xlu0
        %v2983 = vpop.trf.xlu0
        %v2984 = vpop.trf.xlu0
        %v2985 = vpop.trf.xlu0
        %v2986 = vpop.trf.xlu0
        %v2987 = vpop.trf.xlu0
        %v2988 = vpop.trf.xlu0
        %v2989 = vpop.trf.xlu0
        %v2990 = vpop.trf.xlu0
        %v2991 = vpop.trf.xlu0
        %v2992 = vpop.trf.xlu0
        %v2993 = vpop.trf.xlu0
        %v2994 = vpop.trf.xlu0
        %v2995 = vpop.trf.xlu0
        %v2996 = vpop.trf.xlu0
        %2997 = vxpose.xlu0.b32.start [1/16] %v1077, 128
        %2998 = vxpose.xlu0.b32.cont [2/16] %v1085, 128
        %2999 = vxpose.xlu0.b32.cont [3/16] %v1093, 128
        %3000 = vxpose.xlu0.b32.cont [4/16] %v1101, 128
        %3001 = vxpose.xlu0.b32.cont [5/16] %v1109, 128
        %3002 = vxpose.xlu0.b32.cont [6/16] %v1117, 128
        %3003 = vxpose.xlu0.b32.cont [7/16] %v1125, 128
        %3004 = vxpose.xlu0.b32.cont [8/16] %v1133, 128
        %3005 = vxpose.xlu0.b32.cont [9/16] %v1141, 128
        %3006 = vxpose.xlu0.b32.cont [10/16] %v1149, 128
        %3007 = vxpose.xlu0.b32.cont [11/16] %v1157, 128
        %3008 = vxpose.xlu0.b32.cont [12/16] %v1165, 128
        %3009 = vxpose.xlu0.b32.cont [13/16] %v1173, 128
        %3010 = vxpose.xlu0.b32.cont [14/16] %v1181, 128
        %3011 = vxpose.xlu0.b32.cont [15/16] %v1189, 128
        %3012 = vxpose.xlu0.b32.end [16/16] %v1197, 128
        %v3013 = vpop.trf.xlu0
        %v3014 = vpop.trf.xlu0
        %v3015 = vpop.trf.xlu0
        %v3016 = vpop.trf.xlu0
        %v3017 = vpop.trf.xlu0
        %v3018 = vpop.trf.xlu0
        %v3019 = vpop.trf.xlu0
        %v3020 = vpop.trf.xlu0
        %v3021 = vpop.trf.xlu0
        %v3022 = vpop.trf.xlu0
        %v3023 = vpop.trf.xlu0
        %v3024 = vpop.trf.xlu0
        %v3025 = vpop.trf.xlu0
        %v3026 = vpop.trf.xlu0
        %v3027 = vpop.trf.xlu0
        %v3028 = vpop.trf.xlu0
        %3029 = vxpose.xlu0.b32.start [1/16] %v1078, 128
        %3030 = vxpose.xlu0.b32.cont [2/16] %v1086, 128
        %3031 = vxpose.xlu0.b32.cont [3/16] %v1094, 128
        %3032 = vxpose.xlu0.b32.cont [4/16] %v1102, 128
        %3033 = vxpose.xlu0.b32.cont [5/16] %v1110, 128
        %3034 = vxpose.xlu0.b32.cont [6/16] %v1118, 128
        %3035 = vxpose.xlu0.b32.cont [7/16] %v1126, 128
        %3036 = vxpose.xlu0.b32.cont [8/16] %v1134, 128
        %3037 = vxpose.xlu0.b32.cont [9/16] %v1142, 128
        %3038 = vxpose.xlu0.b32.cont [10/16] %v1150, 128
        %3039 = vxpose.xlu0.b32.cont [11/16] %v1158, 128
        %3040 = vxpose.xlu0.b32.cont [12/16] %v1166, 128
        %3041 = vxpose.xlu0.b32.cont [13/16] %v1174, 128
        %3042 = vxpose.xlu0.b32.cont [14/16] %v1182, 128
        %3043 = vxpose.xlu0.b32.cont [15/16] %v1190, 128
        %3044 = vxpose.xlu0.b32.end [16/16] %v1198, 128
        %v3045 = vpop.trf.xlu0
        %v3046 = vpop.trf.xlu0
        %v3047 = vpop.trf.xlu0
        %v3048 = vpop.trf.xlu0
        %v3049 = vpop.trf.xlu0
        %v3050 = vpop.trf.xlu0
        %v3051 = vpop.trf.xlu0
        %v3052 = vpop.trf.xlu0
        %v3053 = vpop.trf.xlu0
        %v3054 = vpop.trf.xlu0
        %v3055 = vpop.trf.xlu0
        %v3056 = vpop.trf.xlu0
        %v3057 = vpop.trf.xlu0
        %v3058 = vpop.trf.xlu0
        %v3059 = vpop.trf.xlu0
        %v3060 = vpop.trf.xlu0
        %3061 = vxpose.xlu0.b32.start [1/16] %v1079, 128
        %3062 = vxpose.xlu0.b32.cont [2/16] %v1087, 128
        %3063 = vxpose.xlu0.b32.cont [3/16] %v1095, 128
        %3064 = vxpose.xlu0.b32.cont [4/16] %v1103, 128
        %3065 = vxpose.xlu0.b32.cont [5/16] %v1111, 128
        %3066 = vxpose.xlu0.b32.cont [6/16] %v1119, 128
        %3067 = vxpose.xlu0.b32.cont [7/16] %v1127, 128
        %3068 = vxpose.xlu0.b32.cont [8/16] %v1135, 128
        %3069 = vxpose.xlu0.b32.cont [9/16] %v1143, 128
        %3070 = vxpose.xlu0.b32.cont [10/16] %v1151, 128
        %3071 = vxpose.xlu0.b32.cont [11/16] %v1159, 128
        %3072 = vxpose.xlu0.b32.cont [12/16] %v1167, 128
        %3073 = vxpose.xlu0.b32.cont [13/16] %v1175, 128
        %3074 = vxpose.xlu0.b32.cont [14/16] %v1183, 128
        %3075 = vxpose.xlu0.b32.cont [15/16] %v1191, 128
        %3076 = vxpose.xlu0.b32.end [16/16] %v1199, 128
        %v3077 = vpop.trf.xlu0
        %v3078 = vpop.trf.xlu0
        %v3079 = vpop.trf.xlu0
        %v3080 = vpop.trf.xlu0
        %v3081 = vpop.trf.xlu0
        %v3082 = vpop.trf.xlu0
        %v3083 = vpop.trf.xlu0
        %v3084 = vpop.trf.xlu0
        %v3085 = vpop.trf.xlu0
        %v3086 = vpop.trf.xlu0
        %v3087 = vpop.trf.xlu0
        %v3088 = vpop.trf.xlu0
        %v3089 = vpop.trf.xlu0
        %v3090 = vpop.trf.xlu0
        %v3091 = vpop.trf.xlu0
        %v3092 = vpop.trf.xlu0
        %3093 = vxpose.xlu0.b32.start [1/16] %v1080, 128
        %3094 = vxpose.xlu0.b32.cont [2/16] %v1088, 128
        %3095 = vxpose.xlu0.b32.cont [3/16] %v1096, 128
        %3096 = vxpose.xlu0.b32.cont [4/16] %v1104, 128
        %3097 = vxpose.xlu0.b32.cont [5/16] %v1112, 128
        %3098 = vxpose.xlu0.b32.cont [6/16] %v1120, 128
        %3099 = vxpose.xlu0.b32.cont [7/16] %v1128, 128
        %3100 = vxpose.xlu0.b32.cont [8/16] %v1136, 128
        %3101 = vxpose.xlu0.b32.cont [9/16] %v1144, 128
        %3102 = vxpose.xlu0.b32.cont [10/16] %v1152, 128
        %3103 = vxpose.xlu0.b32.cont [11/16] %v1160, 128
        %3104 = vxpose.xlu0.b32.cont [12/16] %v1168, 128
        %3105 = vxpose.xlu0.b32.cont [13/16] %v1176, 128
        %3106 = vxpose.xlu0.b32.cont [14/16] %v1184, 128
        %3107 = vxpose.xlu0.b32.cont [15/16] %v1192, 128
        %3108 = vxpose.xlu0.b32.end [16/16] %v1200, 128
        %v3109 = vpop.trf.xlu0
        %v3110 = vpop.trf.xlu0
        %v3111 = vpop.trf.xlu0
        %v3112 = vpop.trf.xlu0
        %v3113 = vpop.trf.xlu0
        %v3114 = vpop.trf.xlu0
        %v3115 = vpop.trf.xlu0
        %v3116 = vpop.trf.xlu0
        %v3117 = vpop.trf.xlu0
        %v3118 = vpop.trf.xlu0
        %v3119 = vpop.trf.xlu0
        %v3120 = vpop.trf.xlu0
        %v3121 = vpop.trf.xlu0
        %v3122 = vpop.trf.xlu0
        %v3123 = vpop.trf.xlu0
        %v3124 = vpop.trf.xlu0
        %3125 = vxpose.xlu0.b32.start [1/16] %v1081, 128
        %3126 = vxpose.xlu0.b32.cont [2/16] %v1089, 128
        %3127 = vxpose.xlu0.b32.cont [3/16] %v1097, 128
        %3128 = vxpose.xlu0.b32.cont [4/16] %v1105, 128
        %3129 = vxpose.xlu0.b32.cont [5/16] %v1113, 128
        %3130 = vxpose.xlu0.b32.cont [6/16] %v1121, 128
        %3131 = vxpose.xlu0.b32.cont [7/16] %v1129, 128
        %3132 = vxpose.xlu0.b32.cont [8/16] %v1137, 128
        %3133 = vxpose.xlu0.b32.cont [9/16] %v1145, 128
        %3134 = vxpose.xlu0.b32.cont [10/16] %v1153, 128
        %3135 = vxpose.xlu0.b32.cont [11/16] %v1161, 128
        %3136 = vxpose.xlu0.b32.cont [12/16] %v1169, 128
        %3137 = vxpose.xlu0.b32.cont [13/16] %v1177, 128
        %3138 = vxpose.xlu0.b32.cont [14/16] %v1185, 128
        %3139 = vxpose.xlu0.b32.cont [15/16] %v1193, 128
        %3140 = vxpose.xlu0.b32.end [16/16] %v1201, 128
        %v3141 = vpop.trf.xlu0
        %v3142 = vpop.trf.xlu0
        %v3143 = vpop.trf.xlu0
        %v3144 = vpop.trf.xlu0
        %v3145 = vpop.trf.xlu0
        %v3146 = vpop.trf.xlu0
        %v3147 = vpop.trf.xlu0
        %v3148 = vpop.trf.xlu0
        %v3149 = vpop.trf.xlu0
        %v3150 = vpop.trf.xlu0
        %v3151 = vpop.trf.xlu0
        %v3152 = vpop.trf.xlu0
        %v3153 = vpop.trf.xlu0
        %v3154 = vpop.trf.xlu0
        %v3155 = vpop.trf.xlu0
        %v3156 = vpop.trf.xlu0
        %3157 = vxpose.xlu0.b32.start [1/16] %v1082, 128
        %3158 = vxpose.xlu0.b32.cont [2/16] %v1090, 128
        %3159 = vxpose.xlu0.b32.cont [3/16] %v1098, 128
        %3160 = vxpose.xlu0.b32.cont [4/16] %v1106, 128
        %3161 = vxpose.xlu0.b32.cont [5/16] %v1114, 128
        %3162 = vxpose.xlu0.b32.cont [6/16] %v1122, 128
        %3163 = vxpose.xlu0.b32.cont [7/16] %v1130, 128
        %3164 = vxpose.xlu0.b32.cont [8/16] %v1138, 128
        %3165 = vxpose.xlu0.b32.cont [9/16] %v1146, 128
        %3166 = vxpose.xlu0.b32.cont [10/16] %v1154, 128
        %3167 = vxpose.xlu0.b32.cont [11/16] %v1162, 128
        %3168 = vxpose.xlu0.b32.cont [12/16] %v1170, 128
        %3169 = vxpose.xlu0.b32.cont [13/16] %v1178, 128
        %3170 = vxpose.xlu0.b32.cont [14/16] %v1186, 128
        %3171 = vxpose.xlu0.b32.cont [15/16] %v1194, 128
        %3172 = vxpose.xlu0.b32.end [16/16] %v1202, 128
        %v3173 = vpop.trf.xlu0
        %v3174 = vpop.trf.xlu0
        %v3175 = vpop.trf.xlu0
        %v3176 = vpop.trf.xlu0
        %v3177 = vpop.trf.xlu0
        %v3178 = vpop.trf.xlu0
        %v3179 = vpop.trf.xlu0
        %v3180 = vpop.trf.xlu0
        %v3181 = vpop.trf.xlu0
        %v3182 = vpop.trf.xlu0
        %v3183 = vpop.trf.xlu0
        %v3184 = vpop.trf.xlu0
        %v3185 = vpop.trf.xlu0
        %v3186 = vpop.trf.xlu0
        %v3187 = vpop.trf.xlu0
        %v3188 = vpop.trf.xlu0
        %3189 = vxpose.xlu0.b32.start [1/16] %v1083, 128
        %3190 = vxpose.xlu0.b32.cont [2/16] %v1091, 128
        %3191 = vxpose.xlu0.b32.cont [3/16] %v1099, 128
        %3192 = vxpose.xlu0.b32.cont [4/16] %v1107, 128
        %3193 = vxpose.xlu0.b32.cont [5/16] %v1115, 128
        %3194 = vxpose.xlu0.b32.cont [6/16] %v1123, 128
        %3195 = vxpose.xlu0.b32.cont [7/16] %v1131, 128
        %3196 = vxpose.xlu0.b32.cont [8/16] %v1139, 128
        %3197 = vxpose.xlu0.b32.cont [9/16] %v1147, 128
        %3198 = vxpose.xlu0.b32.cont [10/16] %v1155, 128
        %3199 = vxpose.xlu0.b32.cont [11/16] %v1163, 128
        %3200 = vxpose.xlu0.b32.cont [12/16] %v1171, 128
        %3201 = vxpose.xlu0.b32.cont [13/16] %v1179, 128
        %3202 = vxpose.xlu0.b32.cont [14/16] %v1187, 128
        %3203 = vxpose.xlu0.b32.cont [15/16] %v1195, 128
        %3204 = vxpose.xlu0.b32.end [16/16] %v1203, 128
        %v3205 = vpop.trf.xlu0
        %v3206 = vpop.trf.xlu0
        %v3207 = vpop.trf.xlu0
        %v3208 = vpop.trf.xlu0
        %v3209 = vpop.trf.xlu0
        %v3210 = vpop.trf.xlu0
        %v3211 = vpop.trf.xlu0
        %v3212 = vpop.trf.xlu0
        %v3213 = vpop.trf.xlu0
        %v3214 = vpop.trf.xlu0
        %v3215 = vpop.trf.xlu0
        %v3216 = vpop.trf.xlu0
        %v3217 = vpop.trf.xlu0
        %v3218 = vpop.trf.xlu0
        %v3219 = vpop.trf.xlu0
        %v3220 = vpop.trf.xlu0
        %3221 = vxpose.xlu0.b32.start [1/16] %v1084, 128
        %3222 = vxpose.xlu0.b32.cont [2/16] %v1092, 128
        %3223 = vxpose.xlu0.b32.cont [3/16] %v1100, 128
        %3224 = vxpose.xlu0.b32.cont [4/16] %v1108, 128
        %3225 = vxpose.xlu0.b32.cont [5/16] %v1116, 128
        %3226 = vxpose.xlu0.b32.cont [6/16] %v1124, 128
        %3227 = vxpose.xlu0.b32.cont [7/16] %v1132, 128
        %3228 = vxpose.xlu0.b32.cont [8/16] %v1140, 128
        %3229 = vxpose.xlu0.b32.cont [9/16] %v1148, 128
        %3230 = vxpose.xlu0.b32.cont [10/16] %v1156, 128
        %3231 = vxpose.xlu0.b32.cont [11/16] %v1164, 128
        %3232 = vxpose.xlu0.b32.cont [12/16] %v1172, 128
        %3233 = vxpose.xlu0.b32.cont [13/16] %v1180, 128
        %3234 = vxpose.xlu0.b32.cont [14/16] %v1188, 128
        %3235 = vxpose.xlu0.b32.cont [15/16] %v1196, 128
        %3236 = vxpose.xlu0.b32.end [16/16] %v1204, 128
        %v3237 = vpop.trf.xlu0
        %v3238 = vpop.trf.xlu0
        %v3239 = vpop.trf.xlu0
        %v3240 = vpop.trf.xlu0
        %v3241 = vpop.trf.xlu0
        %v3242 = vpop.trf.xlu0
        %v3243 = vpop.trf.xlu0
        %v3244 = vpop.trf.xlu0
        %v3245 = vpop.trf.xlu0
        %v3246 = vpop.trf.xlu0
        %v3247 = vpop.trf.xlu0
        %v3248 = vpop.trf.xlu0
        %v3249 = vpop.trf.xlu0
        %v3250 = vpop.trf.xlu0
        %v3251 = vpop.trf.xlu0
        %v3252 = vpop.trf.xlu0
        %3253 = vst [vmem:[%s160] sm:$0xff] %v1221
        %3254 = vst [vmem:[%s160 + $0x8] sm:$0xff] %v1477
        %3255 = vst [vmem:[%s160 + $0x10] sm:$0xff] %v1733
        %3256 = vst [vmem:[%s160 + $0x18] sm:$0xff] %v1989
        %3257 = vst [vmem:[%s160 + $0x20] sm:$0xff] %v2245
        %3258 = vst [vmem:[%s160 + $0x28] sm:$0xff] %v2501
        %3259 = vst [vmem:[%s160 + $0x30] sm:$0xff] %v2757
        %3260 = vst [vmem:[%s160 + $0x38] sm:$0xff] %v3013
        %3261 = vst [vmem:[%s160 + $0x40] sm:$0xff] %v1222
        %3262 = vst [vmem:[%s160 + $0x48] sm:$0xff] %v1478
        %3263 = vst [vmem:[%s160 + $0x50] sm:$0xff] %v1734
        %3264 = vst [vmem:[%s160 + $0x58] sm:$0xff] %v1990
        %3265 = vst [vmem:[%s160 + $0x60] sm:$0xff] %v2246
        %3266 = vst [vmem:[%s160 + $0x68] sm:$0xff] %v2502
        %3267 = vst [vmem:[%s160 + $0x70] sm:$0xff] %v2758
        %3268 = vst [vmem:[%s160 + $0x78] sm:$0xff] %v3014
        %3269 = vst [vmem:[%s160 + $0x80] sm:$0xff] %v1223
        %3270 = vst [vmem:[%s160 + $0x88] sm:$0xff] %v1479
        %3271 = vst [vmem:[%s160 + $0x90] sm:$0xff] %v1735
        %3272 = vst [vmem:[%s160 + $0x98] sm:$0xff] %v1991
        %3273 = vst [vmem:[%s160 + $0xa0] sm:$0xff] %v2247
        %3274 = vst [vmem:[%s160 + $0xa8] sm:$0xff] %v2503
        %3275 = vst [vmem:[%s160 + $0xb0] sm:$0xff] %v2759
        %3276 = vst [vmem:[%s160 + $0xb8] sm:$0xff] %v3015
        %3277 = vst [vmem:[%s160 + $0xc0] sm:$0xff] %v1224
        %3278 = vst [vmem:[%s160 + $0xc8] sm:$0xff] %v1480
        %3279 = vst [vmem:[%s160 + $0xd0] sm:$0xff] %v1736
        %3280 = vst [vmem:[%s160 + $0xd8] sm:$0xff] %v1992
        %3281 = vst [vmem:[%s160 + $0xe0] sm:$0xff] %v2248
        %3282 = vst [vmem:[%s160 + $0xe8] sm:$0xff] %v2504
        %3283 = vst [vmem:[%s160 + $0xf0] sm:$0xff] %v2760
        %3284 = vst [vmem:[%s160 + $0xf8] sm:$0xff] %v3016
        %3285 = vst [vmem:[%s160 + $0x100] sm:$0xff] %v1225
        %3286 = vst [vmem:[%s160 + $0x108] sm:$0xff] %v1481
        %3287 = vst [vmem:[%s160 + $0x110] sm:$0xff] %v1737
        %3288 = vst [vmem:[%s160 + $0x118] sm:$0xff] %v1993
        %3289 = vst [vmem:[%s160 + $0x120] sm:$0xff] %v2249
        %3290 = vst [vmem:[%s160 + $0x128] sm:$0xff] %v2505
        %3291 = vst [vmem:[%s160 + $0x130] sm:$0xff] %v2761
        %3292 = vst [vmem:[%s160 + $0x138] sm:$0xff] %v3017
        %3293 = vst [vmem:[%s160 + $0x140] sm:$0xff] %v1226
        %3294 = vst [vmem:[%s160 + $0x148] sm:$0xff] %v1482
        %3295 = vst [vmem:[%s160 + $0x150] sm:$0xff] %v1738
        %3296 = vst [vmem:[%s160 + $0x158] sm:$0xff] %v1994
        %3297 = vst [vmem:[%s160 + $0x160] sm:$0xff] %v2250
        %3298 = vst [vmem:[%s160 + $0x168] sm:$0xff] %v2506
        %3299 = vst [vmem:[%s160 + $0x170] sm:$0xff] %v2762
        %3300 = vst [vmem:[%s160 + $0x178] sm:$0xff] %v3018
        %3301 = vst [vmem:[%s160 + $0x180] sm:$0xff] %v1227
        %3302 = vst [vmem:[%s160 + $0x188] sm:$0xff] %v1483
        %3303 = vst [vmem:[%s160 + $0x190] sm:$0xff] %v1739
        %3304 = vst [vmem:[%s160 + $0x198] sm:$0xff] %v1995
        %3305 = vst [vmem:[%s160 + $0x1a0] sm:$0xff] %v2251
        %3306 = vst [vmem:[%s160 + $0x1a8] sm:$0xff] %v2507
        %3307 = vst [vmem:[%s160 + $0x1b0] sm:$0xff] %v2763
        %3308 = vst [vmem:[%s160 + $0x1b8] sm:$0xff] %v3019
        %3309 = vst [vmem:[%s160 + $0x1c0] sm:$0xff] %v1228
        %3310 = vst [vmem:[%s160 + $0x1c8] sm:$0xff] %v1484
        %3311 = vst [vmem:[%s160 + $0x1d0] sm:$0xff] %v1740
        %3312 = vst [vmem:[%s160 + $0x1d8] sm:$0xff] %v1996
        %3313 = vst [vmem:[%s160 + $0x1e0] sm:$0xff] %v2252
        %3314 = vst [vmem:[%s160 + $0x1e8] sm:$0xff] %v2508
        %3315 = vst [vmem:[%s160 + $0x1f0] sm:$0xff] %v2764
        %3316 = vst [vmem:[%s160 + $0x1f8] sm:$0xff] %v3020
        %3317 = vst [vmem:[%s160 + $0x200] sm:$0xff] %v1229
        %3318 = vst [vmem:[%s160 + $0x208] sm:$0xff] %v1485
        %3319 = vst [vmem:[%s160 + $0x210] sm:$0xff] %v1741
        %3320 = vst [vmem:[%s160 + $0x218] sm:$0xff] %v1997
        %3321 = vst [vmem:[%s160 + $0x220] sm:$0xff] %v2253
        %3322 = vst [vmem:[%s160 + $0x228] sm:$0xff] %v2509
        %3323 = vst [vmem:[%s160 + $0x230] sm:$0xff] %v2765
        %3324 = vst [vmem:[%s160 + $0x238] sm:$0xff] %v3021
        %3325 = vst [vmem:[%s160 + $0x240] sm:$0xff] %v1230
        %3326 = vst [vmem:[%s160 + $0x248] sm:$0xff] %v1486
        %3327 = vst [vmem:[%s160 + $0x250] sm:$0xff] %v1742
        %3328 = vst [vmem:[%s160 + $0x258] sm:$0xff] %v1998
        %3329 = vst [vmem:[%s160 + $0x260] sm:$0xff] %v2254
        %3330 = vst [vmem:[%s160 + $0x268] sm:$0xff] %v2510
        %3331 = vst [vmem:[%s160 + $0x270] sm:$0xff] %v2766
        %3332 = vst [vmem:[%s160 + $0x278] sm:$0xff] %v3022
        %3333 = vst [vmem:[%s160 + $0x280] sm:$0xff] %v1231
        %3334 = vst [vmem:[%s160 + $0x288] sm:$0xff] %v1487
        %3335 = vst [vmem:[%s160 + $0x290] sm:$0xff] %v1743
        %3336 = vst [vmem:[%s160 + $0x298] sm:$0xff] %v1999
        %3337 = vst [vmem:[%s160 + $0x2a0] sm:$0xff] %v2255
        %3338 = vst [vmem:[%s160 + $0x2a8] sm:$0xff] %v2511
        %3339 = vst [vmem:[%s160 + $0x2b0] sm:$0xff] %v2767
        %3340 = vst [vmem:[%s160 + $0x2b8] sm:$0xff] %v3023
        %3341 = vst [vmem:[%s160 + $0x2c0] sm:$0xff] %v1232
        %3342 = vst [vmem:[%s160 + $0x2c8] sm:$0xff] %v1488
        %3343 = vst [vmem:[%s160 + $0x2d0] sm:$0xff] %v1744
        %3344 = vst [vmem:[%s160 + $0x2d8] sm:$0xff] %v2000
        %3345 = vst [vmem:[%s160 + $0x2e0] sm:$0xff] %v2256
        %3346 = vst [vmem:[%s160 + $0x2e8] sm:$0xff] %v2512
        %3347 = vst [vmem:[%s160 + $0x2f0] sm:$0xff] %v2768
        %3348 = vst [vmem:[%s160 + $0x2f8] sm:$0xff] %v3024
        %3349 = vst [vmem:[%s160 + $0x300] sm:$0xff] %v1233
        %3350 = vst [vmem:[%s160 + $0x308] sm:$0xff] %v1489
        %3351 = vst [vmem:[%s160 + $0x310] sm:$0xff] %v1745
        %3352 = vst [vmem:[%s160 + $0x318] sm:$0xff] %v2001
        %3353 = vst [vmem:[%s160 + $0x320] sm:$0xff] %v2257
        %3354 = vst [vmem:[%s160 + $0x328] sm:$0xff] %v2513
        %3355 = vst [vmem:[%s160 + $0x330] sm:$0xff] %v2769
        %3356 = vst [vmem:[%s160 + $0x338] sm:$0xff] %v3025
        %3357 = vst [vmem:[%s160 + $0x340] sm:$0xff] %v1234
        %3358 = vst [vmem:[%s160 + $0x348] sm:$0xff] %v1490
        %3359 = vst [vmem:[%s160 + $0x350] sm:$0xff] %v1746
        %3360 = vst [vmem:[%s160 + $0x358] sm:$0xff] %v2002
        %3361 = vst [vmem:[%s160 + $0x360] sm:$0xff] %v2258
        %3362 = vst [vmem:[%s160 + $0x368] sm:$0xff] %v2514
        %3363 = vst [vmem:[%s160 + $0x370] sm:$0xff] %v2770
        %3364 = vst [vmem:[%s160 + $0x378] sm:$0xff] %v3026
        %3365 = vst [vmem:[%s160 + $0x380] sm:$0xff] %v1235
        %3366 = vst [vmem:[%s160 + $0x388] sm:$0xff] %v1491
        %3367 = vst [vmem:[%s160 + $0x390] sm:$0xff] %v1747
        %3368 = vst [vmem:[%s160 + $0x398] sm:$0xff] %v2003
        %3369 = vst [vmem:[%s160 + $0x3a0] sm:$0xff] %v2259
        %3370 = vst [vmem:[%s160 + $0x3a8] sm:$0xff] %v2515
        %3371 = vst [vmem:[%s160 + $0x3b0] sm:$0xff] %v2771
        %3372 = vst [vmem:[%s160 + $0x3b8] sm:$0xff] %v3027
        %3373 = vst [vmem:[%s160 + $0x3c0] sm:$0xff] %v1236
        %3374 = vst [vmem:[%s160 + $0x3c8] sm:$0xff] %v1492
        %3375 = vst [vmem:[%s160 + $0x3d0] sm:$0xff] %v1748
        %3376 = vst [vmem:[%s160 + $0x3d8] sm:$0xff] %v2004
        %3377 = vst [vmem:[%s160 + $0x3e0] sm:$0xff] %v2260
        %3378 = vst [vmem:[%s160 + $0x3e8] sm:$0xff] %v2516
        %3379 = vst [vmem:[%s160 + $0x3f0] sm:$0xff] %v2772
        %3380 = vst [vmem:[%s160 + $0x3f8] sm:$0xff] %v3028
        %3381 = vst [vmem:[%s160 + $0x400] sm:$0xff] %v1253
        %3382 = vst [vmem:[%s160 + $0x408] sm:$0xff] %v1509
        %3383 = vst [vmem:[%s160 + $0x410] sm:$0xff] %v1765
        %3384 = vst [vmem:[%s160 + $0x418] sm:$0xff] %v2021
        %3385 = vst [vmem:[%s160 + $0x420] sm:$0xff] %v2277
        %3386 = vst [vmem:[%s160 + $0x428] sm:$0xff] %v2533
        %3387 = vst [vmem:[%s160 + $0x430] sm:$0xff] %v2789
        %3388 = vst [vmem:[%s160 + $0x438] sm:$0xff] %v3045
        %3389 = vst [vmem:[%s160 + $0x440] sm:$0xff] %v1254
        %3390 = vst [vmem:[%s160 + $0x448] sm:$0xff] %v1510
        %3391 = vst [vmem:[%s160 + $0x450] sm:$0xff] %v1766
        %3392 = vst [vmem:[%s160 + $0x458] sm:$0xff] %v2022
        %3393 = vst [vmem:[%s160 + $0x460] sm:$0xff] %v2278
        %3394 = vst [vmem:[%s160 + $0x468] sm:$0xff] %v2534
        %3395 = vst [vmem:[%s160 + $0x470] sm:$0xff] %v2790
        %3396 = vst [vmem:[%s160 + $0x478] sm:$0xff] %v3046
        %3397 = vst [vmem:[%s160 + $0x480] sm:$0xff] %v1255
        %3398 = vst [vmem:[%s160 + $0x488] sm:$0xff] %v1511
        %3399 = vst [vmem:[%s160 + $0x490] sm:$0xff] %v1767
        %3400 = vst [vmem:[%s160 + $0x498] sm:$0xff] %v2023
        %3401 = vst [vmem:[%s160 + $0x4a0] sm:$0xff] %v2279
        %3402 = vst [vmem:[%s160 + $0x4a8] sm:$0xff] %v2535
        %3403 = vst [vmem:[%s160 + $0x4b0] sm:$0xff] %v2791
        %3404 = vst [vmem:[%s160 + $0x4b8] sm:$0xff] %v3047
        %3405 = vst [vmem:[%s160 + $0x4c0] sm:$0xff] %v1256
        %3406 = vst [vmem:[%s160 + $0x4c8] sm:$0xff] %v1512
        %3407 = vst [vmem:[%s160 + $0x4d0] sm:$0xff] %v1768
        %3408 = vst [vmem:[%s160 + $0x4d8] sm:$0xff] %v2024
        %3409 = vst [vmem:[%s160 + $0x4e0] sm:$0xff] %v2280
        %3410 = vst [vmem:[%s160 + $0x4e8] sm:$0xff] %v2536
        %3411 = vst [vmem:[%s160 + $0x4f0] sm:$0xff] %v2792
        %3412 = vst [vmem:[%s160 + $0x4f8] sm:$0xff] %v3048
        %3413 = vst [vmem:[%s160 + $0x500] sm:$0xff] %v1257
        %3414 = vst [vmem:[%s160 + $0x508] sm:$0xff] %v1513
        %3415 = vst [vmem:[%s160 + $0x510] sm:$0xff] %v1769
        %3416 = vst [vmem:[%s160 + $0x518] sm:$0xff] %v2025
        %3417 = vst [vmem:[%s160 + $0x520] sm:$0xff] %v2281
        %3418 = vst [vmem:[%s160 + $0x528] sm:$0xff] %v2537
        %3419 = vst [vmem:[%s160 + $0x530] sm:$0xff] %v2793
        %3420 = vst [vmem:[%s160 + $0x538] sm:$0xff] %v3049
        %3421 = vst [vmem:[%s160 + $0x540] sm:$0xff] %v1258
        %3422 = vst [vmem:[%s160 + $0x548] sm:$0xff] %v1514
        %3423 = vst [vmem:[%s160 + $0x550] sm:$0xff] %v1770
        %3424 = vst [vmem:[%s160 + $0x558] sm:$0xff] %v2026
        %3425 = vst [vmem:[%s160 + $0x560] sm:$0xff] %v2282
        %3426 = vst [vmem:[%s160 + $0x568] sm:$0xff] %v2538
        %3427 = vst [vmem:[%s160 + $0x570] sm:$0xff] %v2794
        %3428 = vst [vmem:[%s160 + $0x578] sm:$0xff] %v3050
        %3429 = vst [vmem:[%s160 + $0x580] sm:$0xff] %v1259
        %3430 = vst [vmem:[%s160 + $0x588] sm:$0xff] %v1515
        %3431 = vst [vmem:[%s160 + $0x590] sm:$0xff] %v1771
        %3432 = vst [vmem:[%s160 + $0x598] sm:$0xff] %v2027
        %3433 = vst [vmem:[%s160 + $0x5a0] sm:$0xff] %v2283
        %3434 = vst [vmem:[%s160 + $0x5a8] sm:$0xff] %v2539
        %3435 = vst [vmem:[%s160 + $0x5b0] sm:$0xff] %v2795
        %3436 = vst [vmem:[%s160 + $0x5b8] sm:$0xff] %v3051
        %3437 = vst [vmem:[%s160 + $0x5c0] sm:$0xff] %v1260
        %3438 = vst [vmem:[%s160 + $0x5c8] sm:$0xff] %v1516
        %3439 = vst [vmem:[%s160 + $0x5d0] sm:$0xff] %v1772
        %3440 = vst [vmem:[%s160 + $0x5d8] sm:$0xff] %v2028
        %3441 = vst [vmem:[%s160 + $0x5e0] sm:$0xff] %v2284
        %3442 = vst [vmem:[%s160 + $0x5e8] sm:$0xff] %v2540
        %3443 = vst [vmem:[%s160 + $0x5f0] sm:$0xff] %v2796
        %3444 = vst [vmem:[%s160 + $0x5f8] sm:$0xff] %v3052
        %3445 = vst [vmem:[%s160 + $0x600] sm:$0xff] %v1261
        %3446 = vst [vmem:[%s160 + $0x608] sm:$0xff] %v1517
        %3447 = vst [vmem:[%s160 + $0x610] sm:$0xff] %v1773
        %3448 = vst [vmem:[%s160 + $0x618] sm:$0xff] %v2029
        %3449 = vst [vmem:[%s160 + $0x620] sm:$0xff] %v2285
        %3450 = vst [vmem:[%s160 + $0x628] sm:$0xff] %v2541
        %3451 = vst [vmem:[%s160 + $0x630] sm:$0xff] %v2797
        %3452 = vst [vmem:[%s160 + $0x638] sm:$0xff] %v3053
        %3453 = vst [vmem:[%s160 + $0x640] sm:$0xff] %v1262
        %3454 = vst [vmem:[%s160 + $0x648] sm:$0xff] %v1518
        %3455 = vst [vmem:[%s160 + $0x650] sm:$0xff] %v1774
        %3456 = vst [vmem:[%s160 + $0x658] sm:$0xff] %v2030
        %3457 = vst [vmem:[%s160 + $0x660] sm:$0xff] %v2286
        %3458 = vst [vmem:[%s160 + $0x668] sm:$0xff] %v2542
        %3459 = vst [vmem:[%s160 + $0x670] sm:$0xff] %v2798
        %3460 = vst [vmem:[%s160 + $0x678] sm:$0xff] %v3054
        %3461 = vst [vmem:[%s160 + $0x680] sm:$0xff] %v1263
        %3462 = vst [vmem:[%s160 + $0x688] sm:$0xff] %v1519
        %3463 = vst [vmem:[%s160 + $0x690] sm:$0xff] %v1775
        %3464 = vst [vmem:[%s160 + $0x698] sm:$0xff] %v2031
        %3465 = vst [vmem:[%s160 + $0x6a0] sm:$0xff] %v2287
        %3466 = vst [vmem:[%s160 + $0x6a8] sm:$0xff] %v2543
        %3467 = vst [vmem:[%s160 + $0x6b0] sm:$0xff] %v2799
        %3468 = vst [vmem:[%s160 + $0x6b8] sm:$0xff] %v3055
        %3469 = vst [vmem:[%s160 + $0x6c0] sm:$0xff] %v1264
        %3470 = vst [vmem:[%s160 + $0x6c8] sm:$0xff] %v1520
        %3471 = vst [vmem:[%s160 + $0x6d0] sm:$0xff] %v1776
        %3472 = vst [vmem:[%s160 + $0x6d8] sm:$0xff] %v2032
        %3473 = vst [vmem:[%s160 + $0x6e0] sm:$0xff] %v2288
        %3474 = vst [vmem:[%s160 + $0x6e8] sm:$0xff] %v2544
        %3475 = vst [vmem:[%s160 + $0x6f0] sm:$0xff] %v2800
        %3476 = vst [vmem:[%s160 + $0x6f8] sm:$0xff] %v3056
        %3477 = vst [vmem:[%s160 + $0x700] sm:$0xff] %v1265
        %3478 = vst [vmem:[%s160 + $0x708] sm:$0xff] %v1521
        %3479 = vst [vmem:[%s160 + $0x710] sm:$0xff] %v1777
        %3480 = vst [vmem:[%s160 + $0x718] sm:$0xff] %v2033
        %3481 = vst [vmem:[%s160 + $0x720] sm:$0xff] %v2289
        %3482 = vst [vmem:[%s160 + $0x728] sm:$0xff] %v2545
        %3483 = vst [vmem:[%s160 + $0x730] sm:$0xff] %v2801
        %3484 = vst [vmem:[%s160 + $0x738] sm:$0xff] %v3057
        %3485 = vst [vmem:[%s160 + $0x740] sm:$0xff] %v1266
        %3486 = vst [vmem:[%s160 + $0x748] sm:$0xff] %v1522
        %3487 = vst [vmem:[%s160 + $0x750] sm:$0xff] %v1778
        %3488 = vst [vmem:[%s160 + $0x758] sm:$0xff] %v2034
        %3489 = vst [vmem:[%s160 + $0x760] sm:$0xff] %v2290
        %3490 = vst [vmem:[%s160 + $0x768] sm:$0xff] %v2546
        %3491 = vst [vmem:[%s160 + $0x770] sm:$0xff] %v2802
        %3492 = vst [vmem:[%s160 + $0x778] sm:$0xff] %v3058
        %3493 = vst [vmem:[%s160 + $0x780] sm:$0xff] %v1267
        %3494 = vst [vmem:[%s160 + $0x788] sm:$0xff] %v1523
        %3495 = vst [vmem:[%s160 + $0x790] sm:$0xff] %v1779
        %3496 = vst [vmem:[%s160 + $0x798] sm:$0xff] %v2035
        %3497 = vst [vmem:[%s160 + $0x7a0] sm:$0xff] %v2291
        %3498 = vst [vmem:[%s160 + $0x7a8] sm:$0xff] %v2547
        %3499 = vst [vmem:[%s160 + $0x7b0] sm:$0xff] %v2803
        %3500 = vst [vmem:[%s160 + $0x7b8] sm:$0xff] %v3059
        %3501 = vst [vmem:[%s160 + $0x7c0] sm:$0xff] %v1268
        %3502 = vst [vmem:[%s160 + $0x7c8] sm:$0xff] %v1524
        %3503 = vst [vmem:[%s160 + $0x7d0] sm:$0xff] %v1780
        %3504 = vst [vmem:[%s160 + $0x7d8] sm:$0xff] %v2036
        %3505 = vst [vmem:[%s160 + $0x7e0] sm:$0xff] %v2292
        %3506 = vst [vmem:[%s160 + $0x7e8] sm:$0xff] %v2548
        %3507 = vst [vmem:[%s160 + $0x7f0] sm:$0xff] %v2804
        %3508 = vst [vmem:[%s160 + $0x7f8] sm:$0xff] %v3060
        %3509 = vst [vmem:[%s160 + $0x800] sm:$0xff] %v1285
        %3510 = vst [vmem:[%s160 + $0x808] sm:$0xff] %v1541
        %3511 = vst [vmem:[%s160 + $0x810] sm:$0xff] %v1797
        %3512 = vst [vmem:[%s160 + $0x818] sm:$0xff] %v2053
        %3513 = vst [vmem:[%s160 + $0x820] sm:$0xff] %v2309
        %3514 = vst [vmem:[%s160 + $0x828] sm:$0xff] %v2565
        %3515 = vst [vmem:[%s160 + $0x830] sm:$0xff] %v2821
        %3516 = vst [vmem:[%s160 + $0x838] sm:$0xff] %v3077
        %3517 = vst [vmem:[%s160 + $0x840] sm:$0xff] %v1286
        %3518 = vst [vmem:[%s160 + $0x848] sm:$0xff] %v1542
        %3519 = vst [vmem:[%s160 + $0x850] sm:$0xff] %v1798
        %3520 = vst [vmem:[%s160 + $0x858] sm:$0xff] %v2054
        %3521 = vst [vmem:[%s160 + $0x860] sm:$0xff] %v2310
        %3522 = vst [vmem:[%s160 + $0x868] sm:$0xff] %v2566
        %3523 = vst [vmem:[%s160 + $0x870] sm:$0xff] %v2822
        %3524 = vst [vmem:[%s160 + $0x878] sm:$0xff] %v3078
        %3525 = vst [vmem:[%s160 + $0x880] sm:$0xff] %v1287
        %3526 = vst [vmem:[%s160 + $0x888] sm:$0xff] %v1543
        %3527 = vst [vmem:[%s160 + $0x890] sm:$0xff] %v1799
        %3528 = vst [vmem:[%s160 + $0x898] sm:$0xff] %v2055
        %3529 = vst [vmem:[%s160 + $0x8a0] sm:$0xff] %v2311
        %3530 = vst [vmem:[%s160 + $0x8a8] sm:$0xff] %v2567
        %3531 = vst [vmem:[%s160 + $0x8b0] sm:$0xff] %v2823
        %3532 = vst [vmem:[%s160 + $0x8b8] sm:$0xff] %v3079
        %3533 = vst [vmem:[%s160 + $0x8c0] sm:$0xff] %v1288
        %3534 = vst [vmem:[%s160 + $0x8c8] sm:$0xff] %v1544
        %3535 = vst [vmem:[%s160 + $0x8d0] sm:$0xff] %v1800
        %3536 = vst [vmem:[%s160 + $0x8d8] sm:$0xff] %v2056
        %3537 = vst [vmem:[%s160 + $0x8e0] sm:$0xff] %v2312
        %3538 = vst [vmem:[%s160 + $0x8e8] sm:$0xff] %v2568
        %3539 = vst [vmem:[%s160 + $0x8f0] sm:$0xff] %v2824
        %3540 = vst [vmem:[%s160 + $0x8f8] sm:$0xff] %v3080
        %3541 = vst [vmem:[%s160 + $0x900] sm:$0xff] %v1289
        %3542 = vst [vmem:[%s160 + $0x908] sm:$0xff] %v1545
        %3543 = vst [vmem:[%s160 + $0x910] sm:$0xff] %v1801
        %3544 = vst [vmem:[%s160 + $0x918] sm:$0xff] %v2057
        %3545 = vst [vmem:[%s160 + $0x920] sm:$0xff] %v2313
        %3546 = vst [vmem:[%s160 + $0x928] sm:$0xff] %v2569
        %3547 = vst [vmem:[%s160 + $0x930] sm:$0xff] %v2825
        %3548 = vst [vmem:[%s160 + $0x938] sm:$0xff] %v3081
        %3549 = vst [vmem:[%s160 + $0x940] sm:$0xff] %v1290
        %3550 = vst [vmem:[%s160 + $0x948] sm:$0xff] %v1546
        %3551 = vst [vmem:[%s160 + $0x950] sm:$0xff] %v1802
        %3552 = vst [vmem:[%s160 + $0x958] sm:$0xff] %v2058
        %3553 = vst [vmem:[%s160 + $0x960] sm:$0xff] %v2314
        %3554 = vst [vmem:[%s160 + $0x968] sm:$0xff] %v2570
        %3555 = vst [vmem:[%s160 + $0x970] sm:$0xff] %v2826
        %3556 = vst [vmem:[%s160 + $0x978] sm:$0xff] %v3082
        %3557 = vst [vmem:[%s160 + $0x980] sm:$0xff] %v1291
        %3558 = vst [vmem:[%s160 + $0x988] sm:$0xff] %v1547
        %3559 = vst [vmem:[%s160 + $0x990] sm:$0xff] %v1803
        %3560 = vst [vmem:[%s160 + $0x998] sm:$0xff] %v2059
        %3561 = vst [vmem:[%s160 + $0x9a0] sm:$0xff] %v2315
        %3562 = vst [vmem:[%s160 + $0x9a8] sm:$0xff] %v2571
        %3563 = vst [vmem:[%s160 + $0x9b0] sm:$0xff] %v2827
        %3564 = vst [vmem:[%s160 + $0x9b8] sm:$0xff] %v3083
        %3565 = vst [vmem:[%s160 + $0x9c0] sm:$0xff] %v1292
        %3566 = vst [vmem:[%s160 + $0x9c8] sm:$0xff] %v1548
        %3567 = vst [vmem:[%s160 + $0x9d0] sm:$0xff] %v1804
        %3568 = vst [vmem:[%s160 + $0x9d8] sm:$0xff] %v2060
        %3569 = vst [vmem:[%s160 + $0x9e0] sm:$0xff] %v2316
        %3570 = vst [vmem:[%s160 + $0x9e8] sm:$0xff] %v2572
        %3571 = vst [vmem:[%s160 + $0x9f0] sm:$0xff] %v2828
        %3572 = vst [vmem:[%s160 + $0x9f8] sm:$0xff] %v3084
        %3573 = vst [vmem:[%s160 + $0xa00] sm:$0xff] %v1293
        %3574 = vst [vmem:[%s160 + $0xa08] sm:$0xff] %v1549
        %3575 = vst [vmem:[%s160 + $0xa10] sm:$0xff] %v1805
        %3576 = vst [vmem:[%s160 + $0xa18] sm:$0xff] %v2061
        %3577 = vst [vmem:[%s160 + $0xa20] sm:$0xff] %v2317
        %3578 = vst [vmem:[%s160 + $0xa28] sm:$0xff] %v2573
        %3579 = vst [vmem:[%s160 + $0xa30] sm:$0xff] %v2829
        %3580 = vst [vmem:[%s160 + $0xa38] sm:$0xff] %v3085
        %3581 = vst [vmem:[%s160 + $0xa40] sm:$0xff] %v1294
        %3582 = vst [vmem:[%s160 + $0xa48] sm:$0xff] %v1550
        %3583 = vst [vmem:[%s160 + $0xa50] sm:$0xff] %v1806
        %3584 = vst [vmem:[%s160 + $0xa58] sm:$0xff] %v2062
        %3585 = vst [vmem:[%s160 + $0xa60] sm:$0xff] %v2318
        %3586 = vst [vmem:[%s160 + $0xa68] sm:$0xff] %v2574
        %3587 = vst [vmem:[%s160 + $0xa70] sm:$0xff] %v2830
        %3588 = vst [vmem:[%s160 + $0xa78] sm:$0xff] %v3086
        %3589 = vst [vmem:[%s160 + $0xa80] sm:$0xff] %v1295
        %3590 = vst [vmem:[%s160 + $0xa88] sm:$0xff] %v1551
        %3591 = vst [vmem:[%s160 + $0xa90] sm:$0xff] %v1807
        %3592 = vst [vmem:[%s160 + $0xa98] sm:$0xff] %v2063
        %3593 = vst [vmem:[%s160 + $0xaa0] sm:$0xff] %v2319
        %3594 = vst [vmem:[%s160 + $0xaa8] sm:$0xff] %v2575
        %3595 = vst [vmem:[%s160 + $0xab0] sm:$0xff] %v2831
        %3596 = vst [vmem:[%s160 + $0xab8] sm:$0xff] %v3087
        %3597 = vst [vmem:[%s160 + $0xac0] sm:$0xff] %v1296
        %3598 = vst [vmem:[%s160 + $0xac8] sm:$0xff] %v1552
        %3599 = vst [vmem:[%s160 + $0xad0] sm:$0xff] %v1808
        %3600 = vst [vmem:[%s160 + $0xad8] sm:$0xff] %v2064
        %3601 = vst [vmem:[%s160 + $0xae0] sm:$0xff] %v2320
        %3602 = vst [vmem:[%s160 + $0xae8] sm:$0xff] %v2576
        %3603 = vst [vmem:[%s160 + $0xaf0] sm:$0xff] %v2832
        %3604 = vst [vmem:[%s160 + $0xaf8] sm:$0xff] %v3088
        %3605 = vst [vmem:[%s160 + $0xb00] sm:$0xff] %v1297
        %3606 = vst [vmem:[%s160 + $0xb08] sm:$0xff] %v1553
        %3607 = vst [vmem:[%s160 + $0xb10] sm:$0xff] %v1809
        %3608 = vst [vmem:[%s160 + $0xb18] sm:$0xff] %v2065
        %3609 = vst [vmem:[%s160 + $0xb20] sm:$0xff] %v2321
        %3610 = vst [vmem:[%s160 + $0xb28] sm:$0xff] %v2577
        %3611 = vst [vmem:[%s160 + $0xb30] sm:$0xff] %v2833
        %3612 = vst [vmem:[%s160 + $0xb38] sm:$0xff] %v3089
        %3613 = vst [vmem:[%s160 + $0xb40] sm:$0xff] %v1298
        %3614 = vst [vmem:[%s160 + $0xb48] sm:$0xff] %v1554
        %3615 = vst [vmem:[%s160 + $0xb50] sm:$0xff] %v1810
        %3616 = vst [vmem:[%s160 + $0xb58] sm:$0xff] %v2066
        %3617 = vst [vmem:[%s160 + $0xb60] sm:$0xff] %v2322
        %3618 = vst [vmem:[%s160 + $0xb68] sm:$0xff] %v2578
        %3619 = vst [vmem:[%s160 + $0xb70] sm:$0xff] %v2834
        %3620 = vst [vmem:[%s160 + $0xb78] sm:$0xff] %v3090
        %3621 = vst [vmem:[%s160 + $0xb80] sm:$0xff] %v1299
        %3622 = vst [vmem:[%s160 + $0xb88] sm:$0xff] %v1555
        %3623 = vst [vmem:[%s160 + $0xb90] sm:$0xff] %v1811
        %3624 = vst [vmem:[%s160 + $0xb98] sm:$0xff] %v2067
        %3625 = vst [vmem:[%s160 + $0xba0] sm:$0xff] %v2323
        %3626 = vst [vmem:[%s160 + $0xba8] sm:$0xff] %v2579
        %3627 = vst [vmem:[%s160 + $0xbb0] sm:$0xff] %v2835
        %3628 = vst [vmem:[%s160 + $0xbb8] sm:$0xff] %v3091
        %3629 = vst [vmem:[%s160 + $0xbc0] sm:$0xff] %v1300
        %3630 = vst [vmem:[%s160 + $0xbc8] sm:$0xff] %v1556
        %3631 = vst [vmem:[%s160 + $0xbd0] sm:$0xff] %v1812
        %3632 = vst [vmem:[%s160 + $0xbd8] sm:$0xff] %v2068
        %3633 = vst [vmem:[%s160 + $0xbe0] sm:$0xff] %v2324
        %3634 = vst [vmem:[%s160 + $0xbe8] sm:$0xff] %v2580
        %3635 = vst [vmem:[%s160 + $0xbf0] sm:$0xff] %v2836
        %3636 = vst [vmem:[%s160 + $0xbf8] sm:$0xff] %v3092
        %3637 = vst [vmem:[%s160 + $0xc00] sm:$0xff] %v1317
        %3638 = vst [vmem:[%s160 + $0xc08] sm:$0xff] %v1573
        %3639 = vst [vmem:[%s160 + $0xc10] sm:$0xff] %v1829
        %3640 = vst [vmem:[%s160 + $0xc18] sm:$0xff] %v2085
        %3641 = vst [vmem:[%s160 + $0xc20] sm:$0xff] %v2341
        %3642 = vst [vmem:[%s160 + $0xc28] sm:$0xff] %v2597
        %3643 = vst [vmem:[%s160 + $0xc30] sm:$0xff] %v2853
        %3644 = vst [vmem:[%s160 + $0xc38] sm:$0xff] %v3109
        %3645 = vst [vmem:[%s160 + $0xc40] sm:$0xff] %v1318
        %3646 = vst [vmem:[%s160 + $0xc48] sm:$0xff] %v1574
        %3647 = vst [vmem:[%s160 + $0xc50] sm:$0xff] %v1830
        %3648 = vst [vmem:[%s160 + $0xc58] sm:$0xff] %v2086
        %3649 = vst [vmem:[%s160 + $0xc60] sm:$0xff] %v2342
        %3650 = vst [vmem:[%s160 + $0xc68] sm:$0xff] %v2598
        %3651 = vst [vmem:[%s160 + $0xc70] sm:$0xff] %v2854
        %3652 = vst [vmem:[%s160 + $0xc78] sm:$0xff] %v3110
        %3653 = vst [vmem:[%s160 + $0xc80] sm:$0xff] %v1319
        %3654 = vst [vmem:[%s160 + $0xc88] sm:$0xff] %v1575
        %3655 = vst [vmem:[%s160 + $0xc90] sm:$0xff] %v1831
        %3656 = vst [vmem:[%s160 + $0xc98] sm:$0xff] %v2087
        %3657 = vst [vmem:[%s160 + $0xca0] sm:$0xff] %v2343
        %3658 = vst [vmem:[%s160 + $0xca8] sm:$0xff] %v2599
        %3659 = vst [vmem:[%s160 + $0xcb0] sm:$0xff] %v2855
        %3660 = vst [vmem:[%s160 + $0xcb8] sm:$0xff] %v3111
        %3661 = vst [vmem:[%s160 + $0xcc0] sm:$0xff] %v1320
        %3662 = vst [vmem:[%s160 + $0xcc8] sm:$0xff] %v1576
        %3663 = vst [vmem:[%s160 + $0xcd0] sm:$0xff] %v1832
        %3664 = vst [vmem:[%s160 + $0xcd8] sm:$0xff] %v2088
        %3665 = vst [vmem:[%s160 + $0xce0] sm:$0xff] %v2344
        %3666 = vst [vmem:[%s160 + $0xce8] sm:$0xff] %v2600
        %3667 = vst [vmem:[%s160 + $0xcf0] sm:$0xff] %v2856
        %3668 = vst [vmem:[%s160 + $0xcf8] sm:$0xff] %v3112
        %3669 = vst [vmem:[%s160 + $0xd00] sm:$0xff] %v1321
        %3670 = vst [vmem:[%s160 + $0xd08] sm:$0xff] %v1577
        %3671 = vst [vmem:[%s160 + $0xd10] sm:$0xff] %v1833
        %3672 = vst [vmem:[%s160 + $0xd18] sm:$0xff] %v2089
        %3673 = vst [vmem:[%s160 + $0xd20] sm:$0xff] %v2345
        %3674 = vst [vmem:[%s160 + $0xd28] sm:$0xff] %v2601
        %3675 = vst [vmem:[%s160 + $0xd30] sm:$0xff] %v2857
        %3676 = vst [vmem:[%s160 + $0xd38] sm:$0xff] %v3113
        %3677 = vst [vmem:[%s160 + $0xd40] sm:$0xff] %v1322
        %3678 = vst [vmem:[%s160 + $0xd48] sm:$0xff] %v1578
        %3679 = vst [vmem:[%s160 + $0xd50] sm:$0xff] %v1834
        %3680 = vst [vmem:[%s160 + $0xd58] sm:$0xff] %v2090
        %3681 = vst [vmem:[%s160 + $0xd60] sm:$0xff] %v2346
        %3682 = vst [vmem:[%s160 + $0xd68] sm:$0xff] %v2602
        %3683 = vst [vmem:[%s160 + $0xd70] sm:$0xff] %v2858
        %3684 = vst [vmem:[%s160 + $0xd78] sm:$0xff] %v3114
        %3685 = vst [vmem:[%s160 + $0xd80] sm:$0xff] %v1323
        %3686 = vst [vmem:[%s160 + $0xd88] sm:$0xff] %v1579
        %3687 = vst [vmem:[%s160 + $0xd90] sm:$0xff] %v1835
        %3688 = vst [vmem:[%s160 + $0xd98] sm:$0xff] %v2091
        %3689 = vst [vmem:[%s160 + $0xda0] sm:$0xff] %v2347
        %3690 = vst [vmem:[%s160 + $0xda8] sm:$0xff] %v2603
        %3691 = vst [vmem:[%s160 + $0xdb0] sm:$0xff] %v2859
        %3692 = vst [vmem:[%s160 + $0xdb8] sm:$0xff] %v3115
        %3693 = vst [vmem:[%s160 + $0xdc0] sm:$0xff] %v1324
        %3694 = vst [vmem:[%s160 + $0xdc8] sm:$0xff] %v1580
        %3695 = vst [vmem:[%s160 + $0xdd0] sm:$0xff] %v1836
        %3696 = vst [vmem:[%s160 + $0xdd8] sm:$0xff] %v2092
        %3697 = vst [vmem:[%s160 + $0xde0] sm:$0xff] %v2348
        %3698 = vst [vmem:[%s160 + $0xde8] sm:$0xff] %v2604
        %3699 = vst [vmem:[%s160 + $0xdf0] sm:$0xff] %v2860
        %3700 = vst [vmem:[%s160 + $0xdf8] sm:$0xff] %v3116
        %3701 = vst [vmem:[%s160 + $0xe00] sm:$0xff] %v1325
        %3702 = vst [vmem:[%s160 + $0xe08] sm:$0xff] %v1581
        %3703 = vst [vmem:[%s160 + $0xe10] sm:$0xff] %v1837
        %3704 = vst [vmem:[%s160 + $0xe18] sm:$0xff] %v2093
        %3705 = vst [vmem:[%s160 + $0xe20] sm:$0xff] %v2349
        %3706 = vst [vmem:[%s160 + $0xe28] sm:$0xff] %v2605
        %3707 = vst [vmem:[%s160 + $0xe30] sm:$0xff] %v2861
        %3708 = vst [vmem:[%s160 + $0xe38] sm:$0xff] %v3117
        %3709 = vst [vmem:[%s160 + $0xe40] sm:$0xff] %v1326
        %3710 = vst [vmem:[%s160 + $0xe48] sm:$0xff] %v1582
        %3711 = vst [vmem:[%s160 + $0xe50] sm:$0xff] %v1838
        %3712 = vst [vmem:[%s160 + $0xe58] sm:$0xff] %v2094
        %3713 = vst [vmem:[%s160 + $0xe60] sm:$0xff] %v2350
        %3714 = vst [vmem:[%s160 + $0xe68] sm:$0xff] %v2606
        %3715 = vst [vmem:[%s160 + $0xe70] sm:$0xff] %v2862
        %3716 = vst [vmem:[%s160 + $0xe78] sm:$0xff] %v3118
        %3717 = vst [vmem:[%s160 + $0xe80] sm:$0xff] %v1327
        %3718 = vst [vmem:[%s160 + $0xe88] sm:$0xff] %v1583
        %3719 = vst [vmem:[%s160 + $0xe90] sm:$0xff] %v1839
        %3720 = vst [vmem:[%s160 + $0xe98] sm:$0xff] %v2095
        %3721 = vst [vmem:[%s160 + $0xea0] sm:$0xff] %v2351
        %3722 = vst [vmem:[%s160 + $0xea8] sm:$0xff] %v2607
        %3723 = vst [vmem:[%s160 + $0xeb0] sm:$0xff] %v2863
        %3724 = vst [vmem:[%s160 + $0xeb8] sm:$0xff] %v3119
        %3725 = vst [vmem:[%s160 + $0xec0] sm:$0xff] %v1328
        %3726 = vst [vmem:[%s160 + $0xec8] sm:$0xff] %v1584
        %3727 = vst [vmem:[%s160 + $0xed0] sm:$0xff] %v1840
        %3728 = vst [vmem:[%s160 + $0xed8] sm:$0xff] %v2096
        %3729 = vst [vmem:[%s160 + $0xee0] sm:$0xff] %v2352
        %3730 = vst [vmem:[%s160 + $0xee8] sm:$0xff] %v2608
        %3731 = vst [vmem:[%s160 + $0xef0] sm:$0xff] %v2864
        %3732 = vst [vmem:[%s160 + $0xef8] sm:$0xff] %v3120
        %3733 = vst [vmem:[%s160 + $0xf00] sm:$0xff] %v1329
        %3734 = vst [vmem:[%s160 + $0xf08] sm:$0xff] %v1585
        %3735 = vst [vmem:[%s160 + $0xf10] sm:$0xff] %v1841
        %3736 = vst [vmem:[%s160 + $0xf18] sm:$0xff] %v2097
        %3737 = vst [vmem:[%s160 + $0xf20] sm:$0xff] %v2353
        %3738 = vst [vmem:[%s160 + $0xf28] sm:$0xff] %v2609
        %3739 = vst [vmem:[%s160 + $0xf30] sm:$0xff] %v2865
        %3740 = vst [vmem:[%s160 + $0xf38] sm:$0xff] %v3121
        %3741 = vst [vmem:[%s160 + $0xf40] sm:$0xff] %v1330
        %3742 = vst [vmem:[%s160 + $0xf48] sm:$0xff] %v1586
        %3743 = vst [vmem:[%s160 + $0xf50] sm:$0xff] %v1842
        %3744 = vst [vmem:[%s160 + $0xf58] sm:$0xff] %v2098
        %3745 = vst [vmem:[%s160 + $0xf60] sm:$0xff] %v2354
        %3746 = vst [vmem:[%s160 + $0xf68] sm:$0xff] %v2610
        %3747 = vst [vmem:[%s160 + $0xf70] sm:$0xff] %v2866
        %3748 = vst [vmem:[%s160 + $0xf78] sm:$0xff] %v3122
        %3749 = vst [vmem:[%s160 + $0xf80] sm:$0xff] %v1331
        %3750 = vst [vmem:[%s160 + $0xf88] sm:$0xff] %v1587
        %3751 = vst [vmem:[%s160 + $0xf90] sm:$0xff] %v1843
        %3752 = vst [vmem:[%s160 + $0xf98] sm:$0xff] %v2099
        %3753 = vst [vmem:[%s160 + $0xfa0] sm:$0xff] %v2355
        %3754 = vst [vmem:[%s160 + $0xfa8] sm:$0xff] %v2611
        %3755 = vst [vmem:[%s160 + $0xfb0] sm:$0xff] %v2867
        %3756 = vst [vmem:[%s160 + $0xfb8] sm:$0xff] %v3123
        %3757 = vst [vmem:[%s160 + $0xfc0] sm:$0xff] %v1332
        %3758 = vst [vmem:[%s160 + $0xfc8] sm:$0xff] %v1588
        %3759 = vst [vmem:[%s160 + $0xfd0] sm:$0xff] %v1844
        %3760 = vst [vmem:[%s160 + $0xfd8] sm:$0xff] %v2100
        %3761 = vst [vmem:[%s160 + $0xfe0] sm:$0xff] %v2356
        %3762 = vst [vmem:[%s160 + $0xfe8] sm:$0xff] %v2612
        %3763 = vst [vmem:[%s160 + $0xff0] sm:$0xff] %v2868
        %3764 = vst [vmem:[%s160 + $0xff8] sm:$0xff] %v3124
        %3765 = vst [vmem:[%s160 + $0x1000] sm:$0xff] %v1349
        %3766 = vst [vmem:[%s160 + $0x1008] sm:$0xff] %v1605
        %3767 = vst [vmem:[%s160 + $0x1010] sm:$0xff] %v1861
        %3768 = vst [vmem:[%s160 + $0x1018] sm:$0xff] %v2117
        %3769 = vst [vmem:[%s160 + $0x1020] sm:$0xff] %v2373
        %3770 = vst [vmem:[%s160 + $0x1028] sm:$0xff] %v2629
        %3771 = vst [vmem:[%s160 + $0x1030] sm:$0xff] %v2885
        %3772 = vst [vmem:[%s160 + $0x1038] sm:$0xff] %v3141
        %3773 = vst [vmem:[%s160 + $0x1040] sm:$0xff] %v1350
        %3774 = vst [vmem:[%s160 + $0x1048] sm:$0xff] %v1606
        %3775 = vst [vmem:[%s160 + $0x1050] sm:$0xff] %v1862
        %3776 = vst [vmem:[%s160 + $0x1058] sm:$0xff] %v2118
        %3777 = vst [vmem:[%s160 + $0x1060] sm:$0xff] %v2374
        %3778 = vst [vmem:[%s160 + $0x1068] sm:$0xff] %v2630
        %3779 = vst [vmem:[%s160 + $0x1070] sm:$0xff] %v2886
        %3780 = vst [vmem:[%s160 + $0x1078] sm:$0xff] %v3142
        %3781 = vst [vmem:[%s160 + $0x1080] sm:$0xff] %v1351
        %3782 = vst [vmem:[%s160 + $0x1088] sm:$0xff] %v1607
        %3783 = vst [vmem:[%s160 + $0x1090] sm:$0xff] %v1863
        %3784 = vst [vmem:[%s160 + $0x1098] sm:$0xff] %v2119
        %3785 = vst [vmem:[%s160 + $0x10a0] sm:$0xff] %v2375
        %3786 = vst [vmem:[%s160 + $0x10a8] sm:$0xff] %v2631
        %3787 = vst [vmem:[%s160 + $0x10b0] sm:$0xff] %v2887
        %3788 = vst [vmem:[%s160 + $0x10b8] sm:$0xff] %v3143
        %3789 = vst [vmem:[%s160 + $0x10c0] sm:$0xff] %v1352
        %3790 = vst [vmem:[%s160 + $0x10c8] sm:$0xff] %v1608
        %3791 = vst [vmem:[%s160 + $0x10d0] sm:$0xff] %v1864
        %3792 = vst [vmem:[%s160 + $0x10d8] sm:$0xff] %v2120
        %3793 = vst [vmem:[%s160 + $0x10e0] sm:$0xff] %v2376
        %3794 = vst [vmem:[%s160 + $0x10e8] sm:$0xff] %v2632
        %3795 = vst [vmem:[%s160 + $0x10f0] sm:$0xff] %v2888
        %3796 = vst [vmem:[%s160 + $0x10f8] sm:$0xff] %v3144
        %3797 = vst [vmem:[%s160 + $0x1100] sm:$0xff] %v1353
        %3798 = vst [vmem:[%s160 + $0x1108] sm:$0xff] %v1609
        %3799 = vst [vmem:[%s160 + $0x1110] sm:$0xff] %v1865
        %3800 = vst [vmem:[%s160 + $0x1118] sm:$0xff] %v2121
        %3801 = vst [vmem:[%s160 + $0x1120] sm:$0xff] %v2377
        %3802 = vst [vmem:[%s160 + $0x1128] sm:$0xff] %v2633
        %3803 = vst [vmem:[%s160 + $0x1130] sm:$0xff] %v2889
        %3804 = vst [vmem:[%s160 + $0x1138] sm:$0xff] %v3145
        %3805 = vst [vmem:[%s160 + $0x1140] sm:$0xff] %v1354
        %3806 = vst [vmem:[%s160 + $0x1148] sm:$0xff] %v1610
        %3807 = vst [vmem:[%s160 + $0x1150] sm:$0xff] %v1866
        %3808 = vst [vmem:[%s160 + $0x1158] sm:$0xff] %v2122
        %3809 = vst [vmem:[%s160 + $0x1160] sm:$0xff] %v2378
        %3810 = vst [vmem:[%s160 + $0x1168] sm:$0xff] %v2634
        %3811 = vst [vmem:[%s160 + $0x1170] sm:$0xff] %v2890
        %3812 = vst [vmem:[%s160 + $0x1178] sm:$0xff] %v3146
        %3813 = vst [vmem:[%s160 + $0x1180] sm:$0xff] %v1355
        %3814 = vst [vmem:[%s160 + $0x1188] sm:$0xff] %v1611
        %3815 = vst [vmem:[%s160 + $0x1190] sm:$0xff] %v1867
        %3816 = vst [vmem:[%s160 + $0x1198] sm:$0xff] %v2123
        %3817 = vst [vmem:[%s160 + $0x11a0] sm:$0xff] %v2379
        %3818 = vst [vmem:[%s160 + $0x11a8] sm:$0xff] %v2635
        %3819 = vst [vmem:[%s160 + $0x11b0] sm:$0xff] %v2891
        %3820 = vst [vmem:[%s160 + $0x11b8] sm:$0xff] %v3147
        %3821 = vst [vmem:[%s160 + $0x11c0] sm:$0xff] %v1356
        %3822 = vst [vmem:[%s160 + $0x11c8] sm:$0xff] %v1612
        %3823 = vst [vmem:[%s160 + $0x11d0] sm:$0xff] %v1868
        %3824 = vst [vmem:[%s160 + $0x11d8] sm:$0xff] %v2124
        %3825 = vst [vmem:[%s160 + $0x11e0] sm:$0xff] %v2380
        %3826 = vst [vmem:[%s160 + $0x11e8] sm:$0xff] %v2636
        %3827 = vst [vmem:[%s160 + $0x11f0] sm:$0xff] %v2892
        %3828 = vst [vmem:[%s160 + $0x11f8] sm:$0xff] %v3148
        %3829 = vst [vmem:[%s160 + $0x1200] sm:$0xff] %v1357
        %3830 = vst [vmem:[%s160 + $0x1208] sm:$0xff] %v1613
        %3831 = vst [vmem:[%s160 + $0x1210] sm:$0xff] %v1869
        %3832 = vst [vmem:[%s160 + $0x1218] sm:$0xff] %v2125
        %3833 = vst [vmem:[%s160 + $0x1220] sm:$0xff] %v2381
        %3834 = vst [vmem:[%s160 + $0x1228] sm:$0xff] %v2637
        %3835 = vst [vmem:[%s160 + $0x1230] sm:$0xff] %v2893
        %3836 = vst [vmem:[%s160 + $0x1238] sm:$0xff] %v3149
        %3837 = vst [vmem:[%s160 + $0x1240] sm:$0xff] %v1358
        %3838 = vst [vmem:[%s160 + $0x1248] sm:$0xff] %v1614
        %3839 = vst [vmem:[%s160 + $0x1250] sm:$0xff] %v1870
        %3840 = vst [vmem:[%s160 + $0x1258] sm:$0xff] %v2126
        %3841 = vst [vmem:[%s160 + $0x1260] sm:$0xff] %v2382
        %3842 = vst [vmem:[%s160 + $0x1268] sm:$0xff] %v2638
        %3843 = vst [vmem:[%s160 + $0x1270] sm:$0xff] %v2894
        %3844 = vst [vmem:[%s160 + $0x1278] sm:$0xff] %v3150
        %3845 = vst [vmem:[%s160 + $0x1280] sm:$0xff] %v1359
        %3846 = vst [vmem:[%s160 + $0x1288] sm:$0xff] %v1615
        %3847 = vst [vmem:[%s160 + $0x1290] sm:$0xff] %v1871
        %3848 = vst [vmem:[%s160 + $0x1298] sm:$0xff] %v2127
        %3849 = vst [vmem:[%s160 + $0x12a0] sm:$0xff] %v2383
        %3850 = vst [vmem:[%s160 + $0x12a8] sm:$0xff] %v2639
        %3851 = vst [vmem:[%s160 + $0x12b0] sm:$0xff] %v2895
        %3852 = vst [vmem:[%s160 + $0x12b8] sm:$0xff] %v3151
        %3853 = vst [vmem:[%s160 + $0x12c0] sm:$0xff] %v1360
        %3854 = vst [vmem:[%s160 + $0x12c8] sm:$0xff] %v1616
        %3855 = vst [vmem:[%s160 + $0x12d0] sm:$0xff] %v1872
        %3856 = vst [vmem:[%s160 + $0x12d8] sm:$0xff] %v2128
        %3857 = vst [vmem:[%s160 + $0x12e0] sm:$0xff] %v2384
        %3858 = vst [vmem:[%s160 + $0x12e8] sm:$0xff] %v2640
        %3859 = vst [vmem:[%s160 + $0x12f0] sm:$0xff] %v2896
        %3860 = vst [vmem:[%s160 + $0x12f8] sm:$0xff] %v3152
        %3861 = vst [vmem:[%s160 + $0x1300] sm:$0xff] %v1361
        %3862 = vst [vmem:[%s160 + $0x1308] sm:$0xff] %v1617
        %3863 = vst [vmem:[%s160 + $0x1310] sm:$0xff] %v1873
        %3864 = vst [vmem:[%s160 + $0x1318] sm:$0xff] %v2129
        %3865 = vst [vmem:[%s160 + $0x1320] sm:$0xff] %v2385
        %3866 = vst [vmem:[%s160 + $0x1328] sm:$0xff] %v2641
        %3867 = vst [vmem:[%s160 + $0x1330] sm:$0xff] %v2897
        %3868 = vst [vmem:[%s160 + $0x1338] sm:$0xff] %v3153
        %3869 = vst [vmem:[%s160 + $0x1340] sm:$0xff] %v1362
        %3870 = vst [vmem:[%s160 + $0x1348] sm:$0xff] %v1618
        %3871 = vst [vmem:[%s160 + $0x1350] sm:$0xff] %v1874
        %3872 = vst [vmem:[%s160 + $0x1358] sm:$0xff] %v2130
        %3873 = vst [vmem:[%s160 + $0x1360] sm:$0xff] %v2386
        %3874 = vst [vmem:[%s160 + $0x1368] sm:$0xff] %v2642
        %3875 = vst [vmem:[%s160 + $0x1370] sm:$0xff] %v2898
        %3876 = vst [vmem:[%s160 + $0x1378] sm:$0xff] %v3154
        %3877 = vst [vmem:[%s160 + $0x1380] sm:$0xff] %v1363
        %3878 = vst [vmem:[%s160 + $0x1388] sm:$0xff] %v1619
        %3879 = vst [vmem:[%s160 + $0x1390] sm:$0xff] %v1875
        %3880 = vst [vmem:[%s160 + $0x1398] sm:$0xff] %v2131
        %3881 = vst [vmem:[%s160 + $0x13a0] sm:$0xff] %v2387
        %3882 = vst [vmem:[%s160 + $0x13a8] sm:$0xff] %v2643
        %3883 = vst [vmem:[%s160 + $0x13b0] sm:$0xff] %v2899
        %3884 = vst [vmem:[%s160 + $0x13b8] sm:$0xff] %v3155
        %3885 = vst [vmem:[%s160 + $0x13c0] sm:$0xff] %v1364
        %3886 = vst [vmem:[%s160 + $0x13c8] sm:$0xff] %v1620
        %3887 = vst [vmem:[%s160 + $0x13d0] sm:$0xff] %v1876
        %3888 = vst [vmem:[%s160 + $0x13d8] sm:$0xff] %v2132
        %3889 = vst [vmem:[%s160 + $0x13e0] sm:$0xff] %v2388
        %3890 = vst [vmem:[%s160 + $0x13e8] sm:$0xff] %v2644
        %3891 = vst [vmem:[%s160 + $0x13f0] sm:$0xff] %v2900
        %3892 = vst [vmem:[%s160 + $0x13f8] sm:$0xff] %v3156
        %3893 = vst [vmem:[%s160 + $0x1400] sm:$0xff] %v1381
        %3894 = vst [vmem:[%s160 + $0x1408] sm:$0xff] %v1637
        %3895 = vst [vmem:[%s160 + $0x1410] sm:$0xff] %v1893
        %3896 = vst [vmem:[%s160 + $0x1418] sm:$0xff] %v2149
        %3897 = vst [vmem:[%s160 + $0x1420] sm:$0xff] %v2405
        %3898 = vst [vmem:[%s160 + $0x1428] sm:$0xff] %v2661
        %3899 = vst [vmem:[%s160 + $0x1430] sm:$0xff] %v2917
        %3900 = vst [vmem:[%s160 + $0x1438] sm:$0xff] %v3173
        %3901 = vst [vmem:[%s160 + $0x1440] sm:$0xff] %v1382
        %3902 = vst [vmem:[%s160 + $0x1448] sm:$0xff] %v1638
        %3903 = vst [vmem:[%s160 + $0x1450] sm:$0xff] %v1894
        %3904 = vst [vmem:[%s160 + $0x1458] sm:$0xff] %v2150
        %3905 = vst [vmem:[%s160 + $0x1460] sm:$0xff] %v2406
        %3906 = vst [vmem:[%s160 + $0x1468] sm:$0xff] %v2662
        %3907 = vst [vmem:[%s160 + $0x1470] sm:$0xff] %v2918
        %3908 = vst [vmem:[%s160 + $0x1478] sm:$0xff] %v3174
        %3909 = vst [vmem:[%s160 + $0x1480] sm:$0xff] %v1383
        %3910 = vst [vmem:[%s160 + $0x1488] sm:$0xff] %v1639
        %3911 = vst [vmem:[%s160 + $0x1490] sm:$0xff] %v1895
        %3912 = vst [vmem:[%s160 + $0x1498] sm:$0xff] %v2151
        %3913 = vst [vmem:[%s160 + $0x14a0] sm:$0xff] %v2407
        %3914 = vst [vmem:[%s160 + $0x14a8] sm:$0xff] %v2663
        %3915 = vst [vmem:[%s160 + $0x14b0] sm:$0xff] %v2919
        %3916 = vst [vmem:[%s160 + $0x14b8] sm:$0xff] %v3175
        %3917 = vst [vmem:[%s160 + $0x14c0] sm:$0xff] %v1384
        %3918 = vst [vmem:[%s160 + $0x14c8] sm:$0xff] %v1640
        %3919 = vst [vmem:[%s160 + $0x14d0] sm:$0xff] %v1896
        %3920 = vst [vmem:[%s160 + $0x14d8] sm:$0xff] %v2152
        %3921 = vst [vmem:[%s160 + $0x14e0] sm:$0xff] %v2408
        %3922 = vst [vmem:[%s160 + $0x14e8] sm:$0xff] %v2664
        %3923 = vst [vmem:[%s160 + $0x14f0] sm:$0xff] %v2920
        %3924 = vst [vmem:[%s160 + $0x14f8] sm:$0xff] %v3176
        %3925 = vst [vmem:[%s160 + $0x1500] sm:$0xff] %v1385
        %3926 = vst [vmem:[%s160 + $0x1508] sm:$0xff] %v1641
        %3927 = vst [vmem:[%s160 + $0x1510] sm:$0xff] %v1897
        %3928 = vst [vmem:[%s160 + $0x1518] sm:$0xff] %v2153
        %3929 = vst [vmem:[%s160 + $0x1520] sm:$0xff] %v2409
        %3930 = vst [vmem:[%s160 + $0x1528] sm:$0xff] %v2665
        %3931 = vst [vmem:[%s160 + $0x1530] sm:$0xff] %v2921
        %3932 = vst [vmem:[%s160 + $0x1538] sm:$0xff] %v3177
        %3933 = vst [vmem:[%s160 + $0x1540] sm:$0xff] %v1386
        %3934 = vst [vmem:[%s160 + $0x1548] sm:$0xff] %v1642
        %3935 = vst [vmem:[%s160 + $0x1550] sm:$0xff] %v1898
        %3936 = vst [vmem:[%s160 + $0x1558] sm:$0xff] %v2154
        %3937 = vst [vmem:[%s160 + $0x1560] sm:$0xff] %v2410
        %3938 = vst [vmem:[%s160 + $0x1568] sm:$0xff] %v2666
        %3939 = vst [vmem:[%s160 + $0x1570] sm:$0xff] %v2922
        %3940 = vst [vmem:[%s160 + $0x1578] sm:$0xff] %v3178
        %3941 = vst [vmem:[%s160 + $0x1580] sm:$0xff] %v1387
        %3942 = vst [vmem:[%s160 + $0x1588] sm:$0xff] %v1643
        %3943 = vst [vmem:[%s160 + $0x1590] sm:$0xff] %v1899
        %3944 = vst [vmem:[%s160 + $0x1598] sm:$0xff] %v2155
        %3945 = vst [vmem:[%s160 + $0x15a0] sm:$0xff] %v2411
        %3946 = vst [vmem:[%s160 + $0x15a8] sm:$0xff] %v2667
        %3947 = vst [vmem:[%s160 + $0x15b0] sm:$0xff] %v2923
        %3948 = vst [vmem:[%s160 + $0x15b8] sm:$0xff] %v3179
        %3949 = vst [vmem:[%s160 + $0x15c0] sm:$0xff] %v1388
        %3950 = vst [vmem:[%s160 + $0x15c8] sm:$0xff] %v1644
        %3951 = vst [vmem:[%s160 + $0x15d0] sm:$0xff] %v1900
        %3952 = vst [vmem:[%s160 + $0x15d8] sm:$0xff] %v2156
        %3953 = vst [vmem:[%s160 + $0x15e0] sm:$0xff] %v2412
        %3954 = vst [vmem:[%s160 + $0x15e8] sm:$0xff] %v2668
        %3955 = vst [vmem:[%s160 + $0x15f0] sm:$0xff] %v2924
        %3956 = vst [vmem:[%s160 + $0x15f8] sm:$0xff] %v3180
        %3957 = vst [vmem:[%s160 + $0x1600] sm:$0xff] %v1389
        %3958 = vst [vmem:[%s160 + $0x1608] sm:$0xff] %v1645
        %3959 = vst [vmem:[%s160 + $0x1610] sm:$0xff] %v1901
        %3960 = vst [vmem:[%s160 + $0x1618] sm:$0xff] %v2157
        %3961 = vst [vmem:[%s160 + $0x1620] sm:$0xff] %v2413
        %3962 = vst [vmem:[%s160 + $0x1628] sm:$0xff] %v2669
        %3963 = vst [vmem:[%s160 + $0x1630] sm:$0xff] %v2925
        %3964 = vst [vmem:[%s160 + $0x1638] sm:$0xff] %v3181
        %3965 = vst [vmem:[%s160 + $0x1640] sm:$0xff] %v1390
        %3966 = vst [vmem:[%s160 + $0x1648] sm:$0xff] %v1646
        %3967 = vst [vmem:[%s160 + $0x1650] sm:$0xff] %v1902
        %3968 = vst [vmem:[%s160 + $0x1658] sm:$0xff] %v2158
        %3969 = vst [vmem:[%s160 + $0x1660] sm:$0xff] %v2414
        %3970 = vst [vmem:[%s160 + $0x1668] sm:$0xff] %v2670
        %3971 = vst [vmem:[%s160 + $0x1670] sm:$0xff] %v2926
        %3972 = vst [vmem:[%s160 + $0x1678] sm:$0xff] %v3182
        %3973 = vst [vmem:[%s160 + $0x1680] sm:$0xff] %v1391
        %3974 = vst [vmem:[%s160 + $0x1688] sm:$0xff] %v1647
        %3975 = vst [vmem:[%s160 + $0x1690] sm:$0xff] %v1903
        %3976 = vst [vmem:[%s160 + $0x1698] sm:$0xff] %v2159
        %3977 = vst [vmem:[%s160 + $0x16a0] sm:$0xff] %v2415
        %3978 = vst [vmem:[%s160 + $0x16a8] sm:$0xff] %v2671
        %3979 = vst [vmem:[%s160 + $0x16b0] sm:$0xff] %v2927
        %3980 = vst [vmem:[%s160 + $0x16b8] sm:$0xff] %v3183
        %3981 = vst [vmem:[%s160 + $0x16c0] sm:$0xff] %v1392
        %3982 = vst [vmem:[%s160 + $0x16c8] sm:$0xff] %v1648
        %3983 = vst [vmem:[%s160 + $0x16d0] sm:$0xff] %v1904
        %3984 = vst [vmem:[%s160 + $0x16d8] sm:$0xff] %v2160
        %3985 = vst [vmem:[%s160 + $0x16e0] sm:$0xff] %v2416
        %3986 = vst [vmem:[%s160 + $0x16e8] sm:$0xff] %v2672
        %3987 = vst [vmem:[%s160 + $0x16f0] sm:$0xff] %v2928
        %3988 = vst [vmem:[%s160 + $0x16f8] sm:$0xff] %v3184
        %3989 = vst [vmem:[%s160 + $0x1700] sm:$0xff] %v1393
        %3990 = vst [vmem:[%s160 + $0x1708] sm:$0xff] %v1649
        %3991 = vst [vmem:[%s160 + $0x1710] sm:$0xff] %v1905
        %3992 = vst [vmem:[%s160 + $0x1718] sm:$0xff] %v2161
        %3993 = vst [vmem:[%s160 + $0x1720] sm:$0xff] %v2417
        %3994 = vst [vmem:[%s160 + $0x1728] sm:$0xff] %v2673
        %3995 = vst [vmem:[%s160 + $0x1730] sm:$0xff] %v2929
        %3996 = vst [vmem:[%s160 + $0x1738] sm:$0xff] %v3185
        %3997 = vst [vmem:[%s160 + $0x1740] sm:$0xff] %v1394
        %3998 = vst [vmem:[%s160 + $0x1748] sm:$0xff] %v1650
        %3999 = vst [vmem:[%s160 + $0x1750] sm:$0xff] %v1906
        %4000 = vst [vmem:[%s160 + $0x1758] sm:$0xff] %v2162
        %4001 = vst [vmem:[%s160 + $0x1760] sm:$0xff] %v2418
        %4002 = vst [vmem:[%s160 + $0x1768] sm:$0xff] %v2674
        %4003 = vst [vmem:[%s160 + $0x1770] sm:$0xff] %v2930
        %4004 = vst [vmem:[%s160 + $0x1778] sm:$0xff] %v3186
        %4005 = vst [vmem:[%s160 + $0x1780] sm:$0xff] %v1395
        %4006 = vst [vmem:[%s160 + $0x1788] sm:$0xff] %v1651
        %4007 = vst [vmem:[%s160 + $0x1790] sm:$0xff] %v1907
        %4008 = vst [vmem:[%s160 + $0x1798] sm:$0xff] %v2163
        %4009 = vst [vmem:[%s160 + $0x17a0] sm:$0xff] %v2419
        %4010 = vst [vmem:[%s160 + $0x17a8] sm:$0xff] %v2675
        %4011 = vst [vmem:[%s160 + $0x17b0] sm:$0xff] %v2931
        %4012 = vst [vmem:[%s160 + $0x17b8] sm:$0xff] %v3187
        %4013 = vst [vmem:[%s160 + $0x17c0] sm:$0xff] %v1396
        %4014 = vst [vmem:[%s160 + $0x17c8] sm:$0xff] %v1652
        %4015 = vst [vmem:[%s160 + $0x17d0] sm:$0xff] %v1908
        %4016 = vst [vmem:[%s160 + $0x17d8] sm:$0xff] %v2164
        %4017 = vst [vmem:[%s160 + $0x17e0] sm:$0xff] %v2420
        %4018 = vst [vmem:[%s160 + $0x17e8] sm:$0xff] %v2676
        %4019 = vst [vmem:[%s160 + $0x17f0] sm:$0xff] %v2932
        %4020 = vst [vmem:[%s160 + $0x17f8] sm:$0xff] %v3188
        %4021 = vst [vmem:[%s160 + $0x1800] sm:$0xff] %v1413
        %4022 = vst [vmem:[%s160 + $0x1808] sm:$0xff] %v1669
        %4023 = vst [vmem:[%s160 + $0x1810] sm:$0xff] %v1925
        %4024 = vst [vmem:[%s160 + $0x1818] sm:$0xff] %v2181
        %4025 = vst [vmem:[%s160 + $0x1820] sm:$0xff] %v2437
        %4026 = vst [vmem:[%s160 + $0x1828] sm:$0xff] %v2693
        %4027 = vst [vmem:[%s160 + $0x1830] sm:$0xff] %v2949
        %4028 = vst [vmem:[%s160 + $0x1838] sm:$0xff] %v3205
        %4029 = vst [vmem:[%s160 + $0x1840] sm:$0xff] %v1414
        %4030 = vst [vmem:[%s160 + $0x1848] sm:$0xff] %v1670
        %4031 = vst [vmem:[%s160 + $0x1850] sm:$0xff] %v1926
        %4032 = vst [vmem:[%s160 + $0x1858] sm:$0xff] %v2182
        %4033 = vst [vmem:[%s160 + $0x1860] sm:$0xff] %v2438
        %4034 = vst [vmem:[%s160 + $0x1868] sm:$0xff] %v2694
        %4035 = vst [vmem:[%s160 + $0x1870] sm:$0xff] %v2950
        %4036 = vst [vmem:[%s160 + $0x1878] sm:$0xff] %v3206
        %4037 = vst [vmem:[%s160 + $0x1880] sm:$0xff] %v1415
        %4038 = vst [vmem:[%s160 + $0x1888] sm:$0xff] %v1671
        %4039 = vst [vmem:[%s160 + $0x1890] sm:$0xff] %v1927
        %4040 = vst [vmem:[%s160 + $0x1898] sm:$0xff] %v2183
        %4041 = vst [vmem:[%s160 + $0x18a0] sm:$0xff] %v2439
        %4042 = vst [vmem:[%s160 + $0x18a8] sm:$0xff] %v2695
        %4043 = vst [vmem:[%s160 + $0x18b0] sm:$0xff] %v2951
        %4044 = vst [vmem:[%s160 + $0x18b8] sm:$0xff] %v3207
        %4045 = vst [vmem:[%s160 + $0x18c0] sm:$0xff] %v1416
        %4046 = vst [vmem:[%s160 + $0x18c8] sm:$0xff] %v1672
        %4047 = vst [vmem:[%s160 + $0x18d0] sm:$0xff] %v1928
        %4048 = vst [vmem:[%s160 + $0x18d8] sm:$0xff] %v2184
        %4049 = vst [vmem:[%s160 + $0x18e0] sm:$0xff] %v2440
        %4050 = vst [vmem:[%s160 + $0x18e8] sm:$0xff] %v2696
        %4051 = vst [vmem:[%s160 + $0x18f0] sm:$0xff] %v2952
        %4052 = vst [vmem:[%s160 + $0x18f8] sm:$0xff] %v3208
        %4053 = vst [vmem:[%s160 + $0x1900] sm:$0xff] %v1417
        %4054 = vst [vmem:[%s160 + $0x1908] sm:$0xff] %v1673
        %4055 = vst [vmem:[%s160 + $0x1910] sm:$0xff] %v1929
        %4056 = vst [vmem:[%s160 + $0x1918] sm:$0xff] %v2185
        %4057 = vst [vmem:[%s160 + $0x1920] sm:$0xff] %v2441
        %4058 = vst [vmem:[%s160 + $0x1928] sm:$0xff] %v2697
        %4059 = vst [vmem:[%s160 + $0x1930] sm:$0xff] %v2953
        %4060 = vst [vmem:[%s160 + $0x1938] sm:$0xff] %v3209
        %4061 = vst [vmem:[%s160 + $0x1940] sm:$0xff] %v1418
        %4062 = vst [vmem:[%s160 + $0x1948] sm:$0xff] %v1674
        %4063 = vst [vmem:[%s160 + $0x1950] sm:$0xff] %v1930
        %4064 = vst [vmem:[%s160 + $0x1958] sm:$0xff] %v2186
        %4065 = vst [vmem:[%s160 + $0x1960] sm:$0xff] %v2442
        %4066 = vst [vmem:[%s160 + $0x1968] sm:$0xff] %v2698
        %4067 = vst [vmem:[%s160 + $0x1970] sm:$0xff] %v2954
        %4068 = vst [vmem:[%s160 + $0x1978] sm:$0xff] %v3210
        %4069 = vst [vmem:[%s160 + $0x1980] sm:$0xff] %v1419
        %4070 = vst [vmem:[%s160 + $0x1988] sm:$0xff] %v1675
        %4071 = vst [vmem:[%s160 + $0x1990] sm:$0xff] %v1931
        %4072 = vst [vmem:[%s160 + $0x1998] sm:$0xff] %v2187
        %4073 = vst [vmem:[%s160 + $0x19a0] sm:$0xff] %v2443
        %4074 = vst [vmem:[%s160 + $0x19a8] sm:$0xff] %v2699
        %4075 = vst [vmem:[%s160 + $0x19b0] sm:$0xff] %v2955
        %4076 = vst [vmem:[%s160 + $0x19b8] sm:$0xff] %v3211
        %4077 = vst [vmem:[%s160 + $0x19c0] sm:$0xff] %v1420
        %4078 = vst [vmem:[%s160 + $0x19c8] sm:$0xff] %v1676
        %4079 = vst [vmem:[%s160 + $0x19d0] sm:$0xff] %v1932
        %4080 = vst [vmem:[%s160 + $0x19d8] sm:$0xff] %v2188
        %4081 = vst [vmem:[%s160 + $0x19e0] sm:$0xff] %v2444
        %4082 = vst [vmem:[%s160 + $0x19e8] sm:$0xff] %v2700
        %4083 = vst [vmem:[%s160 + $0x19f0] sm:$0xff] %v2956
        %4084 = vst [vmem:[%s160 + $0x19f8] sm:$0xff] %v3212
        %4085 = vst [vmem:[%s160 + $0x1a00] sm:$0xff] %v1421
        %4086 = vst [vmem:[%s160 + $0x1a08] sm:$0xff] %v1677
        %4087 = vst [vmem:[%s160 + $0x1a10] sm:$0xff] %v1933
        %4088 = vst [vmem:[%s160 + $0x1a18] sm:$0xff] %v2189
        %4089 = vst [vmem:[%s160 + $0x1a20] sm:$0xff] %v2445
        %4090 = vst [vmem:[%s160 + $0x1a28] sm:$0xff] %v2701
        %4091 = vst [vmem:[%s160 + $0x1a30] sm:$0xff] %v2957
        %4092 = vst [vmem:[%s160 + $0x1a38] sm:$0xff] %v3213
        %4093 = vst [vmem:[%s160 + $0x1a40] sm:$0xff] %v1422
        %4094 = vst [vmem:[%s160 + $0x1a48] sm:$0xff] %v1678
        %4095 = vst [vmem:[%s160 + $0x1a50] sm:$0xff] %v1934
        %4096 = vst [vmem:[%s160 + $0x1a58] sm:$0xff] %v2190
        %4097 = vst [vmem:[%s160 + $0x1a60] sm:$0xff] %v2446
        %4098 = vst [vmem:[%s160 + $0x1a68] sm:$0xff] %v2702
        %4099 = vst [vmem:[%s160 + $0x1a70] sm:$0xff] %v2958
        %4100 = vst [vmem:[%s160 + $0x1a78] sm:$0xff] %v3214
        %4101 = vst [vmem:[%s160 + $0x1a80] sm:$0xff] %v1423
        %4102 = vst [vmem:[%s160 + $0x1a88] sm:$0xff] %v1679
        %4103 = vst [vmem:[%s160 + $0x1a90] sm:$0xff] %v1935
        %4104 = vst [vmem:[%s160 + $0x1a98] sm:$0xff] %v2191
        %4105 = vst [vmem:[%s160 + $0x1aa0] sm:$0xff] %v2447
        %4106 = vst [vmem:[%s160 + $0x1aa8] sm:$0xff] %v2703
        %4107 = vst [vmem:[%s160 + $0x1ab0] sm:$0xff] %v2959
        %4108 = vst [vmem:[%s160 + $0x1ab8] sm:$0xff] %v3215
        %4109 = vst [vmem:[%s160 + $0x1ac0] sm:$0xff] %v1424
        %4110 = vst [vmem:[%s160 + $0x1ac8] sm:$0xff] %v1680
        %4111 = vst [vmem:[%s160 + $0x1ad0] sm:$0xff] %v1936
        %4112 = vst [vmem:[%s160 + $0x1ad8] sm:$0xff] %v2192
        %4113 = vst [vmem:[%s160 + $0x1ae0] sm:$0xff] %v2448
        %4114 = vst [vmem:[%s160 + $0x1ae8] sm:$0xff] %v2704
        %4115 = vst [vmem:[%s160 + $0x1af0] sm:$0xff] %v2960
        %4116 = vst [vmem:[%s160 + $0x1af8] sm:$0xff] %v3216
        %4117 = vst [vmem:[%s160 + $0x1b00] sm:$0xff] %v1425
        %4118 = vst [vmem:[%s160 + $0x1b08] sm:$0xff] %v1681
        %4119 = vst [vmem:[%s160 + $0x1b10] sm:$0xff] %v1937
        %4120 = vst [vmem:[%s160 + $0x1b18] sm:$0xff] %v2193
        %4121 = vst [vmem:[%s160 + $0x1b20] sm:$0xff] %v2449
        %4122 = vst [vmem:[%s160 + $0x1b28] sm:$0xff] %v2705
        %4123 = vst [vmem:[%s160 + $0x1b30] sm:$0xff] %v2961
        %4124 = vst [vmem:[%s160 + $0x1b38] sm:$0xff] %v3217
        %4125 = vst [vmem:[%s160 + $0x1b40] sm:$0xff] %v1426
        %4126 = vst [vmem:[%s160 + $0x1b48] sm:$0xff] %v1682
        %4127 = vst [vmem:[%s160 + $0x1b50] sm:$0xff] %v1938
        %4128 = vst [vmem:[%s160 + $0x1b58] sm:$0xff] %v2194
        %4129 = vst [vmem:[%s160 + $0x1b60] sm:$0xff] %v2450
        %4130 = vst [vmem:[%s160 + $0x1b68] sm:$0xff] %v2706
        %4131 = vst [vmem:[%s160 + $0x1b70] sm:$0xff] %v2962
        %4132 = vst [vmem:[%s160 + $0x1b78] sm:$0xff] %v3218
        %4133 = vst [vmem:[%s160 + $0x1b80] sm:$0xff] %v1427
        %4134 = vst [vmem:[%s160 + $0x1b88] sm:$0xff] %v1683
        %4135 = vst [vmem:[%s160 + $0x1b90] sm:$0xff] %v1939
        %4136 = vst [vmem:[%s160 + $0x1b98] sm:$0xff] %v2195
        %4137 = vst [vmem:[%s160 + $0x1ba0] sm:$0xff] %v2451
        %4138 = vst [vmem:[%s160 + $0x1ba8] sm:$0xff] %v2707
        %4139 = vst [vmem:[%s160 + $0x1bb0] sm:$0xff] %v2963
        %4140 = vst [vmem:[%s160 + $0x1bb8] sm:$0xff] %v3219
        %4141 = vst [vmem:[%s160 + $0x1bc0] sm:$0xff] %v1428
        %4142 = vst [vmem:[%s160 + $0x1bc8] sm:$0xff] %v1684
        %4143 = vst [vmem:[%s160 + $0x1bd0] sm:$0xff] %v1940
        %4144 = vst [vmem:[%s160 + $0x1bd8] sm:$0xff] %v2196
        %4145 = vst [vmem:[%s160 + $0x1be0] sm:$0xff] %v2452
        %4146 = vst [vmem:[%s160 + $0x1be8] sm:$0xff] %v2708
        %4147 = vst [vmem:[%s160 + $0x1bf0] sm:$0xff] %v2964
        %4148 = vst [vmem:[%s160 + $0x1bf8] sm:$0xff] %v3220
        %4149 = vst [vmem:[%s160 + $0x1c00] sm:$0xff] %v1445
        %4150 = vst [vmem:[%s160 + $0x1c08] sm:$0xff] %v1701
        %4151 = vst [vmem:[%s160 + $0x1c10] sm:$0xff] %v1957
        %4152 = vst [vmem:[%s160 + $0x1c18] sm:$0xff] %v2213
        %4153 = vst [vmem:[%s160 + $0x1c20] sm:$0xff] %v2469
        %4154 = vst [vmem:[%s160 + $0x1c28] sm:$0xff] %v2725
        %4155 = vst [vmem:[%s160 + $0x1c30] sm:$0xff] %v2981
        %4156 = vst [vmem:[%s160 + $0x1c38] sm:$0xff] %v3237
        %4157 = vst [vmem:[%s160 + $0x1c40] sm:$0xff] %v1446
        %4158 = vst [vmem:[%s160 + $0x1c48] sm:$0xff] %v1702
        %4159 = vst [vmem:[%s160 + $0x1c50] sm:$0xff] %v1958
        %4160 = vst [vmem:[%s160 + $0x1c58] sm:$0xff] %v2214
        %4161 = vst [vmem:[%s160 + $0x1c60] sm:$0xff] %v2470
        %4162 = vst [vmem:[%s160 + $0x1c68] sm:$0xff] %v2726
        %4163 = vst [vmem:[%s160 + $0x1c70] sm:$0xff] %v2982
        %4164 = vst [vmem:[%s160 + $0x1c78] sm:$0xff] %v3238
        %4165 = vst [vmem:[%s160 + $0x1c80] sm:$0xff] %v1447
        %4166 = vst [vmem:[%s160 + $0x1c88] sm:$0xff] %v1703
        %4167 = vst [vmem:[%s160 + $0x1c90] sm:$0xff] %v1959
        %4168 = vst [vmem:[%s160 + $0x1c98] sm:$0xff] %v2215
        %4169 = vst [vmem:[%s160 + $0x1ca0] sm:$0xff] %v2471
        %4170 = vst [vmem:[%s160 + $0x1ca8] sm:$0xff] %v2727
        %4171 = vst [vmem:[%s160 + $0x1cb0] sm:$0xff] %v2983
        %4172 = vst [vmem:[%s160 + $0x1cb8] sm:$0xff] %v3239
        %4173 = vst [vmem:[%s160 + $0x1cc0] sm:$0xff] %v1448
        %4174 = vst [vmem:[%s160 + $0x1cc8] sm:$0xff] %v1704
        %4175 = vst [vmem:[%s160 + $0x1cd0] sm:$0xff] %v1960
        %4176 = vst [vmem:[%s160 + $0x1cd8] sm:$0xff] %v2216
        %4177 = vst [vmem:[%s160 + $0x1ce0] sm:$0xff] %v2472
        %4178 = vst [vmem:[%s160 + $0x1ce8] sm:$0xff] %v2728
        %4179 = vst [vmem:[%s160 + $0x1cf0] sm:$0xff] %v2984
        %4180 = vst [vmem:[%s160 + $0x1cf8] sm:$0xff] %v3240
        %4181 = vst [vmem:[%s160 + $0x1d00] sm:$0xff] %v1449
        %4182 = vst [vmem:[%s160 + $0x1d08] sm:$0xff] %v1705
        %4183 = vst [vmem:[%s160 + $0x1d10] sm:$0xff] %v1961
        %4184 = vst [vmem:[%s160 + $0x1d18] sm:$0xff] %v2217
        %4185 = vst [vmem:[%s160 + $0x1d20] sm:$0xff] %v2473
        %4186 = vst [vmem:[%s160 + $0x1d28] sm:$0xff] %v2729
        %4187 = vst [vmem:[%s160 + $0x1d30] sm:$0xff] %v2985
        %4188 = vst [vmem:[%s160 + $0x1d38] sm:$0xff] %v3241
        %4189 = vst [vmem:[%s160 + $0x1d40] sm:$0xff] %v1450
        %4190 = vst [vmem:[%s160 + $0x1d48] sm:$0xff] %v1706
        %4191 = vst [vmem:[%s160 + $0x1d50] sm:$0xff] %v1962
        %4192 = vst [vmem:[%s160 + $0x1d58] sm:$0xff] %v2218
        %4193 = vst [vmem:[%s160 + $0x1d60] sm:$0xff] %v2474
        %4194 = vst [vmem:[%s160 + $0x1d68] sm:$0xff] %v2730
        %4195 = vst [vmem:[%s160 + $0x1d70] sm:$0xff] %v2986
        %4196 = vst [vmem:[%s160 + $0x1d78] sm:$0xff] %v3242
        %4197 = vst [vmem:[%s160 + $0x1d80] sm:$0xff] %v1451
        %4198 = vst [vmem:[%s160 + $0x1d88] sm:$0xff] %v1707
        %4199 = vst [vmem:[%s160 + $0x1d90] sm:$0xff] %v1963
        %4200 = vst [vmem:[%s160 + $0x1d98] sm:$0xff] %v2219
        %4201 = vst [vmem:[%s160 + $0x1da0] sm:$0xff] %v2475
        %4202 = vst [vmem:[%s160 + $0x1da8] sm:$0xff] %v2731
        %4203 = vst [vmem:[%s160 + $0x1db0] sm:$0xff] %v2987
        %4204 = vst [vmem:[%s160 + $0x1db8] sm:$0xff] %v3243
        %4205 = vst [vmem:[%s160 + $0x1dc0] sm:$0xff] %v1452
        %4206 = vst [vmem:[%s160 + $0x1dc8] sm:$0xff] %v1708
        %4207 = vst [vmem:[%s160 + $0x1dd0] sm:$0xff] %v1964
        %4208 = vst [vmem:[%s160 + $0x1dd8] sm:$0xff] %v2220
        %4209 = vst [vmem:[%s160 + $0x1de0] sm:$0xff] %v2476
        %4210 = vst [vmem:[%s160 + $0x1de8] sm:$0xff] %v2732
        %4211 = vst [vmem:[%s160 + $0x1df0] sm:$0xff] %v2988
        %4212 = vst [vmem:[%s160 + $0x1df8] sm:$0xff] %v3244
        %4213 = vst [vmem:[%s160 + $0x1e00] sm:$0xff] %v1453
        %4214 = vst [vmem:[%s160 + $0x1e08] sm:$0xff] %v1709
        %4215 = vst [vmem:[%s160 + $0x1e10] sm:$0xff] %v1965
        %4216 = vst [vmem:[%s160 + $0x1e18] sm:$0xff] %v2221
        %4217 = vst [vmem:[%s160 + $0x1e20] sm:$0xff] %v2477
        %4218 = vst [vmem:[%s160 + $0x1e28] sm:$0xff] %v2733
        %4219 = vst [vmem:[%s160 + $0x1e30] sm:$0xff] %v2989
        %4220 = vst [vmem:[%s160 + $0x1e38] sm:$0xff] %v3245
        %4221 = vst [vmem:[%s160 + $0x1e40] sm:$0xff] %v1454
        %4222 = vst [vmem:[%s160 + $0x1e48] sm:$0xff] %v1710
        %4223 = vst [vmem:[%s160 + $0x1e50] sm:$0xff] %v1966
        %4224 = vst [vmem:[%s160 + $0x1e58] sm:$0xff] %v2222
        %4225 = vst [vmem:[%s160 + $0x1e60] sm:$0xff] %v2478
        %4226 = vst [vmem:[%s160 + $0x1e68] sm:$0xff] %v2734
        %4227 = vst [vmem:[%s160 + $0x1e70] sm:$0xff] %v2990
        %4228 = vst [vmem:[%s160 + $0x1e78] sm:$0xff] %v3246
        %4229 = vst [vmem:[%s160 + $0x1e80] sm:$0xff] %v1455
        %4230 = vst [vmem:[%s160 + $0x1e88] sm:$0xff] %v1711
        %4231 = vst [vmem:[%s160 + $0x1e90] sm:$0xff] %v1967
        %4232 = vst [vmem:[%s160 + $0x1e98] sm:$0xff] %v2223
        %4233 = vst [vmem:[%s160 + $0x1ea0] sm:$0xff] %v2479
        %4234 = vst [vmem:[%s160 + $0x1ea8] sm:$0xff] %v2735
        %4235 = vst [vmem:[%s160 + $0x1eb0] sm:$0xff] %v2991
        %4236 = vst [vmem:[%s160 + $0x1eb8] sm:$0xff] %v3247
        %4237 = vst [vmem:[%s160 + $0x1ec0] sm:$0xff] %v1456
        %4238 = vst [vmem:[%s160 + $0x1ec8] sm:$0xff] %v1712
        %4239 = vst [vmem:[%s160 + $0x1ed0] sm:$0xff] %v1968
        %4240 = vst [vmem:[%s160 + $0x1ed8] sm:$0xff] %v2224
        %4241 = vst [vmem:[%s160 + $0x1ee0] sm:$0xff] %v2480
        %4242 = vst [vmem:[%s160 + $0x1ee8] sm:$0xff] %v2736
        %4243 = vst [vmem:[%s160 + $0x1ef0] sm:$0xff] %v2992
        %4244 = vst [vmem:[%s160 + $0x1ef8] sm:$0xff] %v3248
        %4245 = vst [vmem:[%s160 + $0x1f00] sm:$0xff] %v1457
        %4246 = vst [vmem:[%s160 + $0x1f08] sm:$0xff] %v1713
        %4247 = vst [vmem:[%s160 + $0x1f10] sm:$0xff] %v1969
        %4248 = vst [vmem:[%s160 + $0x1f18] sm:$0xff] %v2225
        %4249 = vst [vmem:[%s160 + $0x1f20] sm:$0xff] %v2481
        %4250 = vst [vmem:[%s160 + $0x1f28] sm:$0xff] %v2737
        %4251 = vst [vmem:[%s160 + $0x1f30] sm:$0xff] %v2993
        %4252 = vst [vmem:[%s160 + $0x1f38] sm:$0xff] %v3249
        %4253 = vst [vmem:[%s160 + $0x1f40] sm:$0xff] %v1458
        %4254 = vst [vmem:[%s160 + $0x1f48] sm:$0xff] %v1714
        %4255 = vst [vmem:[%s160 + $0x1f50] sm:$0xff] %v1970
        %4256 = vst [vmem:[%s160 + $0x1f58] sm:$0xff] %v2226
        %4257 = vst [vmem:[%s160 + $0x1f60] sm:$0xff] %v2482
        %4258 = vst [vmem:[%s160 + $0x1f68] sm:$0xff] %v2738
        %4259 = vst [vmem:[%s160 + $0x1f70] sm:$0xff] %v2994
        %4260 = vst [vmem:[%s160 + $0x1f78] sm:$0xff] %v3250
        %4261 = vst [vmem:[%s160 + $0x1f80] sm:$0xff] %v1459
        %4262 = vst [vmem:[%s160 + $0x1f88] sm:$0xff] %v1715
        %4263 = vst [vmem:[%s160 + $0x1f90] sm:$0xff] %v1971
        %4264 = vst [vmem:[%s160 + $0x1f98] sm:$0xff] %v2227
        %4265 = vst [vmem:[%s160 + $0x1fa0] sm:$0xff] %v2483
        %4266 = vst [vmem:[%s160 + $0x1fa8] sm:$0xff] %v2739
        %4267 = vst [vmem:[%s160 + $0x1fb0] sm:$0xff] %v2995
        %4268 = vst [vmem:[%s160 + $0x1fb8] sm:$0xff] %v3251
        %4269 = vst [vmem:[%s160 + $0x1fc0] sm:$0xff] %v1460
        %4270 = vst [vmem:[%s160 + $0x1fc8] sm:$0xff] %v1716
        %4271 = vst [vmem:[%s160 + $0x1fd0] sm:$0xff] %v1972
        %4272 = vst [vmem:[%s160 + $0x1fd8] sm:$0xff] %v2228
        %4273 = vst [vmem:[%s160 + $0x1fe0] sm:$0xff] %v2484
        %4274 = vst [vmem:[%s160 + $0x1fe8] sm:$0xff] %v2740
        %4275 = vst [vmem:[%s160 + $0x1ff0] sm:$0xff] %v2996
        %4276 = vst [vmem:[%s160 + $0x1ff8] sm:$0xff] %v3252
        %s4277 = sand.u32 %s65, 1
        %s4278 = sand.u32 %s65, 1
        %s4279 = smul.addr %s4278, 8192
        %s4280 = scalar_lea.vmem [#allocation4], %s4279
        // Predicated region
        $region29: #{tpu_custom_call.1} parent=23 // pred_check
          %p4281 = pneg %p75
        $region30: #{tpu_custom_call.1} parent=23 // pred_check_branch
          %4283 = sbr.rel (%p4281) target = $region32
        $region31: #{tpu_custom_call.1} parent=23 // pred_region
          %s4284 = smul.u32 128, %s20
          %s4285 = smul.u32 8, %s19
          %s4286 = ssub.s32 161, %s4284
          %p4287 = scmp.lt.s32.totalorder %s4286, 128
          %s4288 = scalar_select %p4287, %s4286, 128
          %s4289 = smul.u32 128, %s4288
          %s4290 = ssub.s32 10, %s4285
          %p4291 = scmp.lt.s32.totalorder %s4290, 8
          %s4292 = scalar_select %p4291, %s4290, 8
          %s4293 = smul.u32 %s4289, %s4292
          %p4294 = scmp.ne.s32.totalorder 0, %s4293
          %s4295 = smul.addr %s4284, 10
          %s4296 = sadd.s32 %s4285, %s4295
          %s4297 = smul.addr %s4296, 8
          %s4298 = scalar_lea.vmem %s1, %s4297
          %s4299 = smul.u32 %s4292, 8
          // Predicated region
          $region33: #{tpu_custom_call.1} parent=31 // pred_check
            %p4300 = pneg %p4294
          $region34: #{tpu_custom_call.1} parent=31 // pred_check_branch
            %4302 = sbr.rel (%p4300) target = $region36
          $region35: #{tpu_custom_call.1} parent=31 // pred_region
            %p4303 = scmp.lt.u32.totalorder %s4299, 8
            %p4304 = pneg %p4303
            // Predicated region
            $region37: #{tpu_custom_call.1} parent=35 // pred_check
              _
            $region38: #{tpu_custom_call.1} parent=35 // pred_check_branch
              %4306 = sbr.rel (%p4303) target = $region40
            $region39: #{tpu_custom_call.1} parent=35 // pred_region
              %s4481 = sand.u32 %s4299, 7
              %p4482 = scmp.eq.s32.totalorder %s4481, 0
              // Predicated region
              $region59: #{tpu_custom_call.1} parent=39 // pred_check
                %p4483 = pneg %p4482
              $region60: #{tpu_custom_call.1} parent=39 // pred_check_branch
                %4485 = sbr.rel (%p4483) target = $region62
              $region61: #{tpu_custom_call.1} parent=39 // pred_region
                %s4486 = sshrl.u32 %s4299, 3
                %s4487 = sshrl.u32 %s4288, 4
                %s4488 = sshrl.u32 %s4486, 2
                %s4489 = smul.u32 %s4487, %s4488
                // While loop
                $region63: #{tpu_custom_call.1} parent=61 // loop_pre_header
                  _
                $region64: #{tpu_custom_call.1} parent=61 // loop_header
                  %s4493 = sphi 0, %s4495
                  %p4494 = scmp.ge.s32.totalorder %s4493, %s4489
                  %s4498 = sphi 0, %s4636
                  %s4499 = sphi 0, %s4632
                  %s4500 = sphi %s4280, %s4643
                  %s4501 = sphi %s4298, %s4644
                $region65: #{tpu_custom_call.1} parent=61 // loop_header_branch
                  %4497 = sbr.rel (%p4494) target = $region69
                $region66: #{tpu_custom_call.1} parent=61 // loop_body
                  %v4502 = vld [vmem:[%s4500] sm:$0xff]
                  %4503 = vst [vmem:[%s4501] sm:$0xff] %v4502
                  %v4504 = vld [vmem:[%s4500 + $0x8] sm:$0xff]
                  %4505 = vst [vmem:[%s4501 + $0x8] sm:$0xff] %v4504
                  %v4506 = vld [vmem:[%s4500 + $0x10] sm:$0xff]
                  %4507 = vst [vmem:[%s4501 + $0x10] sm:$0xff] %v4506
                  %v4508 = vld [vmem:[%s4500 + $0x18] sm:$0xff]
                  %4509 = vst [vmem:[%s4501 + $0x18] sm:$0xff] %v4508
                  %v4510 = vld [vmem:[%s4500 + $0x40] sm:$0xff]
                  %4511 = vst [vmem:[%s4501 + $0x50] sm:$0xff] %v4510
                  %v4512 = vld [vmem:[%s4500 + $0x48] sm:$0xff]
                  %4513 = vst [vmem:[%s4501 + $0x58] sm:$0xff] %v4512
                  %v4514 = vld [vmem:[%s4500 + $0x50] sm:$0xff]
                  %4515 = vst [vmem:[%s4501 + $0x60] sm:$0xff] %v4514
                  %v4516 = vld [vmem:[%s4500 + $0x58] sm:$0xff]
                  %4517 = vst [vmem:[%s4501 + $0x68] sm:$0xff] %v4516
                  %v4518 = vld [vmem:[%s4500 + $0x80] sm:$0xff]
                  %4519 = vst [vmem:[%s4501 + $0xa0] sm:$0xff] %v4518
                  %v4520 = vld [vmem:[%s4500 + $0x88] sm:$0xff]
                  %4521 = vst [vmem:[%s4501 + $0xa8] sm:$0xff] %v4520
                  %v4522 = vld [vmem:[%s4500 + $0x90] sm:$0xff]
                  %4523 = vst [vmem:[%s4501 + $0xb0] sm:$0xff] %v4522
                  %v4524 = vld [vmem:[%s4500 + $0x98] sm:$0xff]
                  %4525 = vst [vmem:[%s4501 + $0xb8] sm:$0xff] %v4524
                  %v4526 = vld [vmem:[%s4500 + $0xc0] sm:$0xff]
                  %4527 = vst [vmem:[%s4501 + $0xf0] sm:$0xff] %v4526
                  %v4528 = vld [vmem:[%s4500 + $0xc8] sm:$0xff]
                  %4529 = vst [vmem:[%s4501 + $0xf8] sm:$0xff] %v4528
                  %v4530 = vld [vmem:[%s4500 + $0xd0] sm:$0xff]
                  %4531 = vst [vmem:[%s4501 + $0x100] sm:$0xff] %v4530
                  %v4532 = vld [vmem:[%s4500 + $0xd8] sm:$0xff]
                  %4533 = vst [vmem:[%s4501 + $0x108] sm:$0xff] %v4532
                  %v4534 = vld [vmem:[%s4500 + $0x100] sm:$0xff]
                  %4535 = vst [vmem:[%s4501 + $0x140] sm:$0xff] %v4534
                  %v4536 = vld [vmem:[%s4500 + $0x108] sm:$0xff]
                  %4537 = vst [vmem:[%s4501 + $0x148] sm:$0xff] %v4536
                  %v4538 = vld [vmem:[%s4500 + $0x110] sm:$0xff]
                  %4539 = vst [vmem:[%s4501 + $0x150] sm:$0xff] %v4538
                  %v4540 = vld [vmem:[%s4500 + $0x118] sm:$0xff]
                  %4541 = vst [vmem:[%s4501 + $0x158] sm:$0xff] %v4540
                  %v4542 = vld [vmem:[%s4500 + $0x140] sm:$0xff]
                  %4543 = vst [vmem:[%s4501 + $0x190] sm:$0xff] %v4542
                  %v4544 = vld [vmem:[%s4500 + $0x148] sm:$0xff]
                  %4545 = vst [vmem:[%s4501 + $0x198] sm:$0xff] %v4544
                  %v4546 = vld [vmem:[%s4500 + $0x150] sm:$0xff]
                  %4547 = vst [vmem:[%s4501 + $0x1a0] sm:$0xff] %v4546
                  %v4548 = vld [vmem:[%s4500 + $0x158] sm:$0xff]
                  %4549 = vst [vmem:[%s4501 + $0x1a8] sm:$0xff] %v4548
                  %v4550 = vld [vmem:[%s4500 + $0x180] sm:$0xff]
                  %4551 = vst [vmem:[%s4501 + $0x1e0] sm:$0xff] %v4550
                  %v4552 = vld [vmem:[%s4500 + $0x188] sm:$0xff]
                  %4553 = vst [vmem:[%s4501 + $0x1e8] sm:$0xff] %v4552
                  %v4554 = vld [vmem:[%s4500 + $0x190] sm:$0xff]
                  %4555 = vst [vmem:[%s4501 + $0x1f0] sm:$0xff] %v4554
                  %v4556 = vld [vmem:[%s4500 + $0x198] sm:$0xff]
                  %4557 = vst [vmem:[%s4501 + $0x1f8] sm:$0xff] %v4556
                  %v4558 = vld [vmem:[%s4500 + $0x1c0] sm:$0xff]
                  %4559 = vst [vmem:[%s4501 + $0x230] sm:$0xff] %v4558
                  %v4560 = vld [vmem:[%s4500 + $0x1c8] sm:$0xff]
                  %4561 = vst [vmem:[%s4501 + $0x238] sm:$0xff] %v4560
                  %v4562 = vld [vmem:[%s4500 + $0x1d0] sm:$0xff]
                  %4563 = vst [vmem:[%s4501 + $0x240] sm:$0xff] %v4562
                  %v4564 = vld [vmem:[%s4500 + $0x1d8] sm:$0xff]
                  %4565 = vst [vmem:[%s4501 + $0x248] sm:$0xff] %v4564
                  %v4566 = vld [vmem:[%s4500 + $0x200] sm:$0xff]
                  %4567 = vst [vmem:[%s4501 + $0x280] sm:$0xff] %v4566
                  %v4568 = vld [vmem:[%s4500 + $0x208] sm:$0xff]
                  %4569 = vst [vmem:[%s4501 + $0x288] sm:$0xff] %v4568
                  %v4570 = vld [vmem:[%s4500 + $0x210] sm:$0xff]
                  %4571 = vst [vmem:[%s4501 + $0x290] sm:$0xff] %v4570
                  %v4572 = vld [vmem:[%s4500 + $0x218] sm:$0xff]
                  %4573 = vst [vmem:[%s4501 + $0x298] sm:$0xff] %v4572
                  %v4574 = vld [vmem:[%s4500 + $0x240] sm:$0xff]
                  %4575 = vst [vmem:[%s4501 + $0x2d0] sm:$0xff] %v4574
                  %v4576 = vld [vmem:[%s4500 + $0x248] sm:$0xff]
                  %4577 = vst [vmem:[%s4501 + $0x2d8] sm:$0xff] %v4576
                  %v4578 = vld [vmem:[%s4500 + $0x250] sm:$0xff]
                  %4579 = vst [vmem:[%s4501 + $0x2e0] sm:$0xff] %v4578
                  %v4580 = vld [vmem:[%s4500 + $0x258] sm:$0xff]
                  %4581 = vst [vmem:[%s4501 + $0x2e8] sm:$0xff] %v4580
                  %v4582 = vld [vmem:[%s4500 + $0x280] sm:$0xff]
                  %4583 = vst [vmem:[%s4501 + $0x320] sm:$0xff] %v4582
                  %v4584 = vld [vmem:[%s4500 + $0x288] sm:$0xff]
                  %4585 = vst [vmem:[%s4501 + $0x328] sm:$0xff] %v4584
                  %v4586 = vld [vmem:[%s4500 + $0x290] sm:$0xff]
                  %4587 = vst [vmem:[%s4501 + $0x330] sm:$0xff] %v4586
                  %v4588 = vld [vmem:[%s4500 + $0x298] sm:$0xff]
                  %4589 = vst [vmem:[%s4501 + $0x338] sm:$0xff] %v4588
                  %v4590 = vld [vmem:[%s4500 + $0x2c0] sm:$0xff]
                  %4591 = vst [vmem:[%s4501 + $0x370] sm:$0xff] %v4590
                  %v4592 = vld [vmem:[%s4500 + $0x2c8] sm:$0xff]
                  %4593 = vst [vmem:[%s4501 + $0x378] sm:$0xff] %v4592
                  %v4594 = vld [vmem:[%s4500 + $0x2d0] sm:$0xff]
                  %4595 = vst [vmem:[%s4501 + $0x380] sm:$0xff] %v4594
                  %v4596 = vld [vmem:[%s4500 + $0x2d8] sm:$0xff]
                  %4597 = vst [vmem:[%s4501 + $0x388] sm:$0xff] %v4596
                  %v4598 = vld [vmem:[%s4500 + $0x300] sm:$0xff]
                  %4599 = vst [vmem:[%s4501 + $0x3c0] sm:$0xff] %v4598
                  %v4600 = vld [vmem:[%s4500 + $0x308] sm:$0xff]
                  %4601 = vst [vmem:[%s4501 + $0x3c8] sm:$0xff] %v4600
                  %v4602 = vld [vmem:[%s4500 + $0x310] sm:$0xff]
                  %4603 = vst [vmem:[%s4501 + $0x3d0] sm:$0xff] %v4602
                  %v4604 = vld [vmem:[%s4500 + $0x318] sm:$0xff]
                  %4605 = vst [vmem:[%s4501 + $0x3d8] sm:$0xff] %v4604
                  %v4606 = vld [vmem:[%s4500 + $0x340] sm:$0xff]
                  %4607 = vst [vmem:[%s4501 + $0x410] sm:$0xff] %v4606
                  %v4608 = vld [vmem:[%s4500 + $0x348] sm:$0xff]
                  %4609 = vst [vmem:[%s4501 + $0x418] sm:$0xff] %v4608
                  %v4610 = vld [vmem:[%s4500 + $0x350] sm:$0xff]
                  %4611 = vst [vmem:[%s4501 + $0x420] sm:$0xff] %v4610
                  %v4612 = vld [vmem:[%s4500 + $0x358] sm:$0xff]
                  %4613 = vst [vmem:[%s4501 + $0x428] sm:$0xff] %v4612
                  %v4614 = vld [vmem:[%s4500 + $0x380] sm:$0xff]
                  %4615 = vst [vmem:[%s4501 + $0x460] sm:$0xff] %v4614
                  %v4616 = vld [vmem:[%s4500 + $0x388] sm:$0xff]
                  %4617 = vst [vmem:[%s4501 + $0x468] sm:$0xff] %v4616
                  %v4618 = vld [vmem:[%s4500 + $0x390] sm:$0xff]
                  %4619 = vst [vmem:[%s4501 + $0x470] sm:$0xff] %v4618
                  %v4620 = vld [vmem:[%s4500 + $0x398] sm:$0xff]
                  %4621 = vst [vmem:[%s4501 + $0x478] sm:$0xff] %v4620
                  %v4622 = vld [vmem:[%s4500 + $0x3c0] sm:$0xff]
                  %4623 = vst [vmem:[%s4501 + $0x4b0] sm:$0xff] %v4622
                  %v4624 = vld [vmem:[%s4500 + $0x3c8] sm:$0xff]
                  %4625 = vst [vmem:[%s4501 + $0x4b8] sm:$0xff] %v4624
                  %v4626 = vld [vmem:[%s4500 + $0x3d0] sm:$0xff]
                  %4627 = vst [vmem:[%s4501 + $0x4c0] sm:$0xff] %v4626
                  %v4628 = vld [vmem:[%s4500 + $0x3d8] sm:$0xff]
                  %4629 = vst [vmem:[%s4501 + $0x4c8] sm:$0xff] %v4628
                  %s4630 = sadd.s32 1, %s4499
                  %p4631 = scmp.ge.s32.totalorder %s4630, %s4488
                  %s4632 = scalar_select %p4631, 0, %s4630
                  %s4633 = sadd.s32 1, %s4498
                  %s4634 = scalar_select %p4631, %s4633, %s4498
                  %p4635 = scmp.ge.s32.totalorder %s4634, %s4487
                  %s4636 = scalar_select %p4635, 0, %s4634
                  %s4637 = smul.u32 %s4636, 1024
                  %s4638 = smul.u32 %s4632, 32
                  %s4639 = sadd.s32 %s4637, %s4638
                  %s4640 = smul.u32 %s4636, 1280
                  %s4641 = smul.u32 %s4632, 32
                  %s4642 = sadd.s32 %s4640, %s4641
                  %s4643 = scalar_lea.vmem %s4280, %s4639 [#allocation4]
                  %s4644 = scalar_lea.vmem %s4298, %s4642
                $region67: #{tpu_custom_call.1} parent=61 // loop_footer
                  %s4495 = sadd.s32 %s4493, 1
                $region68: #{tpu_custom_call.1} parent=61 // loop_footer_branch
                  %4492 = sbr.rel target = $region64
                $region69: #{tpu_custom_call.1} parent=61 // loop_exit
                  _
                %s4645 = sshrl.u32 %s4486, 2
                %s4646 = sshrl.u32 %s4288, 4
                %s4647 = sand.u32 %s4288, 15
                %s4648 = smul.u32 %s4646, 16
                %s4649 = smul.u32 64, %s4648
                %s4650 = scalar_lea.vmem %s4280, %s4649 [#allocation4]
                %s4651 = smul.u32 80, %s4648
                %s4652 = scalar_lea.vmem %s4298, %s4651
                %s4653 = smul.u32 %s4647, %s4645
                // While loop
                $region70: #{tpu_custom_call.1} parent=61 // loop_pre_header
                  _
                $region71: #{tpu_custom_call.1} parent=61 // loop_header
                  %s4657 = sphi 0, %s4659
                  %p4658 = scmp.ge.s32.totalorder %s4657, %s4653
                  %s4662 = sphi 0, %s4680
                  %s4663 = sphi 0, %s4676
                  %s4664 = sphi %s4650, %s4687
                  %s4665 = sphi %s4652, %s4688
                $region72: #{tpu_custom_call.1} parent=61 // loop_header_branch
                  %4661 = sbr.rel (%p4658) target = $region76
                $region73: #{tpu_custom_call.1} parent=61 // loop_body
                  %v4666 = vld [vmem:[%s4664] sm:$0xff]
                  %4667 = vst [vmem:[%s4665] sm:$0xff] %v4666
                  %v4668 = vld [vmem:[%s4664 + $0x8] sm:$0xff]
                  %4669 = vst [vmem:[%s4665 + $0x8] sm:$0xff] %v4668
                  %v4670 = vld [vmem:[%s4664 + $0x10] sm:$0xff]
                  %4671 = vst [vmem:[%s4665 + $0x10] sm:$0xff] %v4670
                  %v4672 = vld [vmem:[%s4664 + $0x18] sm:$0xff]
                  %4673 = vst [vmem:[%s4665 + $0x18] sm:$0xff] %v4672
                  %s4674 = sadd.s32 1, %s4663
                  %p4675 = scmp.ge.s32.totalorder %s4674, %s4645
                  %s4676 = scalar_select %p4675, 0, %s4674
                  %s4677 = sadd.s32 1, %s4662
                  %s4678 = scalar_select %p4675, %s4677, %s4662
                  %p4679 = scmp.ge.s32.totalorder %s4678, %s4647
                  %s4680 = scalar_select %p4679, 0, %s4678
                  %s4681 = smul.u32 %s4680, 64
                  %s4682 = smul.u32 %s4676, 32
                  %s4683 = sadd.s32 %s4681, %s4682
                  %s4684 = smul.u32 %s4680, 80
                  %s4685 = smul.u32 %s4676, 32
                  %s4686 = sadd.s32 %s4684, %s4685
                  %s4687 = scalar_lea.vmem %s4650, %s4683 [#allocation4]
                  %s4688 = scalar_lea.vmem %s4652, %s4686
                $region74: #{tpu_custom_call.1} parent=61 // loop_footer
                  %s4659 = sadd.s32 %s4657, 1
                $region75: #{tpu_custom_call.1} parent=61 // loop_footer_branch
                  %4656 = sbr.rel target = $region71
                $region76: #{tpu_custom_call.1} parent=61 // loop_exit
                  _
                %s4689 = sshrl.u32 %s4486, 2
                %s4690 = sand.u32 %s4486, 3
                %s4691 = smul.u32 %s4689, 4
                %s4692 = smul.u32 128, %s4691
                %s4693 = sshra.s32 %s4692, 4
                %s4694 = scalar_lea.vmem %s4280, %s4693 [#allocation4]
                %s4695 = smul.u32 128, %s4691
                %s4696 = sshra.s32 %s4695, 4
                %s4697 = scalar_lea.vmem %s4298, %s4696
                %s4698 = smul.u32 %s4288, %s4690
                // While loop
                $region77: #{tpu_custom_call.1} parent=61 // loop_pre_header
                  _
                $region78: #{tpu_custom_call.1} parent=61 // loop_header
                  %s4702 = sphi 0, %s4704
                  %p4703 = scmp.ge.s32.totalorder %s4702, %s4698
                  %s4707 = sphi 0, %s4719
                  %s4708 = sphi 0, %s4715
                  %s4709 = sphi %s4694, %s4726
                  %s4710 = sphi %s4697, %s4727
                $region79: #{tpu_custom_call.1} parent=61 // loop_header_branch
                  %4706 = sbr.rel (%p4703) target = $region83
                $region80: #{tpu_custom_call.1} parent=61 // loop_body
                  %v4711 = vld [vmem:[%s4709] sm:$0xff]
                  %4712 = vst [vmem:[%s4710] sm:$0xff] %v4711
                  %s4713 = sadd.s32 1, %s4708
                  %p4714 = scmp.ge.s32.totalorder %s4713, %s4690
                  %s4715 = scalar_select %p4714, 0, %s4713
                  %s4716 = sadd.s32 1, %s4707
                  %s4717 = scalar_select %p4714, %s4716, %s4707
                  %p4718 = scmp.ge.s32.totalorder %s4717, %s4288
                  %s4719 = scalar_select %p4718, 0, %s4717
                  %s4720 = smul.u32 %s4719, 64
                  %s4721 = smul.u32 %s4715, 8
                  %s4722 = sadd.s32 %s4720, %s4721
                  %s4723 = smul.u32 %s4719, 80
                  %s4724 = smul.u32 %s4715, 8
                  %s4725 = sadd.s32 %s4723, %s4724
                  %s4726 = scalar_lea.vmem %s4694, %s4722 [#allocation4]
                  %s4727 = scalar_lea.vmem %s4697, %s4725
                $region81: #{tpu_custom_call.1} parent=61 // loop_footer
                  %s4704 = sadd.s32 %s4702, 1
                $region82: #{tpu_custom_call.1} parent=61 // loop_footer_branch
                  %4701 = sbr.rel target = $region78
                $region83: #{tpu_custom_call.1} parent=61 // loop_exit
                  _
              $region62: #{tpu_custom_call.1} parent=39 // pred_fallthru
                _
              %p4728 = pneg %p4482
              // Predicated region
              $region84: #{tpu_custom_call.1} parent=39 // pred_check
                _
              $region85: #{tpu_custom_call.1} parent=39 // pred_check_branch
                %4730 = sbr.rel (%p4482) target = $region87
              $region86: #{tpu_custom_call.1} parent=39 // pred_region
                %s4731 = sand.u32 %s4299, 7
                %s4732 = ssub.s32 %s4299, %s4731
                %s4733 = scalar_lea.vmem %s4280, %s4732 [#allocation4]
                %s4734 = ssub.s32 %s4299, %s4731
                %s4735 = scalar_lea.vmem %s4298, %s4734
                %s4736 = sshrl.u32 %s4299, 3
                %s4737 = sshrl.u32 %s4288, 4
                %s4738 = sshrl.u32 %s4736, 2
                %s4739 = smul.u32 %s4737, %s4738
                // While loop
                $region88: #{tpu_custom_call.1} parent=86 // loop_pre_header
                  _
                $region89: #{tpu_custom_call.1} parent=86 // loop_header
                  %s4743 = sphi 0, %s4745
                  %p4744 = scmp.ge.s32.totalorder %s4743, %s4739
                  %s4748 = sphi 0, %s4886
                  %s4749 = sphi 0, %s4882
                  %s4750 = sphi %s4280, %s4893
                  %s4751 = sphi %s4298, %s4894
                $region90: #{tpu_custom_call.1} parent=86 // loop_header_branch
                  %4747 = sbr.rel (%p4744) target = $region94
                $region91: #{tpu_custom_call.1} parent=86 // loop_body
                  %v4752 = vld [vmem:[%s4750] sm:$0xff]
                  %4753 = vst [vmem:[%s4751] sm:$0xff] %v4752
                  %v4754 = vld [vmem:[%s4750 + $0x8] sm:$0xff]
                  %4755 = vst [vmem:[%s4751 + $0x8] sm:$0xff] %v4754
                  %v4756 = vld [vmem:[%s4750 + $0x10] sm:$0xff]
                  %4757 = vst [vmem:[%s4751 + $0x10] sm:$0xff] %v4756
                  %v4758 = vld [vmem:[%s4750 + $0x18] sm:$0xff]
                  %4759 = vst [vmem:[%s4751 + $0x18] sm:$0xff] %v4758
                  %v4760 = vld [vmem:[%s4750 + $0x40] sm:$0xff]
                  %4761 = vst [vmem:[%s4751 + $0x50] sm:$0xff] %v4760
                  %v4762 = vld [vmem:[%s4750 + $0x48] sm:$0xff]
                  %4763 = vst [vmem:[%s4751 + $0x58] sm:$0xff] %v4762
                  %v4764 = vld [vmem:[%s4750 + $0x50] sm:$0xff]
                  %4765 = vst [vmem:[%s4751 + $0x60] sm:$0xff] %v4764
                  %v4766 = vld [vmem:[%s4750 + $0x58] sm:$0xff]
                  %4767 = vst [vmem:[%s4751 + $0x68] sm:$0xff] %v4766
                  %v4768 = vld [vmem:[%s4750 + $0x80] sm:$0xff]
                  %4769 = vst [vmem:[%s4751 + $0xa0] sm:$0xff] %v4768
                  %v4770 = vld [vmem:[%s4750 + $0x88] sm:$0xff]
                  %4771 = vst [vmem:[%s4751 + $0xa8] sm:$0xff] %v4770
                  %v4772 = vld [vmem:[%s4750 + $0x90] sm:$0xff]
                  %4773 = vst [vmem:[%s4751 + $0xb0] sm:$0xff] %v4772
                  %v4774 = vld [vmem:[%s4750 + $0x98] sm:$0xff]
                  %4775 = vst [vmem:[%s4751 + $0xb8] sm:$0xff] %v4774
                  %v4776 = vld [vmem:[%s4750 + $0xc0] sm:$0xff]
                  %4777 = vst [vmem:[%s4751 + $0xf0] sm:$0xff] %v4776
                  %v4778 = vld [vmem:[%s4750 + $0xc8] sm:$0xff]
                  %4779 = vst [vmem:[%s4751 + $0xf8] sm:$0xff] %v4778
                  %v4780 = vld [vmem:[%s4750 + $0xd0] sm:$0xff]
                  %4781 = vst [vmem:[%s4751 + $0x100] sm:$0xff] %v4780
                  %v4782 = vld [vmem:[%s4750 + $0xd8] sm:$0xff]
                  %4783 = vst [vmem:[%s4751 + $0x108] sm:$0xff] %v4782
                  %v4784 = vld [vmem:[%s4750 + $0x100] sm:$0xff]
                  %4785 = vst [vmem:[%s4751 + $0x140] sm:$0xff] %v4784
                  %v4786 = vld [vmem:[%s4750 + $0x108] sm:$0xff]
                  %4787 = vst [vmem:[%s4751 + $0x148] sm:$0xff] %v4786
                  %v4788 = vld [vmem:[%s4750 + $0x110] sm:$0xff]
                  %4789 = vst [vmem:[%s4751 + $0x150] sm:$0xff] %v4788
                  %v4790 = vld [vmem:[%s4750 + $0x118] sm:$0xff]
                  %4791 = vst [vmem:[%s4751 + $0x158] sm:$0xff] %v4790
                  %v4792 = vld [vmem:[%s4750 + $0x140] sm:$0xff]
                  %4793 = vst [vmem:[%s4751 + $0x190] sm:$0xff] %v4792
                  %v4794 = vld [vmem:[%s4750 + $0x148] sm:$0xff]
                  %4795 = vst [vmem:[%s4751 + $0x198] sm:$0xff] %v4794
                  %v4796 = vld [vmem:[%s4750 + $0x150] sm:$0xff]
                  %4797 = vst [vmem:[%s4751 + $0x1a0] sm:$0xff] %v4796
                  %v4798 = vld [vmem:[%s4750 + $0x158] sm:$0xff]
                  %4799 = vst [vmem:[%s4751 + $0x1a8] sm:$0xff] %v4798
                  %v4800 = vld [vmem:[%s4750 + $0x180] sm:$0xff]
                  %4801 = vst [vmem:[%s4751 + $0x1e0] sm:$0xff] %v4800
                  %v4802 = vld [vmem:[%s4750 + $0x188] sm:$0xff]
                  %4803 = vst [vmem:[%s4751 + $0x1e8] sm:$0xff] %v4802
                  %v4804 = vld [vmem:[%s4750 + $0x190] sm:$0xff]
                  %4805 = vst [vmem:[%s4751 + $0x1f0] sm:$0xff] %v4804
                  %v4806 = vld [vmem:[%s4750 + $0x198] sm:$0xff]
                  %4807 = vst [vmem:[%s4751 + $0x1f8] sm:$0xff] %v4806
                  %v4808 = vld [vmem:[%s4750 + $0x1c0] sm:$0xff]
                  %4809 = vst [vmem:[%s4751 + $0x230] sm:$0xff] %v4808
                  %v4810 = vld [vmem:[%s4750 + $0x1c8] sm:$0xff]
                  %4811 = vst [vmem:[%s4751 + $0x238] sm:$0xff] %v4810
                  %v4812 = vld [vmem:[%s4750 + $0x1d0] sm:$0xff]
                  %4813 = vst [vmem:[%s4751 + $0x240] sm:$0xff] %v4812
                  %v4814 = vld [vmem:[%s4750 + $0x1d8] sm:$0xff]
                  %4815 = vst [vmem:[%s4751 + $0x248] sm:$0xff] %v4814
                  %v4816 = vld [vmem:[%s4750 + $0x200] sm:$0xff]
                  %4817 = vst [vmem:[%s4751 + $0x280] sm:$0xff] %v4816
                  %v4818 = vld [vmem:[%s4750 + $0x208] sm:$0xff]
                  %4819 = vst [vmem:[%s4751 + $0x288] sm:$0xff] %v4818
                  %v4820 = vld [vmem:[%s4750 + $0x210] sm:$0xff]
                  %4821 = vst [vmem:[%s4751 + $0x290] sm:$0xff] %v4820
                  %v4822 = vld [vmem:[%s4750 + $0x218] sm:$0xff]
                  %4823 = vst [vmem:[%s4751 + $0x298] sm:$0xff] %v4822
                  %v4824 = vld [vmem:[%s4750 + $0x240] sm:$0xff]
                  %4825 = vst [vmem:[%s4751 + $0x2d0] sm:$0xff] %v4824
                  %v4826 = vld [vmem:[%s4750 + $0x248] sm:$0xff]
                  %4827 = vst [vmem:[%s4751 + $0x2d8] sm:$0xff] %v4826
                  %v4828 = vld [vmem:[%s4750 + $0x250] sm:$0xff]
                  %4829 = vst [vmem:[%s4751 + $0x2e0] sm:$0xff] %v4828
                  %v4830 = vld [vmem:[%s4750 + $0x258] sm:$0xff]
                  %4831 = vst [vmem:[%s4751 + $0x2e8] sm:$0xff] %v4830
                  %v4832 = vld [vmem:[%s4750 + $0x280] sm:$0xff]
                  %4833 = vst [vmem:[%s4751 + $0x320] sm:$0xff] %v4832
                  %v4834 = vld [vmem:[%s4750 + $0x288] sm:$0xff]
                  %4835 = vst [vmem:[%s4751 + $0x328] sm:$0xff] %v4834
                  %v4836 = vld [vmem:[%s4750 + $0x290] sm:$0xff]
                  %4837 = vst [vmem:[%s4751 + $0x330] sm:$0xff] %v4836
                  %v4838 = vld [vmem:[%s4750 + $0x298] sm:$0xff]
                  %4839 = vst [vmem:[%s4751 + $0x338] sm:$0xff] %v4838
                  %v4840 = vld [vmem:[%s4750 + $0x2c0] sm:$0xff]
                  %4841 = vst [vmem:[%s4751 + $0x370] sm:$0xff] %v4840
                  %v4842 = vld [vmem:[%s4750 + $0x2c8] sm:$0xff]
                  %4843 = vst [vmem:[%s4751 + $0x378] sm:$0xff] %v4842
                  %v4844 = vld [vmem:[%s4750 + $0x2d0] sm:$0xff]
                  %4845 = vst [vmem:[%s4751 + $0x380] sm:$0xff] %v4844
                  %v4846 = vld [vmem:[%s4750 + $0x2d8] sm:$0xff]
                  %4847 = vst [vmem:[%s4751 + $0x388] sm:$0xff] %v4846
                  %v4848 = vld [vmem:[%s4750 + $0x300] sm:$0xff]
                  %4849 = vst [vmem:[%s4751 + $0x3c0] sm:$0xff] %v4848
                  %v4850 = vld [vmem:[%s4750 + $0x308] sm:$0xff]
                  %4851 = vst [vmem:[%s4751 + $0x3c8] sm:$0xff] %v4850
                  %v4852 = vld [vmem:[%s4750 + $0x310] sm:$0xff]
                  %4853 = vst [vmem:[%s4751 + $0x3d0] sm:$0xff] %v4852
                  %v4854 = vld [vmem:[%s4750 + $0x318] sm:$0xff]
                  %4855 = vst [vmem:[%s4751 + $0x3d8] sm:$0xff] %v4854
                  %v4856 = vld [vmem:[%s4750 + $0x340] sm:$0xff]
                  %4857 = vst [vmem:[%s4751 + $0x410] sm:$0xff] %v4856
                  %v4858 = vld [vmem:[%s4750 + $0x348] sm:$0xff]
                  %4859 = vst [vmem:[%s4751 + $0x418] sm:$0xff] %v4858
                  %v4860 = vld [vmem:[%s4750 + $0x350] sm:$0xff]
                  %4861 = vst [vmem:[%s4751 + $0x420] sm:$0xff] %v4860
                  %v4862 = vld [vmem:[%s4750 + $0x358] sm:$0xff]
                  %4863 = vst [vmem:[%s4751 + $0x428] sm:$0xff] %v4862
                  %v4864 = vld [vmem:[%s4750 + $0x380] sm:$0xff]
                  %4865 = vst [vmem:[%s4751 + $0x460] sm:$0xff] %v4864
                  %v4866 = vld [vmem:[%s4750 + $0x388] sm:$0xff]
                  %4867 = vst [vmem:[%s4751 + $0x468] sm:$0xff] %v4866
                  %v4868 = vld [vmem:[%s4750 + $0x390] sm:$0xff]
                  %4869 = vst [vmem:[%s4751 + $0x470] sm:$0xff] %v4868
                  %v4870 = vld [vmem:[%s4750 + $0x398] sm:$0xff]
                  %4871 = vst [vmem:[%s4751 + $0x478] sm:$0xff] %v4870
                  %v4872 = vld [vmem:[%s4750 + $0x3c0] sm:$0xff]
                  %4873 = vst [vmem:[%s4751 + $0x4b0] sm:$0xff] %v4872
                  %v4874 = vld [vmem:[%s4750 + $0x3c8] sm:$0xff]
                  %4875 = vst [vmem:[%s4751 + $0x4b8] sm:$0xff] %v4874
                  %v4876 = vld [vmem:[%s4750 + $0x3d0] sm:$0xff]
                  %4877 = vst [vmem:[%s4751 + $0x4c0] sm:$0xff] %v4876
                  %v4878 = vld [vmem:[%s4750 + $0x3d8] sm:$0xff]
                  %4879 = vst [vmem:[%s4751 + $0x4c8] sm:$0xff] %v4878
                  %s4880 = sadd.s32 1, %s4749
                  %p4881 = scmp.ge.s32.totalorder %s4880, %s4738
                  %s4882 = scalar_select %p4881, 0, %s4880
                  %s4883 = sadd.s32 1, %s4748
                  %s4884 = scalar_select %p4881, %s4883, %s4748
                  %p4885 = scmp.ge.s32.totalorder %s4884, %s4737
                  %s4886 = scalar_select %p4885, 0, %s4884
                  %s4887 = smul.u32 %s4886, 1024
                  %s4888 = smul.u32 %s4882, 32
                  %s4889 = sadd.s32 %s4887, %s4888
                  %s4890 = smul.u32 %s4886, 1280
                  %s4891 = smul.u32 %s4882, 32
                  %s4892 = sadd.s32 %s4890, %s4891
                  %s4893 = scalar_lea.vmem %s4280, %s4889 [#allocation4]
                  %s4894 = scalar_lea.vmem %s4298, %s4892
                $region92: #{tpu_custom_call.1} parent=86 // loop_footer
                  %s4745 = sadd.s32 %s4743, 1
                $region93: #{tpu_custom_call.1} parent=86 // loop_footer_branch
                  %4742 = sbr.rel target = $region89
                $region94: #{tpu_custom_call.1} parent=86 // loop_exit
                  _
                %s4895 = sshrl.u32 %s4736, 2
                %s4896 = sshrl.u32 %s4288, 4
                %s4897 = sand.u32 %s4288, 15
                %s4898 = smul.u32 %s4896, 16
                %s4899 = smul.u32 64, %s4898
                %s4900 = scalar_lea.vmem %s4280, %s4899 [#allocation4]
                %s4901 = smul.u32 80, %s4898
                %s4902 = scalar_lea.vmem %s4298, %s4901
                %s4903 = smul.u32 %s4897, %s4895
                // While loop
                $region95: #{tpu_custom_call.1} parent=86 // loop_pre_header
                  _
                $region96: #{tpu_custom_call.1} parent=86 // loop_header
                  %s4907 = sphi 0, %s4909
                  %p4908 = scmp.ge.s32.totalorder %s4907, %s4903
                  %s4912 = sphi 0, %s4930
                  %s4913 = sphi 0, %s4926
                  %s4914 = sphi %s4900, %s4937
                  %s4915 = sphi %s4902, %s4938
                $region97: #{tpu_custom_call.1} parent=86 // loop_header_branch
                  %4911 = sbr.rel (%p4908) target = $region101
                $region98: #{tpu_custom_call.1} parent=86 // loop_body
                  %v4916 = vld [vmem:[%s4914] sm:$0xff]
                  %4917 = vst [vmem:[%s4915] sm:$0xff] %v4916
                  %v4918 = vld [vmem:[%s4914 + $0x8] sm:$0xff]
                  %4919 = vst [vmem:[%s4915 + $0x8] sm:$0xff] %v4918
                  %v4920 = vld [vmem:[%s4914 + $0x10] sm:$0xff]
                  %4921 = vst [vmem:[%s4915 + $0x10] sm:$0xff] %v4920
                  %v4922 = vld [vmem:[%s4914 + $0x18] sm:$0xff]
                  %4923 = vst [vmem:[%s4915 + $0x18] sm:$0xff] %v4922
                  %s4924 = sadd.s32 1, %s4913
                  %p4925 = scmp.ge.s32.totalorder %s4924, %s4895
                  %s4926 = scalar_select %p4925, 0, %s4924
                  %s4927 = sadd.s32 1, %s4912
                  %s4928 = scalar_select %p4925, %s4927, %s4912
                  %p4929 = scmp.ge.s32.totalorder %s4928, %s4897
                  %s4930 = scalar_select %p4929, 0, %s4928
                  %s4931 = smul.u32 %s4930, 64
                  %s4932 = smul.u32 %s4926, 32
                  %s4933 = sadd.s32 %s4931, %s4932
                  %s4934 = smul.u32 %s4930, 80
                  %s4935 = smul.u32 %s4926, 32
                  %s4936 = sadd.s32 %s4934, %s4935
                  %s4937 = scalar_lea.vmem %s4900, %s4933 [#allocation4]
                  %s4938 = scalar_lea.vmem %s4902, %s4936
                $region99: #{tpu_custom_call.1} parent=86 // loop_footer
                  %s4909 = sadd.s32 %s4907, 1
                $region100: #{tpu_custom_call.1} parent=86 // loop_footer_branch
                  %4906 = sbr.rel target = $region96
                $region101: #{tpu_custom_call.1} parent=86 // loop_exit
                  _
                %s4939 = sshrl.u32 %s4736, 2
                %s4940 = sand.u32 %s4736, 3
                %s4941 = smul.u32 %s4939, 4
                %s4942 = smul.u32 128, %s4941
                %s4943 = sshra.s32 %s4942, 4
                %s4944 = scalar_lea.vmem %s4280, %s4943 [#allocation4]
                %s4945 = smul.u32 128, %s4941
                %s4946 = sshra.s32 %s4945, 4
                %s4947 = scalar_lea.vmem %s4298, %s4946
                %s4948 = smul.u32 %s4288, %s4940
                // While loop
                $region102: #{tpu_custom_call.1} parent=86 // loop_pre_header
                  _
                $region103: #{tpu_custom_call.1} parent=86 // loop_header
                  %s4952 = sphi 0, %s4954
                  %p4953 = scmp.ge.s32.totalorder %s4952, %s4948
                  %s4957 = sphi 0, %s4969
                  %s4958 = sphi 0, %s4965
                  %s4959 = sphi %s4944, %s4976
                  %s4960 = sphi %s4947, %s4977
                $region104: #{tpu_custom_call.1} parent=86 // loop_header_branch
                  %4956 = sbr.rel (%p4953) target = $region108
                $region105: #{tpu_custom_call.1} parent=86 // loop_body
                  %v4961 = vld [vmem:[%s4959] sm:$0xff]
                  %4962 = vst [vmem:[%s4960] sm:$0xff] %v4961
                  %s4963 = sadd.s32 1, %s4958
                  %p4964 = scmp.ge.s32.totalorder %s4963, %s4940
                  %s4965 = scalar_select %p4964, 0, %s4963
                  %s4966 = sadd.s32 1, %s4957
                  %s4967 = scalar_select %p4964, %s4966, %s4957
                  %p4968 = scmp.ge.s32.totalorder %s4967, %s4288
                  %s4969 = scalar_select %p4968, 0, %s4967
                  %s4970 = smul.u32 %s4969, 64
                  %s4971 = smul.u32 %s4965, 8
                  %s4972 = sadd.s32 %s4970, %s4971
                  %s4973 = smul.u32 %s4969, 80
                  %s4974 = smul.u32 %s4965, 8
                  %s4975 = sadd.s32 %s4973, %s4974
                  %s4976 = scalar_lea.vmem %s4944, %s4972 [#allocation4]
                  %s4977 = scalar_lea.vmem %s4947, %s4975
                $region106: #{tpu_custom_call.1} parent=86 // loop_footer
                  %s4954 = sadd.s32 %s4952, 1
                $region107: #{tpu_custom_call.1} parent=86 // loop_footer_branch
                  %4951 = sbr.rel target = $region103
                $region108: #{tpu_custom_call.1} parent=86 // loop_exit
                  _
                %s4978 = sshllo.u32 0, %s4731
                %s4979 = sshrl.u32 %s4288, 6
                // While loop
                $region109: #{tpu_custom_call.1} parent=86 // loop_pre_header
                  _
                $region110: #{tpu_custom_call.1} parent=86 // loop_header
                  %s4981 = sphi 0, %s4983
                  %p4982 = scmp.ge.s32.totalorder %s4981, %s4979
                  %s4986 = sphi 0, %s5119
                  %s4987 = sphi %s4733, %s5122
                  %s4988 = sphi %s4735, %s5123
                $region111: #{tpu_custom_call.1} parent=86 // loop_header_branch
                  %4985 = sbr.rel (%p4982) target = $region115
                $region112: #{tpu_custom_call.1} parent=86 // loop_body
                  %v4989 = vld [vmem:[%s4987] sm:%s4978]
                  %4990 = vst [vmem:[%s4988] sm:%s4978] %v4989
                  %v4991 = vld [vmem:[%s4987 + $0x40] sm:%s4978]
                  %4992 = vst [vmem:[%s4988 + $0x50] sm:%s4978] %v4991
                  %v4993 = vld [vmem:[%s4987 + $0x80] sm:%s4978]
                  %4994 = vst [vmem:[%s4988 + $0xa0] sm:%s4978] %v4993
                  %v4995 = vld [vmem:[%s4987 + $0xc0] sm:%s4978]
                  %4996 = vst [vmem:[%s4988 + $0xf0] sm:%s4978] %v4995
                  %v4997 = vld [vmem:[%s4987 + $0x100] sm:%s4978]
                  %4998 = vst [vmem:[%s4988 + $0x140] sm:%s4978] %v4997
                  %v4999 = vld [vmem:[%s4987 + $0x140] sm:%s4978]
                  %5000 = vst [vmem:[%s4988 + $0x190] sm:%s4978] %v4999
                  %v5001 = vld [vmem:[%s4987 + $0x180] sm:%s4978]
                  %5002 = vst [vmem:[%s4988 + $0x1e0] sm:%s4978] %v5001
                  %v5003 = vld [vmem:[%s4987 + $0x1c0] sm:%s4978]
                  %5004 = vst [vmem:[%s4988 + $0x230] sm:%s4978] %v5003
                  %v5005 = vld [vmem:[%s4987 + $0x200] sm:%s4978]
                  %5006 = vst [vmem:[%s4988 + $0x280] sm:%s4978] %v5005
                  %v5007 = vld [vmem:[%s4987 + $0x240] sm:%s4978]
                  %5008 = vst [vmem:[%s4988 + $0x2d0] sm:%s4978] %v5007
                  %v5009 = vld [vmem:[%s4987 + $0x280] sm:%s4978]
                  %5010 = vst [vmem:[%s4988 + $0x320] sm:%s4978] %v5009
                  %v5011 = vld [vmem:[%s4987 + $0x2c0] sm:%s4978]
                  %5012 = vst [vmem:[%s4988 + $0x370] sm:%s4978] %v5011
                  %v5013 = vld [vmem:[%s4987 + $0x300] sm:%s4978]
                  %5014 = vst [vmem:[%s4988 + $0x3c0] sm:%s4978] %v5013
                  %v5015 = vld [vmem:[%s4987 + $0x340] sm:%s4978]
                  %5016 = vst [vmem:[%s4988 + $0x410] sm:%s4978] %v5015
                  %v5017 = vld [vmem:[%s4987 + $0x380] sm:%s4978]
                  %5018 = vst [vmem:[%s4988 + $0x460] sm:%s4978] %v5017
                  %v5019 = vld [vmem:[%s4987 + $0x3c0] sm:%s4978]
                  %5020 = vst [vmem:[%s4988 + $0x4b0] sm:%s4978] %v5019
                  %v5021 = vld [vmem:[%s4987 + $0x400] sm:%s4978]
                  %5022 = vst [vmem:[%s4988 + $0x500] sm:%s4978] %v5021
                  %v5023 = vld [vmem:[%s4987 + $0x440] sm:%s4978]
                  %5024 = vst [vmem:[%s4988 + $0x550] sm:%s4978] %v5023
                  %v5025 = vld [vmem:[%s4987 + $0x480] sm:%s4978]
                  %5026 = vst [vmem:[%s4988 + $0x5a0] sm:%s4978] %v5025
                  %v5027 = vld [vmem:[%s4987 + $0x4c0] sm:%s4978]
                  %5028 = vst [vmem:[%s4988 + $0x5f0] sm:%s4978] %v5027
                  %v5029 = vld [vmem:[%s4987 + $0x500] sm:%s4978]
                  %5030 = vst [vmem:[%s4988 + $0x640] sm:%s4978] %v5029
                  %v5031 = vld [vmem:[%s4987 + $0x540] sm:%s4978]
                  %5032 = vst [vmem:[%s4988 + $0x690] sm:%s4978] %v5031
                  %v5033 = vld [vmem:[%s4987 + $0x580] sm:%s4978]
                  %5034 = vst [vmem:[%s4988 + $0x6e0] sm:%s4978] %v5033
                  %v5035 = vld [vmem:[%s4987 + $0x5c0] sm:%s4978]
                  %5036 = vst [vmem:[%s4988 + $0x730] sm:%s4978] %v5035
                  %v5037 = vld [vmem:[%s4987 + $0x600] sm:%s4978]
                  %5038 = vst [vmem:[%s4988 + $0x780] sm:%s4978] %v5037
                  %v5039 = vld [vmem:[%s4987 + $0x640] sm:%s4978]
                  %5040 = vst [vmem:[%s4988 + $0x7d0] sm:%s4978] %v5039
                  %v5041 = vld [vmem:[%s4987 + $0x680] sm:%s4978]
                  %5042 = vst [vmem:[%s4988 + $0x820] sm:%s4978] %v5041
                  %v5043 = vld [vmem:[%s4987 + $0x6c0] sm:%s4978]
                  %5044 = vst [vmem:[%s4988 + $0x870] sm:%s4978] %v5043
                  %v5045 = vld [vmem:[%s4987 + $0x700] sm:%s4978]
                  %5046 = vst [vmem:[%s4988 + $0x8c0] sm:%s4978] %v5045
                  %v5047 = vld [vmem:[%s4987 + $0x740] sm:%s4978]
                  %5048 = vst [vmem:[%s4988 + $0x910] sm:%s4978] %v5047
                  %v5049 = vld [vmem:[%s4987 + $0x780] sm:%s4978]
                  %5050 = vst [vmem:[%s4988 + $0x960] sm:%s4978] %v5049
                  %v5051 = vld [vmem:[%s4987 + $0x7c0] sm:%s4978]
                  %5052 = vst [vmem:[%s4988 + $0x9b0] sm:%s4978] %v5051
                  %v5053 = vld [vmem:[%s4987 + $0x800] sm:%s4978]
                  %5054 = vst [vmem:[%s4988 + $0xa00] sm:%s4978] %v5053
                  %v5055 = vld [vmem:[%s4987 + $0x840] sm:%s4978]
                  %5056 = vst [vmem:[%s4988 + $0xa50] sm:%s4978] %v5055
                  %v5057 = vld [vmem:[%s4987 + $0x880] sm:%s4978]
                  %5058 = vst [vmem:[%s4988 + $0xaa0] sm:%s4978] %v5057
                  %v5059 = vld [vmem:[%s4987 + $0x8c0] sm:%s4978]
                  %5060 = vst [vmem:[%s4988 + $0xaf0] sm:%s4978] %v5059
                  %v5061 = vld [vmem:[%s4987 + $0x900] sm:%s4978]
                  %5062 = vst [vmem:[%s4988 + $0xb40] sm:%s4978] %v5061
                  %v5063 = vld [vmem:[%s4987 + $0x940] sm:%s4978]
                  %5064 = vst [vmem:[%s4988 + $0xb90] sm:%s4978] %v5063
                  %v5065 = vld [vmem:[%s4987 + $0x980] sm:%s4978]
                  %5066 = vst [vmem:[%s4988 + $0xbe0] sm:%s4978] %v5065
                  %v5067 = vld [vmem:[%s4987 + $0x9c0] sm:%s4978]
                  %5068 = vst [vmem:[%s4988 + $0xc30] sm:%s4978] %v5067
                  %v5069 = vld [vmem:[%s4987 + $0xa00] sm:%s4978]
                  %5070 = vst [vmem:[%s4988 + $0xc80] sm:%s4978] %v5069
                  %v5071 = vld [vmem:[%s4987 + $0xa40] sm:%s4978]
                  %5072 = vst [vmem:[%s4988 + $0xcd0] sm:%s4978] %v5071
                  %v5073 = vld [vmem:[%s4987 + $0xa80] sm:%s4978]
                  %5074 = vst [vmem:[%s4988 + $0xd20] sm:%s4978] %v5073
                  %v5075 = vld [vmem:[%s4987 + $0xac0] sm:%s4978]
                  %5076 = vst [vmem:[%s4988 + $0xd70] sm:%s4978] %v5075
                  %v5077 = vld [vmem:[%s4987 + $0xb00] sm:%s4978]
                  %5078 = vst [vmem:[%s4988 + $0xdc0] sm:%s4978] %v5077
                  %v5079 = vld [vmem:[%s4987 + $0xb40] sm:%s4978]
                  %5080 = vst [vmem:[%s4988 + $0xe10] sm:%s4978] %v5079
                  %v5081 = vld [vmem:[%s4987 + $0xb80] sm:%s4978]
                  %5082 = vst [vmem:[%s4988 + $0xe60] sm:%s4978] %v5081
                  %v5083 = vld [vmem:[%s4987 + $0xbc0] sm:%s4978]
                  %5084 = vst [vmem:[%s4988 + $0xeb0] sm:%s4978] %v5083
                  %v5085 = vld [vmem:[%s4987 + $0xc00] sm:%s4978]
                  %5086 = vst [vmem:[%s4988 + $0xf00] sm:%s4978] %v5085
                  %v5087 = vld [vmem:[%s4987 + $0xc40] sm:%s4978]
                  %5088 = vst [vmem:[%s4988 + $0xf50] sm:%s4978] %v5087
                  %v5089 = vld [vmem:[%s4987 + $0xc80] sm:%s4978]
                  %5090 = vst [vmem:[%s4988 + $0xfa0] sm:%s4978] %v5089
                  %v5091 = vld [vmem:[%s4987 + $0xcc0] sm:%s4978]
                  %5092 = vst [vmem:[%s4988 + $0xff0] sm:%s4978] %v5091
                  %v5093 = vld [vmem:[%s4987 + $0xd00] sm:%s4978]
                  %5094 = vst [vmem:[%s4988 + $0x1040] sm:%s4978] %v5093
                  %v5095 = vld [vmem:[%s4987 + $0xd40] sm:%s4978]
                  %5096 = vst [vmem:[%s4988 + $0x1090] sm:%s4978] %v5095
                  %v5097 = vld [vmem:[%s4987 + $0xd80] sm:%s4978]
                  %5098 = vst [vmem:[%s4988 + $0x10e0] sm:%s4978] %v5097
                  %v5099 = vld [vmem:[%s4987 + $0xdc0] sm:%s4978]
                  %5100 = vst [vmem:[%s4988 + $0x1130] sm:%s4978] %v5099
                  %v5101 = vld [vmem:[%s4987 + $0xe00] sm:%s4978]
                  %5102 = vst [vmem:[%s4988 + $0x1180] sm:%s4978] %v5101
                  %v5103 = vld [vmem:[%s4987 + $0xe40] sm:%s4978]
                  %5104 = vst [vmem:[%s4988 + $0x11d0] sm:%s4978] %v5103
                  %v5105 = vld [vmem:[%s4987 + $0xe80] sm:%s4978]
                  %5106 = vst [vmem:[%s4988 + $0x1220] sm:%s4978] %v5105
                  %v5107 = vld [vmem:[%s4987 + $0xec0] sm:%s4978]
                  %5108 = vst [vmem:[%s4988 + $0x1270] sm:%s4978] %v5107
                  %v5109 = vld [vmem:[%s4987 + $0xf00] sm:%s4978]
                  %5110 = vst [vmem:[%s4988 + $0x12c0] sm:%s4978] %v5109
                  %v5111 = vld [vmem:[%s4987 + $0xf40] sm:%s4978]
                  %5112 = vst [vmem:[%s4988 + $0x1310] sm:%s4978] %v5111
                  %v5113 = vld [vmem:[%s4987 + $0xf80] sm:%s4978]
                  %5114 = vst [vmem:[%s4988 + $0x1360] sm:%s4978] %v5113
                  %v5115 = vld [vmem:[%s4987 + $0xfc0] sm:%s4978]
                  %5116 = vst [vmem:[%s4988 + $0x13b0] sm:%s4978] %v5115
                  %s5117 = sadd.s32 1, %s4986
                  %p5118 = scmp.ge.s32.totalorder %s5117, %s4979
                  %s5119 = scalar_select %p5118, 0, %s5117
                  %s5120 = smul.u32 %s5119, 4096
                  %s5121 = smul.u32 %s5119, 5120
                  %s5122 = scalar_lea.vmem %s4733, %s5120 [#allocation4]
                  %s5123 = scalar_lea.vmem %s4735, %s5121
                $region113: #{tpu_custom_call.1} parent=86 // loop_footer
                  %s4983 = sadd.s32 %s4981, 1
                $region114: #{tpu_custom_call.1} parent=86 // loop_footer_branch
                  %4980 = sbr.rel target = $region110
                $region115: #{tpu_custom_call.1} parent=86 // loop_exit
                  _
                %s5124 = sshrl.u32 %s4288, 6
                %s5125 = sand.u32 %s4288, 63
                %s5126 = smul.u32 %s5124, 64
                %s5127 = smul.u32 64, %s5126
                %s5128 = scalar_lea.vmem %s4733, %s5127 [#allocation4]
                %s5129 = smul.u32 80, %s5126
                %s5130 = scalar_lea.vmem %s4735, %s5129
                // While loop
                $region116: #{tpu_custom_call.1} parent=86 // loop_pre_header
                  _
                $region117: #{tpu_custom_call.1} parent=86 // loop_header
                  %s5132 = sphi 0, %s5134
                  %p5133 = scmp.ge.s32.totalorder %s5132, %s5125
                  %s5137 = sphi 0, %s5144
                  %s5138 = sphi %s5128, %s5147
                  %s5139 = sphi %s5130, %s5148
                $region118: #{tpu_custom_call.1} parent=86 // loop_header_branch
                  %5136 = sbr.rel (%p5133) target = $region122
                $region119: #{tpu_custom_call.1} parent=86 // loop_body
                  %v5140 = vld [vmem:[%s5138] sm:%s4978]
                  %5141 = vst [vmem:[%s5139] sm:%s4978] %v5140
                  %s5142 = sadd.s32 1, %s5137
                  %p5143 = scmp.ge.s32.totalorder %s5142, %s5125
                  %s5144 = scalar_select %p5143, 0, %s5142
                  %s5145 = smul.u32 %s5144, 64
                  %s5146 = smul.u32 %s5144, 80
                  %s5147 = scalar_lea.vmem %s5128, %s5145 [#allocation4]
                  %s5148 = scalar_lea.vmem %s5130, %s5146
                $region120: #{tpu_custom_call.1} parent=86 // loop_footer
                  %s5134 = sadd.s32 %s5132, 1
                $region121: #{tpu_custom_call.1} parent=86 // loop_footer_branch
                  %5131 = sbr.rel target = $region117
                $region122: #{tpu_custom_call.1} parent=86 // loop_exit
                  _
              $region87: #{tpu_custom_call.1} parent=39 // pred_fallthru
                _
            $region40: #{tpu_custom_call.1} parent=35 // pred_fallthru
              _
            // Predicated region
            $region41: #{tpu_custom_call.1} parent=35 // pred_check
              %p4307 = pneg %p4303
            $region42: #{tpu_custom_call.1} parent=35 // pred_check_branch
              %4309 = sbr.rel (%p4307) target = $region44
            $region43: #{tpu_custom_call.1} parent=35 // pred_region
              %s4310 = sshllo.u32 0, %s4299
              %s4311 = sshrl.u32 %s4288, 6
              // While loop
              $region45: #{tpu_custom_call.1} parent=43 // loop_pre_header
                _
              $region46: #{tpu_custom_call.1} parent=43 // loop_header
                %s4313 = sphi 0, %s4315
                %p4314 = scmp.ge.s32.totalorder %s4313, %s4311
                %s4318 = sphi 0, %s4451
                %s4319 = sphi %s4280, %s4454
                %s4320 = sphi %s4298, %s4455
              $region47: #{tpu_custom_call.1} parent=43 // loop_header_branch
                %4317 = sbr.rel (%p4314) target = $region51
              $region48: #{tpu_custom_call.1} parent=43 // loop_body
                %v4321 = vld [vmem:[%s4319] sm:%s4310]
                %4322 = vst [vmem:[%s4320] sm:%s4310] %v4321
                %v4323 = vld [vmem:[%s4319 + $0x40] sm:%s4310]
                %4324 = vst [vmem:[%s4320 + $0x50] sm:%s4310] %v4323
                %v4325 = vld [vmem:[%s4319 + $0x80] sm:%s4310]
                %4326 = vst [vmem:[%s4320 + $0xa0] sm:%s4310] %v4325
                %v4327 = vld [vmem:[%s4319 + $0xc0] sm:%s4310]
                %4328 = vst [vmem:[%s4320 + $0xf0] sm:%s4310] %v4327
                %v4329 = vld [vmem:[%s4319 + $0x100] sm:%s4310]
                %4330 = vst [vmem:[%s4320 + $0x140] sm:%s4310] %v4329
                %v4331 = vld [vmem:[%s4319 + $0x140] sm:%s4310]
                %4332 = vst [vmem:[%s4320 + $0x190] sm:%s4310] %v4331
                %v4333 = vld [vmem:[%s4319 + $0x180] sm:%s4310]
                %4334 = vst [vmem:[%s4320 + $0x1e0] sm:%s4310] %v4333
                %v4335 = vld [vmem:[%s4319 + $0x1c0] sm:%s4310]
                %4336 = vst [vmem:[%s4320 + $0x230] sm:%s4310] %v4335
                %v4337 = vld [vmem:[%s4319 + $0x200] sm:%s4310]
                %4338 = vst [vmem:[%s4320 + $0x280] sm:%s4310] %v4337
                %v4339 = vld [vmem:[%s4319 + $0x240] sm:%s4310]
                %4340 = vst [vmem:[%s4320 + $0x2d0] sm:%s4310] %v4339
                %v4341 = vld [vmem:[%s4319 + $0x280] sm:%s4310]
                %4342 = vst [vmem:[%s4320 + $0x320] sm:%s4310] %v4341
                %v4343 = vld [vmem:[%s4319 + $0x2c0] sm:%s4310]
                %4344 = vst [vmem:[%s4320 + $0x370] sm:%s4310] %v4343
                %v4345 = vld [vmem:[%s4319 + $0x300] sm:%s4310]
                %4346 = vst [vmem:[%s4320 + $0x3c0] sm:%s4310] %v4345
                %v4347 = vld [vmem:[%s4319 + $0x340] sm:%s4310]
                %4348 = vst [vmem:[%s4320 + $0x410] sm:%s4310] %v4347
                %v4349 = vld [vmem:[%s4319 + $0x380] sm:%s4310]
                %4350 = vst [vmem:[%s4320 + $0x460] sm:%s4310] %v4349
                %v4351 = vld [vmem:[%s4319 + $0x3c0] sm:%s4310]
                %4352 = vst [vmem:[%s4320 + $0x4b0] sm:%s4310] %v4351
                %v4353 = vld [vmem:[%s4319 + $0x400] sm:%s4310]
                %4354 = vst [vmem:[%s4320 + $0x500] sm:%s4310] %v4353
                %v4355 = vld [vmem:[%s4319 + $0x440] sm:%s4310]
                %4356 = vst [vmem:[%s4320 + $0x550] sm:%s4310] %v4355
                %v4357 = vld [vmem:[%s4319 + $0x480] sm:%s4310]
                %4358 = vst [vmem:[%s4320 + $0x5a0] sm:%s4310] %v4357
                %v4359 = vld [vmem:[%s4319 + $0x4c0] sm:%s4310]
                %4360 = vst [vmem:[%s4320 + $0x5f0] sm:%s4310] %v4359
                %v4361 = vld [vmem:[%s4319 + $0x500] sm:%s4310]
                %4362 = vst [vmem:[%s4320 + $0x640] sm:%s4310] %v4361
                %v4363 = vld [vmem:[%s4319 + $0x540] sm:%s4310]
                %4364 = vst [vmem:[%s4320 + $0x690] sm:%s4310] %v4363
                %v4365 = vld [vmem:[%s4319 + $0x580] sm:%s4310]
                %4366 = vst [vmem:[%s4320 + $0x6e0] sm:%s4310] %v4365
                %v4367 = vld [vmem:[%s4319 + $0x5c0] sm:%s4310]
                %4368 = vst [vmem:[%s4320 + $0x730] sm:%s4310] %v4367
                %v4369 = vld [vmem:[%s4319 + $0x600] sm:%s4310]
                %4370 = vst [vmem:[%s4320 + $0x780] sm:%s4310] %v4369
                %v4371 = vld [vmem:[%s4319 + $0x640] sm:%s4310]
                %4372 = vst [vmem:[%s4320 + $0x7d0] sm:%s4310] %v4371
                %v4373 = vld [vmem:[%s4319 + $0x680] sm:%s4310]
                %4374 = vst [vmem:[%s4320 + $0x820] sm:%s4310] %v4373
                %v4375 = vld [vmem:[%s4319 + $0x6c0] sm:%s4310]
                %4376 = vst [vmem:[%s4320 + $0x870] sm:%s4310] %v4375
                %v4377 = vld [vmem:[%s4319 + $0x700] sm:%s4310]
                %4378 = vst [vmem:[%s4320 + $0x8c0] sm:%s4310] %v4377
                %v4379 = vld [vmem:[%s4319 + $0x740] sm:%s4310]
                %4380 = vst [vmem:[%s4320 + $0x910] sm:%s4310] %v4379
                %v4381 = vld [vmem:[%s4319 + $0x780] sm:%s4310]
                %4382 = vst [vmem:[%s4320 + $0x960] sm:%s4310] %v4381
                %v4383 = vld [vmem:[%s4319 + $0x7c0] sm:%s4310]
                %4384 = vst [vmem:[%s4320 + $0x9b0] sm:%s4310] %v4383
                %v4385 = vld [vmem:[%s4319 + $0x800] sm:%s4310]
                %4386 = vst [vmem:[%s4320 + $0xa00] sm:%s4310] %v4385
                %v4387 = vld [vmem:[%s4319 + $0x840] sm:%s4310]
                %4388 = vst [vmem:[%s4320 + $0xa50] sm:%s4310] %v4387
                %v4389 = vld [vmem:[%s4319 + $0x880] sm:%s4310]
                %4390 = vst [vmem:[%s4320 + $0xaa0] sm:%s4310] %v4389
                %v4391 = vld [vmem:[%s4319 + $0x8c0] sm:%s4310]
                %4392 = vst [vmem:[%s4320 + $0xaf0] sm:%s4310] %v4391
                %v4393 = vld [vmem:[%s4319 + $0x900] sm:%s4310]
                %4394 = vst [vmem:[%s4320 + $0xb40] sm:%s4310] %v4393
                %v4395 = vld [vmem:[%s4319 + $0x940] sm:%s4310]
                %4396 = vst [vmem:[%s4320 + $0xb90] sm:%s4310] %v4395
                %v4397 = vld [vmem:[%s4319 + $0x980] sm:%s4310]
                %4398 = vst [vmem:[%s4320 + $0xbe0] sm:%s4310] %v4397
                %v4399 = vld [vmem:[%s4319 + $0x9c0] sm:%s4310]
                %4400 = vst [vmem:[%s4320 + $0xc30] sm:%s4310] %v4399
                %v4401 = vld [vmem:[%s4319 + $0xa00] sm:%s4310]
                %4402 = vst [vmem:[%s4320 + $0xc80] sm:%s4310] %v4401
                %v4403 = vld [vmem:[%s4319 + $0xa40] sm:%s4310]
                %4404 = vst [vmem:[%s4320 + $0xcd0] sm:%s4310] %v4403
                %v4405 = vld [vmem:[%s4319 + $0xa80] sm:%s4310]
                %4406 = vst [vmem:[%s4320 + $0xd20] sm:%s4310] %v4405
                %v4407 = vld [vmem:[%s4319 + $0xac0] sm:%s4310]
                %4408 = vst [vmem:[%s4320 + $0xd70] sm:%s4310] %v4407
                %v4409 = vld [vmem:[%s4319 + $0xb00] sm:%s4310]
                %4410 = vst [vmem:[%s4320 + $0xdc0] sm:%s4310] %v4409
                %v4411 = vld [vmem:[%s4319 + $0xb40] sm:%s4310]
                %4412 = vst [vmem:[%s4320 + $0xe10] sm:%s4310] %v4411
                %v4413 = vld [vmem:[%s4319 + $0xb80] sm:%s4310]
                %4414 = vst [vmem:[%s4320 + $0xe60] sm:%s4310] %v4413
                %v4415 = vld [vmem:[%s4319 + $0xbc0] sm:%s4310]
                %4416 = vst [vmem:[%s4320 + $0xeb0] sm:%s4310] %v4415
                %v4417 = vld [vmem:[%s4319 + $0xc00] sm:%s4310]
                %4418 = vst [vmem:[%s4320 + $0xf00] sm:%s4310] %v4417
                %v4419 = vld [vmem:[%s4319 + $0xc40] sm:%s4310]
                %4420 = vst [vmem:[%s4320 + $0xf50] sm:%s4310] %v4419
                %v4421 = vld [vmem:[%s4319 + $0xc80] sm:%s4310]
                %4422 = vst [vmem:[%s4320 + $0xfa0] sm:%s4310] %v4421
                %v4423 = vld [vmem:[%s4319 + $0xcc0] sm:%s4310]
                %4424 = vst [vmem:[%s4320 + $0xff0] sm:%s4310] %v4423
                %v4425 = vld [vmem:[%s4319 + $0xd00] sm:%s4310]
                %4426 = vst [vmem:[%s4320 + $0x1040] sm:%s4310] %v4425
                %v4427 = vld [vmem:[%s4319 + $0xd40] sm:%s4310]
                %4428 = vst [vmem:[%s4320 + $0x1090] sm:%s4310] %v4427
                %v4429 = vld [vmem:[%s4319 + $0xd80] sm:%s4310]
                %4430 = vst [vmem:[%s4320 + $0x10e0] sm:%s4310] %v4429
                %v4431 = vld [vmem:[%s4319 + $0xdc0] sm:%s4310]
                %4432 = vst [vmem:[%s4320 + $0x1130] sm:%s4310] %v4431
                %v4433 = vld [vmem:[%s4319 + $0xe00] sm:%s4310]
                %4434 = vst [vmem:[%s4320 + $0x1180] sm:%s4310] %v4433
                %v4435 = vld [vmem:[%s4319 + $0xe40] sm:%s4310]
                %4436 = vst [vmem:[%s4320 + $0x11d0] sm:%s4310] %v4435
                %v4437 = vld [vmem:[%s4319 + $0xe80] sm:%s4310]
                %4438 = vst [vmem:[%s4320 + $0x1220] sm:%s4310] %v4437
                %v4439 = vld [vmem:[%s4319 + $0xec0] sm:%s4310]
                %4440 = vst [vmem:[%s4320 + $0x1270] sm:%s4310] %v4439
                %v4441 = vld [vmem:[%s4319 + $0xf00] sm:%s4310]
                %4442 = vst [vmem:[%s4320 + $0x12c0] sm:%s4310] %v4441
                %v4443 = vld [vmem:[%s4319 + $0xf40] sm:%s4310]
                %4444 = vst [vmem:[%s4320 + $0x1310] sm:%s4310] %v4443
                %v4445 = vld [vmem:[%s4319 + $0xf80] sm:%s4310]
                %4446 = vst [vmem:[%s4320 + $0x1360] sm:%s4310] %v4445
                %v4447 = vld [vmem:[%s4319 + $0xfc0] sm:%s4310]
                %4448 = vst [vmem:[%s4320 + $0x13b0] sm:%s4310] %v4447
                %s4449 = sadd.s32 1, %s4318
                %p4450 = scmp.ge.s32.totalorder %s4449, %s4311
                %s4451 = scalar_select %p4450, 0, %s4449
                %s4452 = smul.u32 %s4451, 4096
                %s4453 = smul.u32 %s4451, 5120
                %s4454 = scalar_lea.vmem %s4280, %s4452 [#allocation4]
                %s4455 = scalar_lea.vmem %s4298, %s4453
              $region49: #{tpu_custom_call.1} parent=43 // loop_footer
                %s4315 = sadd.s32 %s4313, 1
              $region50: #{tpu_custom_call.1} parent=43 // loop_footer_branch
                %4312 = sbr.rel target = $region46
              $region51: #{tpu_custom_call.1} parent=43 // loop_exit
                _
              %s4456 = sshrl.u32 %s4288, 6
              %s4457 = sand.u32 %s4288, 63
              %s4458 = smul.u32 %s4456, 64
              %s4459 = smul.u32 64, %s4458
              %s4460 = scalar_lea.vmem %s4280, %s4459 [#allocation4]
              %s4461 = smul.u32 80, %s4458
              %s4462 = scalar_lea.vmem %s4298, %s4461
              // While loop
              $region52: #{tpu_custom_call.1} parent=43 // loop_pre_header
                _
              $region53: #{tpu_custom_call.1} parent=43 // loop_header
                %s4464 = sphi 0, %s4466
                %p4465 = scmp.ge.s32.totalorder %s4464, %s4457
                %s4469 = sphi 0, %s4476
                %s4470 = sphi %s4460, %s4479
                %s4471 = sphi %s4462, %s4480
              $region54: #{tpu_custom_call.1} parent=43 // loop_header_branch
                %4468 = sbr.rel (%p4465) target = $region58
              $region55: #{tpu_custom_call.1} parent=43 // loop_body
                %v4472 = vld [vmem:[%s4470] sm:%s4310]
                %4473 = vst [vmem:[%s4471] sm:%s4310] %v4472
                %s4474 = sadd.s32 1, %s4469
                %p4475 = scmp.ge.s32.totalorder %s4474, %s4457
                %s4476 = scalar_select %p4475, 0, %s4474
                %s4477 = smul.u32 %s4476, 64
                %s4478 = smul.u32 %s4476, 80
                %s4479 = scalar_lea.vmem %s4460, %s4477 [#allocation4]
                %s4480 = scalar_lea.vmem %s4462, %s4478
              $region56: #{tpu_custom_call.1} parent=43 // loop_footer
                %s4466 = sadd.s32 %s4464, 1
              $region57: #{tpu_custom_call.1} parent=43 // loop_footer_branch
                %4463 = sbr.rel target = $region53
              $region58: #{tpu_custom_call.1} parent=43 // loop_exit
                _
            $region44: #{tpu_custom_call.1} parent=35 // pred_fallthru
              _
          $region36: #{tpu_custom_call.1} parent=31 // pred_fallthru
            _
          %5149 = vnop
        $region32: #{tpu_custom_call.1} parent=23 // pred_fallthru
          _
      $region24: #{tpu_custom_call.1} parent=5 // pred_fallthru
        _
      %p5150 = scmp.le.s32.totalorder 2, %s10
      // Predicated region
      $region123: #{tpu_custom_call.1} parent=5 // pred_check
        %p5151 = pneg %p5150
      $region124: #{tpu_custom_call.1} parent=5 // pred_check_branch
        %5153 = sbr.rel (%p5151) target = $region126
      $region125: #{tpu_custom_call.1} parent=5 // pred_region
        %s5154 = ssub.s32 %s10, 2
        // Predicated region
        $region127: #{tpu_custom_call.1} parent=125 // pred_check
          %p5155 = pneg %p81
        $region128: #{tpu_custom_call.1} parent=125 // pred_check_branch
          %5157 = sbr.rel (%p5155) target = $region130
        $region129: #{tpu_custom_call.1} parent=125 // pred_region
          %s5158 = sand.u32 %s66, 1
          %s5159 = sand.u32 %s66, 1
          %s5160 = smul.addr %s5159, 8192
          %s5161 = scalar_lea.vmem [#allocation4], %s5160
        $region130: #{tpu_custom_call.1} parent=125 // pred_fallthru
          _
      $region126: #{tpu_custom_call.1} parent=5 // pred_fallthru
        _
    $region6: #{tpu_custom_call.1} parent=1 // loop_footer
      %s14 = sadd.s32 1, %s10
    $region7: #{tpu_custom_call.1} parent=1 // loop_footer_branch
      %9 = sbr.rel target = $region3
    $region8: #{tpu_custom_call.1} parent=1 // loop_exit
      _
    %5162 = vsyncpa [#allocation3], 1
    %s5163 = scalar_lea.sflag [#allocation3], 1
    %5164 = vsyncpa %s5163, 1

</llo_original>
